<compile_context>
chip_gen: v7x
topology: tpu7x:2x2x1
jax: 0.10.0
libtpu: 0.0.40
codegen_flags: <defaults>
</compile_context>

<pallas_src>
import math
from functools import partial

import jax
import jax.numpy as jnp
import numpy as np
from jax.experimental import pallas as pl
from jax.experimental.pallas import tpu as pltpu

# Module hyper-parameters (fixed by MVKE.__init__)
E = 100    # embedding size
V = 3      # number of virtual kernels
C = 4      # number of candidate tags
N = 90     # number of user behaviors
DK = 100   # attention scale

EP = 128   # E padded to full lane width
NP = 96    # N padded to a multiple of 16 (tile-aligned for f32 and bf16)


def _round_up(v, m):
    return ((v + m - 1) // m) * m


def mvke_kernel(xf_ref, mask_ref, tag_ref, sm2_ref, w1t_ref, b1_ref, of2s_ref,
                out_ref):
    bbn, ep = xf_ref.shape          # (BB*NP, EP)
    bb = tag_ref.shape[0]           # BB
    n_pad = bbn // bb               # NP

    # fc1 over the whole batch block as one bf16 MXU matmul (f32 accumulate);
    # the bias add stays in f32.
    of1 = jnp.dot(xf_ref[...], w1t_ref[...],
                  preferred_element_type=jnp.float32) + b1_ref[...]
    # bf16 copy for the two attention-1 contractions (halves VMEM traffic);
    # NP is a multiple of 16 so the sublane-splitting reshape is tile-aligned.
    of1_bf = of1.astype(jnp.bfloat16).reshape(bb, n_pad, ep)

    # attention-1 logits directly in lane-major (BB, V, NP) layout so the
    # masked softmax reduces over the lane axis.  of2s already carries the
    # 1/sqrt(dk) scale.  (of2s is only (V, EP) bf16 -> ~1 tile per example.)
    of2s_b = jnp.broadcast_to(of2s_ref[...], (bb,) + of2s_ref.shape)
    m1 = jnp.einsum('bve,bne->bvn', of2s_b, of1_bf,
                    preferred_element_type=jnp.float32)         # (BB, V, NP)

    # zero-behavior-row mask (host-precomputed, 1.0 = valid / 0.0 = masked).
    pad = jnp.float32(-2.0 ** 32 + 1.0)
    m1 = jnp.where(mask_ref[...] == 0.0, pad, m1)               # (BB,1,NP) bcast

    m1max = jnp.max(m1, axis=-1, keepdims=True)
    e1 = jnp.exp(m1 - m1max)
    inv1 = pl.reciprocal(jnp.sum(e1, axis=-1, keepdims=True), approx=True)
    sm1 = (e1 * inv1).astype(jnp.bfloat16)                      # (BB, V, NP)

    # weighted behavior sum per virtual kernel (bf16 operands, f32 accum).
    ws1 = jnp.einsum('bvn,bne->bve', sm1, of1_bf,
                     preferred_element_type=jnp.float32)        # (BB, V, EP)

    # attention-2 softmax is hoisted to the wrapper; only the final combine
    # remains, reordered as out = sum_v sm2 * (tag . ws1) to avoid the (C, E)
    # intermediate.
    t = jnp.einsum('bce,bve->bcv', tag_ref[...], ws1,
                   preferred_element_type=jnp.float32)          # (BB, C, V)
    out_ref[...] = jnp.sum(sm2_ref[...] * t, axis=2)            # (BB, C)


@partial(jax.jit, static_argnames=("block_b",))
def mvke_forward(x, tag, vk, w1, b1, w2, b2, w3, b3, w4, b4, *, block_b=128):
    """x: (B, N, E), tag: (B, C, E) -> (B, C)."""
    assert block_b % 8 == 0
    B = x.shape[0]
    # Block size: <= block_b, sublane-aligned, and sized so the grid has at
    # least two steps when B allows it (keeps both v7x TensorCores busy under
    # dimension_semantics=("parallel",)).
    BB = max(8, min(block_b, _round_up((B + 1) // 2, 8)))
    Bp = _round_up(B, BB)
    grid = (Bp // BB,)

    f32 = jnp.float32
    bf16 = jnp.bfloat16
    scale = f32(1.0 / math.sqrt(DK))

    # Batch-invariant projections folded on the host (scale folded in).
    of2s = (vk @ w2.T + b2) * scale                   # (V, E) = fc2(vk)/sqrt(dk)
    of3s = (vk @ w3.T + b3) * scale                   # (V, E) = fc3(vk)/sqrt(dk)

    # Attention-2 hoisted entirely: depends only on tag and constants.
    of4 = tag @ w4.T + b4                             # (B, C, E)
    m2 = jnp.einsum('bce,ve->bcv', of4, of3s)         # (B, C, V)
    sm2 = jax.nn.softmax(m2, axis=1)                  # softmax over tags (dim=1)

    # Zero-behavior-row mask from the original f32 x (exact reference
    # semantics, decoupled from the bf16 cast below).
    row_valid = (jnp.sum(jnp.abs(x), axis=2) != 0.0).astype(f32)    # (B, N)

    # Zero-pad to TPU-friendly shapes (fused with the bf16 cast in this jitted
    # pass).  Invariant: padded rows/cols of w1t/b1/of2s stay exactly zero so
    # fully-masked examples (of1 == b1 on every padded row) reproduce the
    # reference's degenerate uniform-softmax path.
    xp = jnp.zeros((Bp, NP, EP), bf16).at[:B, :N, :E].set(x.astype(bf16))
    xf = xp.reshape(Bp * NP, EP)
    maskp = jnp.zeros((Bp, 1, NP), f32).at[:B, 0, :N].set(row_valid)
    tagp = jnp.zeros((Bp, C, EP), f32).at[:B, :, :E].set(tag)
    sm2p = jnp.zeros((Bp, C, V), f32).at[:B].set(sm2)
    w1tp = jnp.zeros((EP, EP), bf16).at[:E, :E].set(w1.T.astype(bf16))
    b1p = jnp.zeros((1, EP), f32).at[0, :E].set(b1)
    of2sp = jnp.zeros((V, EP), bf16).at[:, :E].set(of2s.astype(bf16))

    def fixed(shape):
        return pl.BlockSpec(shape, lambda b: (0,) * len(shape))

    grid_spec = pltpu.PrefetchScalarGridSpec(
        num_scalar_prefetch=0,
        grid=grid,
        in_specs=[
            pl.BlockSpec((BB * NP, EP), lambda b: (b, 0)),    # x (flattened, bf16)
            pl.BlockSpec((BB, 1, NP), lambda b: (b, 0, 0)),   # behavior-row mask
            pl.BlockSpec((BB, C, EP), lambda b: (b, 0, 0)),   # tag_embedding
            pl.BlockSpec((BB, C, V), lambda b: (b, 0, 0)),    # hoisted softmax2
            fixed((EP, EP)),                                  # w1^T (bf16)
            fixed((1, EP)),                                   # b1 (f32)
            fixed((V, EP)),                                   # fc2(vk)/sqrt(dk)
        ],
        out_specs=pl.BlockSpec((BB, C), lambda b: (b, 0)),
    )

    out = pl.pallas_call(
        mvke_kernel,
        out_shape=jax.ShapeDtypeStruct((Bp, C), jnp.float32),
        grid_spec=grid_spec,
        compiler_params=pltpu.CompilerParams(
            dimension_semantics=("parallel",)),
    )(xf, maskp, tagp, sm2p, w1tp, b1p, of2sp)
    return out[:B]


def mvke_reference(x, tag, vk, w1, b1, w2, b2, w3, b3, w4, b4):
    """Pure-JAX reference mirroring the PyTorch forward exactly (f32)."""
    scale = 1.0 / math.sqrt(DK)
    of1 = x @ w1.T + b1                                   # (B, N, E)
    of2 = vk @ w2.T + b2                                  # (V, E)
    m1 = jnp.einsum('bne,ve->bnv', of1, of2) * scale      # (B, N, V)
    sign = jnp.sign(jnp.sum(jnp.abs(x), axis=2))[..., None]
    pad = jnp.float32(-2.0 ** 32 + 1.0)
    masked = jnp.where(sign == 0, pad, m1)
    sm1 = jax.nn.softmax(masked, axis=1)
    ws1 = jnp.einsum('bnv,bne->bve', sm1, of1)            # (B, V, E)
    of3 = vk @ w3.T + b3                                  # (V, E)
    of4 = tag @ w4.T + b4                                 # (B, C, E)
    m2 = jnp.einsum('bce,ve->bcv', of4, of3) * scale      # (B, C, V)
    sm2 = jax.nn.softmax(m2, axis=1)                      # softmax over C (as written)
    ws2 = jnp.einsum('bcv,bve->bce', sm2, ws1)            # (B, C, E)
    return jnp.sum(ws2 * tag, axis=2)                     # (B, C)


if __name__ == "__main__":
    B = 20
    key = jax.random.PRNGKey(0)
    keys = jax.random.split(key, 12)

    bound = 1.0 / math.sqrt(E)  # nn.Linear default init range
    w1 = jax.random.uniform(keys[0], (E, E), jnp.float32, -bound, bound)
    b1 = jax.random.uniform(keys[1], (E,), jnp.float32, -bound, bound)
    w2 = jax.random.uniform(keys[2], (E, E), jnp.float32, -bound, bound)
    b2 = jax.random.uniform(keys[3], (E,), jnp.float32, -bound, bound)
    w3 = jax.random.uniform(keys[4], (E, E), jnp.float32, -bound, bound)
    b3 = jax.random.uniform(keys[5], (E,), jnp.float32, -bound, bound)
    w4 = jax.random.uniform(keys[6], (E, E), jnp.float32, -bound, bound)
    b4 = jax.random.uniform(keys[7], (E,), jnp.float32, -bound, bound)
    vk = jax.random.uniform(keys[8], (V, E), jnp.float32, 0.0, 1.0)  # torch.rand

    x = jax.random.normal(keys[9], (B, N, E), jnp.float32)
    # zero out a few behavior rows (partial mask) and one full example
    # (degenerate all-masked softmax path), as in the PyTorch semantics.
    x = x.at[0, N - 8:, :].set(0.0)
    x = x.at[3].set(0.0)
    tag = jax.random.normal(keys[10], (B, C, E), jnp.float32)

    # Default block_b=128 auto-shrinks to BB=16 for B=20: exercises batch
    # padding (20 -> 32) and a 2-step megacore-shardable grid.
    out = mvke_forward(x, tag, vk, w1, b1, w2, b2, w3, b3, w4, b4)
    out = jax.block_until_ready(out)

    ref = mvke_reference(x, tag, vk, w1, b1, w2, b2, w3, b3, w4, b4)
    ref = jax.block_until_ready(ref)

    # bf16 matmul operands (x, w1, of1, sm1) => slightly looser absolute
    # tolerance than the pure-f32 kernel; rel tolerance unchanged.
    np.testing.assert_allclose(np.asarray(out), np.asarray(ref),
                               rtol=2e-2, atol=5e-2)
    print("KERNEL_OK")
</pallas_src>

<mosaic_0001>
module attributes {stable_mosaic.version = 11 : i64} {
  func.func @mvke_kernel(%arg0: i32, %arg1: memref<1536x128xbf16, #tpu.memory_space<vmem>>, %arg2: memref<16x1x96xf32, #tpu.memory_space<vmem>>, %arg3: memref<16x4x128xf32, #tpu.memory_space<vmem>>, %arg4: memref<16x4x3xf32, #tpu.memory_space<vmem>>, %arg5: memref<128x128xbf16, #tpu.memory_space<vmem>>, %arg6: memref<1x128xf32, #tpu.memory_space<vmem>>, %arg7: memref<3x128xbf16, #tpu.memory_space<vmem>>, %arg8: memref<16x4xf32, #tpu.memory_space<vmem>>) attributes {dimension_semantics = [#tpu.dimension_semantics<parallel>], iteration_bounds = array<i64: 2>, scalar_prefetch = 0 : i64, scratch_operands = 0 : i64, tpu.core_type = #tpu.core_type<tc>, window_params = [{transform_indices = @transform_0, window_bounds = array<i64: 1536, 128>}, {transform_indices = @transform_1, window_bounds = array<i64: 16, 1, 96>}, {transform_indices = @transform_2, window_bounds = array<i64: 16, 4, 128>}, {transform_indices = @transform_3, window_bounds = array<i64: 16, 4, 3>}, {pipeline_mode = #tpu.pipeline_mode<synchronous>, transform_indices = @transform_4, window_bounds = array<i64: 128, 128>}, {pipeline_mode = #tpu.pipeline_mode<synchronous>, transform_indices = @transform_5, window_bounds = array<i64: 1, 128>}, {pipeline_mode = #tpu.pipeline_mode<synchronous>, transform_indices = @transform_6, window_bounds = array<i64: 3, 128>}, {transform_indices = @transform_7, window_bounds = array<i64: 16, 4>}]} {
    %c0 = arith.constant 0 : index
    %c0_0 = arith.constant 0 : index
    %0 = vector.load %arg1[%c0, %c0_0] : memref<1536x128xbf16, #tpu.memory_space<vmem>>, vector<1536x128xbf16>
    %c0_1 = arith.constant 0 : index
    %c0_2 = arith.constant 0 : index
    %1 = vector.load %arg5[%c0_1, %c0_2] : memref<128x128xbf16, #tpu.memory_space<vmem>>, vector<128x128xbf16>
    %cst = arith.constant dense<0.000000e+00> : vector<1536x128xf32>
    %2 = tpu.matmul %0, %1, %cst {dimension_numbers = #tpu.dot_dimension_numbers<[1], [0], [0], [1], [0, 0, 1, 1], [], []>} : vector<1536x128xbf16>, vector<128x128xbf16>, vector<1536x128xf32> -> vector<1536x128xf32>
    %c0_3 = arith.constant 0 : index
    %c0_4 = arith.constant 0 : index
    %3 = vector.load %arg6[%c0_3, %c0_4] : memref<1x128xf32, #tpu.memory_space<vmem>>, vector<1x128xf32>
    %4 = vector.broadcast %3 : vector<1x128xf32> to vector<1536x128xf32>
    %5 = arith.addf %2, %4 : vector<1536x128xf32>
    %6 = arith.truncf %5 : vector<1536x128xf32> to vector<1536x128xbf16>
    %7 = vector.shape_cast %6 : vector<1536x128xbf16> to vector<16x96x128xbf16>
    %c0_5 = arith.constant 0 : index
    %c0_6 = arith.constant 0 : index
    %8 = vector.load %arg7[%c0_5, %c0_6] : memref<3x128xbf16, #tpu.memory_space<vmem>>, vector<3x128xbf16>
    %9 = vector.shape_cast %8 : vector<3x128xbf16> to vector<1x3x128xbf16>
    %10 = vector.broadcast %9 : vector<1x3x128xbf16> to vector<16x3x128xbf16>
    "tpu.trace_start"() <{level = 10 : i32, message = "bve,bne->bvn"}> : () -> ()
    %cst_7 = arith.constant dense<0.000000e+00> : vector<16x3x96xf32>
    %11 = tpu.matmul %10, %7, %cst_7 {dimension_numbers = #tpu.dot_dimension_numbers<[2], [2], [1], [1], [0, 0, 0, 1, 1, 1], [0], [0]>} : vector<16x3x128xbf16>, vector<16x96x128xbf16>, vector<16x3x96xf32> -> vector<16x3x96xf32>
    "tpu.trace_stop"() : () -> ()
    %c0_8 = arith.constant 0 : index
    %c0_9 = arith.constant 0 : index
    %c0_10 = arith.constant 0 : index
    %12 = vector.load %arg2[%c0_8, %c0_9, %c0_10] : memref<16x1x96xf32, #tpu.memory_space<vmem>>, vector<16x1x96xf32>
    %cst_11 = arith.constant 0.000000e+00 : f32
    %13 = vector.broadcast %cst_11 : f32 to vector<16x1x96xf32>
    %14 = arith.cmpf oeq, %12, %13 : vector<16x1x96xf32>
    %cst_12 = arith.constant -4.2949673E+9 : f32
    %15 = vector.shape_cast %14 : vector<16x1x96xi1> to vector<16x1x96xi1>
    %16 = vector.broadcast %15 : vector<16x1x96xi1> to vector<16x3x96xi1>
    %17 = vector.broadcast %cst_12 : f32 to vector<16x3x96xf32>
    %18 = arith.select %16, %17, %11 : vector<16x3x96xi1>, vector<16x3x96xf32>
    %cst_13 = arith.constant dense<0xFF800000> : vector<16x3xf32>
    %19 = vector.multi_reduction <maximumf>, %18, %cst_13 [2] : vector<16x3x96xf32> to vector<16x3xf32>
    %20 = vector.shape_cast %19 : vector<16x3xf32> to vector<16x3x1xf32>
    %21 = vector.broadcast %20 : vector<16x3x1xf32> to vector<16x3x96xf32>
    %22 = arith.subf %18, %21 : vector<16x3x96xf32>
    %23 = math.exp %22 : vector<16x3x96xf32>
    %cst_14 = arith.constant dense<0.000000e+00> : vector<16x3xf32>
    %24 = vector.multi_reduction <add>, %23, %cst_14 [2] : vector<16x3x96xf32> to vector<16x3xf32>
    %25 = vector.shape_cast %24 : vector<16x3xf32> to vector<16x3x1xf32>
    %26 = tpu.reciprocal %25 {approx = true} : vector<16x3x1xf32> -> vector<16x3x1xf32>
    %27 = vector.broadcast %26 : vector<16x3x1xf32> to vector<16x3x96xf32>
    %28 = arith.mulf %23, %27 : vector<16x3x96xf32>
    %29 = arith.truncf %28 : vector<16x3x96xf32> to vector<16x3x96xbf16>
    "tpu.trace_start"() <{level = 10 : i32, message = "bvn,bne->bve"}> : () -> ()
    %cst_15 = arith.constant dense<0.000000e+00> : vector<16x3x128xf32>
    %30 = tpu.matmul %29, %7, %cst_15 {dimension_numbers = #tpu.dot_dimension_numbers<[2], [1], [1], [2], [0, 0, 0, 1, 1, 2], [0], [0]>} : vector<16x3x96xbf16>, vector<16x96x128xbf16>, vector<16x3x128xf32> -> vector<16x3x128xf32>
    "tpu.trace_stop"() : () -> ()
    %c0_16 = arith.constant 0 : index
    %c0_17 = arith.constant 0 : index
    %c0_18 = arith.constant 0 : index
    %31 = vector.load %arg3[%c0_16, %c0_17, %c0_18] : memref<16x4x128xf32, #tpu.memory_space<vmem>>, vector<16x4x128xf32>
    "tpu.trace_start"() <{level = 10 : i32, message = "bce,bve->bcv"}> : () -> ()
    %cst_19 = arith.constant dense<0.000000e+00> : vector<16x4x3xf32>
    %32 = tpu.matmul %31, %30, %cst_19 {dimension_numbers = #tpu.dot_dimension_numbers<[2], [2], [1], [1], [0, 0, 0, 1, 1, 1], [0], [0]>} : vector<16x4x128xf32>, vector<16x3x128xf32>, vector<16x4x3xf32> -> vector<16x4x3xf32>
    "tpu.trace_stop"() : () -> ()
    %c0_20 = arith.constant 0 : index
    %c0_21 = arith.constant 0 : index
    %c0_22 = arith.constant 0 : index
    %33 = vector.load %arg4[%c0_20, %c0_21, %c0_22] : memref<16x4x3xf32, #tpu.memory_space<vmem>>, vector<16x4x3xf32>
    %34 = arith.mulf %33, %32 : vector<16x4x3xf32>
    %cst_23 = arith.constant dense<0.000000e+00> : vector<16x4xf32>
    %35 = vector.multi_reduction <add>, %34, %cst_23 [2] : vector<16x4x3xf32> to vector<16x4xf32>
    %c0_24 = arith.constant 0 : index
    %c0_25 = arith.constant 0 : index
    %36 = vector.load %arg8[%c0_24, %c0_25] : memref<16x4xf32, #tpu.memory_space<vmem>>, vector<16x4xf32>
    tpu.vector_store %arg8[%c0_24, %c0_25], %35 {strides = array<i32>} : memref<16x4xf32, #tpu.memory_space<vmem>>, vector<16x4xf32>,
    return
  }
  func.func @transform_0(%arg0: i32) -> (i32, i32) {
    %c0_i32 = arith.constant 0 : i32
    %c0_i32_0 = arith.constant 0 : i32
    return %arg0, %c0_i32 : i32, i32
  }
  func.func @transform_1(%arg0: i32) -> (i32, i32, i32) {
    %c0_i32 = arith.constant 0 : i32
    %c0_i32_0 = arith.constant 0 : i32
    %c0_i32_1 = arith.constant 0 : i32
    return %arg0, %c0_i32, %c0_i32_0 : i32, i32, i32
  }
  func.func @transform_2(%arg0: i32) -> (i32, i32, i32) {
    %c0_i32 = arith.constant 0 : i32
    %c0_i32_0 = arith.constant 0 : i32
    %c0_i32_1 = arith.constant 0 : i32
    return %arg0, %c0_i32, %c0_i32_0 : i32, i32, i32
  }
  func.func @transform_3(%arg0: i32) -> (i32, i32, i32) {
    %c0_i32 = arith.constant 0 : i32
    %c0_i32_0 = arith.constant 0 : i32
    %c0_i32_1 = arith.constant 0 : i32
    return %arg0, %c0_i32, %c0_i32_0 : i32, i32, i32
  }
  func.func @transform_4(%arg0: i32) -> (i32, i32) {
    %c0_i32 = arith.constant 0 : i32
    %c0_i32_0 = arith.constant 0 : i32
    %c0_i32_1 = arith.constant 0 : i32
    return %c0_i32, %c0_i32_0 : i32, i32
  }
  func.func @transform_5(%arg0: i32) -> (i32, i32) {
    %c0_i32 = arith.constant 0 : i32
    %c0_i32_0 = arith.constant 0 : i32
    %c0_i32_1 = arith.constant 0 : i32
    return %c0_i32, %c0_i32_0 : i32, i32
  }
  func.func @transform_6(%arg0: i32) -> (i32, i32) {
    %c0_i32 = arith.constant 0 : i32
    %c0_i32_0 = arith.constant 0 : i32
    %c0_i32_1 = arith.constant 0 : i32
    return %c0_i32, %c0_i32_0 : i32, i32
  }
  func.func @transform_7(%arg0: i32) -> (i32, i32) {
    %c0_i32 = arith.constant 0 : i32
    %c0_i32_0 = arith.constant 0 : i32
    return %arg0, %c0_i32 : i32, i32
  }
}

</mosaic_0001>

<llo_original>
// kernel: mvke_forward.1
$region0: #{mvke_forward.1}
  #allocation0 [shape = 'u32[]', space=smem, size = 0x4, offset = 0x4, fixed_abs, tag = 'smem constant byte address 0x4 - core index']
  #allocation1 [shape = 'u32[144,128]{1,0:T(1,128)}', space=vmem, size = 0x12000, scoped, tag = 'internal scratch']
  %s0 = inlined_call_operand.vmem [shape: bf16[3072,128], index: 0, kind: input, shape index: {}]
  %s1 = inlined_call_operand.vmem [shape: f32[32,1,96], index: 1, kind: input, shape index: {}]
  %s2 = inlined_call_operand.vmem [shape: f32[32,4,128], index: 2, kind: input, shape index: {}]
  %s3 = inlined_call_operand.vmem [shape: f32[32,4,3], index: 3, kind: input, shape index: {}]
  %s4 = inlined_call_operand.vmem [shape: bf16[128,128], index: 4, kind: input, shape index: {}]
  %s5 = inlined_call_operand.vmem [shape: f32[1,128], index: 5, kind: input, shape index: {}]
  %s6 = inlined_call_operand.vmem [shape: bf16[3,128], index: 6, kind: input, shape index: {}]
  %s7 = inlined_call_operand.vmem [shape: f32[32,4], index: 7, kind: output, shape index: {}]
  %s8 = sld [smem:[#allocation0]]
  $region61: #{mvke_forward.1} parent=0
    _
  %s10 = ssub.s32 1, %s8
  %s11 = scalar_select 0, %s10, %s8
  loop: start=0, step=1, limit=4
  $region2: #{mvke_forward.1} parent=0 // loop_pre_header
    _
  $region3: #{mvke_forward.1} parent=0 // loop_header
    %s13 = sphi 0, %s17
    %p14 = scmp.ge.s32.totalorder %s13, 4
    %s23 = sphi 0, %s25
    %s26 = sphi 0, %s23
    %s27 = sphi 0, %s26
    %s43 = sphi 0, %s27
    %s49 = sphi 0, %s51
    %s52 = sphi 0, %s49
    %s53 = sphi 0, %s52
    %s69 = sphi 0, %s53
    %s75 = sphi 0, %s77
    %s78 = sphi 0, %s75
    %s79 = sphi 0, %s78
    %s95 = sphi 0, %s79
    %s101 = sphi 0, %s103
    %s104 = sphi 0, %s101
    %s105 = sphi 0, %s104
    %s121 = sphi 0, %s105
    %s125 = sphi 0, %s125
    %s127 = sphi 0, %s125
    %s128 = sphi 0, %s127
    %s142 = sphi 0, %s128
    %s146 = sphi 0, %s146
    %s148 = sphi 0, %s146
    %s149 = sphi 0, %s148
    %s163 = sphi 0, %s149
    %s167 = sphi 0, %s167
    %s169 = sphi 0, %s167
    %s170 = sphi 0, %s169
    %s184 = sphi 0, %s170
    %s190 = sphi 0, %s192
    %s193 = sphi 0, %s190
    %s194 = sphi 0, %s193
    %s210 = sphi 0, %s194
  $region4: #{mvke_forward.1} parent=0 // loop_header_branch
    %16 = sbr.rel (%p14) target = $region8
  $region5: #{mvke_forward.1} parent=0 // loop_body
    %s18 = ssub.s32 %s13, 1
    %s19 = ssub.s32 %s13, 2
    %s20 = sadd.s32 %s13, 1
    %s21 = ssub.s32 %s13, %s20
    %p22 = scmp.eq.s32.totalorder %s21, 0
    %s24 = sadd.s32 %s23, 1
    %s25 = scalar_select %p22, %s23, %s24
    %p28 = pneg %p22
    %p29 = scmp.eq.s32.totalorder %s13, 1
    %p30 = por %p28, %p29
    %p31 = scmp.ne.s32.totalorder %s23, %s26
    %p32 = scmp.eq.s32.totalorder %s13, 0
    %p33 = por %p31, %p32
    %p34 = scmp.ne.s32.totalorder %s23, %s26
    %p35 = scmp.eq.s32.totalorder %s18, 1
    %p36 = por %p34, %p35
    %p37 = scmp.ne.s32.totalorder %s26, %s27
    %p38 = scmp.eq.s32.totalorder %s18, 0
    %p39 = por %p37, %p38
    %p40 = scmp.ne.s32.totalorder %s26, %s27
    %p41 = scmp.eq.s32.totalorder %s19, 1
    %p42 = por %p40, %p41
    %p44 = scmp.ne.s32.totalorder %s27, %s43
    %p45 = scmp.eq.s32.totalorder %s19, 0
    %p46 = por %p44, %p45
    %s47 = ssub.s32 %s13, %s20
    %p48 = scmp.eq.s32.totalorder %s47, 0
    %s50 = sadd.s32 %s49, 1
    %s51 = scalar_select %p48, %s49, %s50
    %p54 = pneg %p48
    %p55 = scmp.eq.s32.totalorder %s13, 1
    %p56 = por %p54, %p55
    %p57 = scmp.ne.s32.totalorder %s49, %s52
    %p58 = scmp.eq.s32.totalorder %s13, 0
    %p59 = por %p57, %p58
    %p60 = scmp.ne.s32.totalorder %s49, %s52
    %p61 = scmp.eq.s32.totalorder %s18, 1
    %p62 = por %p60, %p61
    %p63 = scmp.ne.s32.totalorder %s52, %s53
    %p64 = scmp.eq.s32.totalorder %s18, 0
    %p65 = por %p63, %p64
    %p66 = scmp.ne.s32.totalorder %s52, %s53
    %p67 = scmp.eq.s32.totalorder %s19, 1
    %p68 = por %p66, %p67
    %p70 = scmp.ne.s32.totalorder %s53, %s69
    %p71 = scmp.eq.s32.totalorder %s19, 0
    %p72 = por %p70, %p71
    %s73 = ssub.s32 %s13, %s20
    %p74 = scmp.eq.s32.totalorder %s73, 0
    %s76 = sadd.s32 %s75, 1
    %s77 = scalar_select %p74, %s75, %s76
    %p80 = pneg %p74
    %p81 = scmp.eq.s32.totalorder %s13, 1
    %p82 = por %p80, %p81
    %p83 = scmp.ne.s32.totalorder %s75, %s78
    %p84 = scmp.eq.s32.totalorder %s13, 0
    %p85 = por %p83, %p84
    %p86 = scmp.ne.s32.totalorder %s75, %s78
    %p87 = scmp.eq.s32.totalorder %s18, 1
    %p88 = por %p86, %p87
    %p89 = scmp.ne.s32.totalorder %s78, %s79
    %p90 = scmp.eq.s32.totalorder %s18, 0
    %p91 = por %p89, %p90
    %p92 = scmp.ne.s32.totalorder %s78, %s79
    %p93 = scmp.eq.s32.totalorder %s19, 1
    %p94 = por %p92, %p93
    %p96 = scmp.ne.s32.totalorder %s79, %s95
    %p97 = scmp.eq.s32.totalorder %s19, 0
    %p98 = por %p96, %p97
    %s99 = ssub.s32 %s13, %s20
    %p100 = scmp.eq.s32.totalorder %s99, 0
    %s102 = sadd.s32 %s101, 1
    %s103 = scalar_select %p100, %s101, %s102
    %p106 = pneg %p100
    %p107 = scmp.eq.s32.totalorder %s13, 1
    %p108 = por %p106, %p107
    %p109 = scmp.ne.s32.totalorder %s101, %s104
    %p110 = scmp.eq.s32.totalorder %s13, 0
    %p111 = por %p109, %p110
    %p112 = scmp.ne.s32.totalorder %s101, %s104
    %p113 = scmp.eq.s32.totalorder %s18, 1
    %p114 = por %p112, %p113
    %p115 = scmp.ne.s32.totalorder %s104, %s105
    %p116 = scmp.eq.s32.totalorder %s18, 0
    %p117 = por %p115, %p116
    %p118 = scmp.ne.s32.totalorder %s104, %s105
    %p119 = scmp.eq.s32.totalorder %s19, 1
    %p120 = por %p118, %p119
    %p122 = scmp.ne.s32.totalorder %s105, %s121
    %p123 = scmp.eq.s32.totalorder %s19, 0
    %p124 = por %p122, %p123
    %s126 = sadd.s32 %s125, 1
    %p129 = scmp.eq.s32.totalorder %s13, 1
    %p130 = scmp.ne.s32.totalorder %s125, %s127
    %p131 = scmp.eq.s32.totalorder %s13, 0
    %p132 = por %p130, %p131
    %p133 = scmp.ne.s32.totalorder %s125, %s127
    %p134 = scmp.eq.s32.totalorder %s18, 1
    %p135 = por %p133, %p134
    %p136 = scmp.ne.s32.totalorder %s127, %s128
    %p137 = scmp.eq.s32.totalorder %s18, 0
    %p138 = por %p136, %p137
    %p139 = scmp.ne.s32.totalorder %s127, %s128
    %p140 = scmp.eq.s32.totalorder %s19, 1
    %p141 = por %p139, %p140
    %p143 = scmp.ne.s32.totalorder %s128, %s142
    %p144 = scmp.eq.s32.totalorder %s19, 0
    %p145 = por %p143, %p144
    %s147 = sadd.s32 %s146, 1
    %p150 = scmp.eq.s32.totalorder %s13, 1
    %p151 = scmp.ne.s32.totalorder %s146, %s148
    %p152 = scmp.eq.s32.totalorder %s13, 0
    %p153 = por %p151, %p152
    %p154 = scmp.ne.s32.totalorder %s146, %s148
    %p155 = scmp.eq.s32.totalorder %s18, 1
    %p156 = por %p154, %p155
    %p157 = scmp.ne.s32.totalorder %s148, %s149
    %p158 = scmp.eq.s32.totalorder %s18, 0
    %p159 = por %p157, %p158
    %p160 = scmp.ne.s32.totalorder %s148, %s149
    %p161 = scmp.eq.s32.totalorder %s19, 1
    %p162 = por %p160, %p161
    %p164 = scmp.ne.s32.totalorder %s149, %s163
    %p165 = scmp.eq.s32.totalorder %s19, 0
    %p166 = por %p164, %p165
    %s168 = sadd.s32 %s167, 1
    %p171 = scmp.eq.s32.totalorder %s13, 1
    %p172 = scmp.ne.s32.totalorder %s167, %s169
    %p173 = scmp.eq.s32.totalorder %s13, 0
    %p174 = por %p172, %p173
    %p175 = scmp.ne.s32.totalorder %s167, %s169
    %p176 = scmp.eq.s32.totalorder %s18, 1
    %p177 = por %p175, %p176
    %p178 = scmp.ne.s32.totalorder %s169, %s170
    %p179 = scmp.eq.s32.totalorder %s18, 0
    %p180 = por %p178, %p179
    %p181 = scmp.ne.s32.totalorder %s169, %s170
    %p182 = scmp.eq.s32.totalorder %s19, 1
    %p183 = por %p181, %p182
    %p185 = scmp.ne.s32.totalorder %s170, %s184
    %p186 = scmp.eq.s32.totalorder %s19, 0
    %p187 = por %p185, %p186
    %s188 = ssub.s32 %s13, %s20
    %p189 = scmp.eq.s32.totalorder %s188, 0
    %s191 = sadd.s32 %s190, 1
    %s192 = scalar_select %p189, %s190, %s191
    %p195 = pneg %p189
    %p196 = scmp.eq.s32.totalorder %s13, 1
    %p197 = por %p195, %p196
    %p198 = scmp.ne.s32.totalorder %s190, %s193
    %p199 = scmp.eq.s32.totalorder %s13, 0
    %p200 = por %p198, %p199
    %p201 = scmp.ne.s32.totalorder %s190, %s193
    %p202 = scmp.eq.s32.totalorder %s18, 1
    %p203 = por %p201, %p202
    %p204 = scmp.ne.s32.totalorder %s193, %s194
    %p205 = scmp.eq.s32.totalorder %s18, 0
    %p206 = por %p204, %p205
    %p207 = scmp.ne.s32.totalorder %s193, %s194
    %p208 = scmp.eq.s32.totalorder %s19, 1
    %p209 = por %p207, %p208
    %p211 = scmp.ne.s32.totalorder %s194, %s210
    %p212 = scmp.eq.s32.totalorder %s19, 0
    %p213 = por %p211, %p212
    %p214 = scmp.le.s32.totalorder 1, %s13
    %p215 = scmp.lt.s32.totalorder %s13, 3
    %p216 = pnand %p214, %p215
    %p217 = pneg %p216
    // Predicated region
    $region9: #{mvke_forward.1} parent=5 // pred_check
      _
    $region10: #{mvke_forward.1} parent=5 // pred_check_branch
      %219 = sbr.rel (%p216) target = $region12
    $region11: #{mvke_forward.1} parent=5 // pred_region
      %s220 = ssub.s32 %s13, 1
      // Predicated region
      $region13: #{mvke_forward.1} parent=11 // pred_check
        %p221 = pneg %p138
      $region14: #{mvke_forward.1} parent=11 // pred_check_branch
        %223 = sbr.rel (%p221) target = $region16
      $region15: #{mvke_forward.1} parent=11 // pred_region
        _
      $region16: #{mvke_forward.1} parent=11 // pred_fallthru
        _
      // Predicated region
      $region17: #{mvke_forward.1} parent=11 // pred_check
        %p224 = pneg %p159
      $region18: #{mvke_forward.1} parent=11 // pred_check_branch
        %226 = sbr.rel (%p224) target = $region20
      $region19: #{mvke_forward.1} parent=11 // pred_region
        _
      $region20: #{mvke_forward.1} parent=11 // pred_fallthru
        _
      // Predicated region
      $region21: #{mvke_forward.1} parent=11 // pred_check
        %p227 = pneg %p180
      $region22: #{mvke_forward.1} parent=11 // pred_check_branch
        %229 = sbr.rel (%p227) target = $region24
      $region23: #{mvke_forward.1} parent=11 // pred_region
        _
      $region24: #{mvke_forward.1} parent=11 // pred_fallthru
        _
    $region12: #{mvke_forward.1} parent=5 // pred_fallthru
      _
    %p230 = scmp.lt.s32.totalorder %s13, 2
    // Predicated region
    $region25: #{mvke_forward.1} parent=5 // pred_check
      %p231 = pneg %p230
    $region26: #{mvke_forward.1} parent=5 // pred_check_branch
      %233 = sbr.rel (%p231) target = $region28
    $region27: #{mvke_forward.1} parent=5 // pred_region
      // Predicated region
      $region29: #{mvke_forward.1} parent=27 // pred_check
        %p234 = pneg %p33
      $region30: #{mvke_forward.1} parent=27 // pred_check_branch
        %236 = sbr.rel (%p234) target = $region32
      $region31: #{mvke_forward.1} parent=27 // pred_region
        %s237 = smul.u32 192, %s13
        %p238 = scmp.lt.s32.totalorder %s237, 383
        %s239 = scalar_select %p238, %s237, 383
        %s240 = smul.addr %s239, 4
        %s241 = scalar_lea.vmem %s0, %s240
        %s242 = smul.u32 192, %s13
      $region32: #{mvke_forward.1} parent=27 // pred_fallthru
        _
      // Predicated region
      $region33: #{mvke_forward.1} parent=27 // pred_check
        %p243 = pneg %p59
      $region34: #{mvke_forward.1} parent=27 // pred_check_branch
        %245 = sbr.rel (%p243) target = $region36
      $region35: #{mvke_forward.1} parent=27 // pred_region
        %s246 = smul.u32 16, %s13
        %p247 = scmp.lt.s32.totalorder %s246, 31
        %s248 = scalar_select %p247, %s246, 31
        %s249 = scalar_lea.vmem %s1, %s248
        %s250 = smul.u32 16, %s13
      $region36: #{mvke_forward.1} parent=27 // pred_fallthru
        _
      // Predicated region
      $region37: #{mvke_forward.1} parent=27 // pred_check
        %p251 = pneg %p85
      $region38: #{mvke_forward.1} parent=27 // pred_check_branch
        %253 = sbr.rel (%p251) target = $region40
      $region39: #{mvke_forward.1} parent=27 // pred_region
        %s254 = smul.u32 16, %s13
        %p255 = scmp.lt.s32.totalorder %s254, 31
        %s256 = scalar_select %p255, %s254, 31
        %s257 = smul.addr %s256, 4
        %s258 = scalar_lea.vmem %s2, %s257
        %s259 = smul.u32 16, %s13
      $region40: #{mvke_forward.1} parent=27 // pred_fallthru
        _
      // Predicated region
      $region41: #{mvke_forward.1} parent=27 // pred_check
        %p260 = pneg %p111
      $region42: #{mvke_forward.1} parent=27 // pred_check_branch
        %262 = sbr.rel (%p260) target = $region44
      $region43: #{mvke_forward.1} parent=27 // pred_region
        %s263 = smul.u32 16, %s13
        %p264 = scmp.lt.s32.totalorder %s263, 31
        %s265 = scalar_select %p264, %s263, 31
        %s266 = smul.addr %s265, 4
        %s267 = scalar_lea.vmem %s3, %s266
        %s268 = smul.u32 16, %s13
      $region44: #{mvke_forward.1} parent=27 // pred_fallthru
        _
    $region28: #{mvke_forward.1} parent=5 // pred_fallthru
      _
    %p269 = scmp.le.s32.totalorder 1, %s13
    %p270 = scmp.lt.s32.totalorder %s13, 3
    %p271 = pnand %p269, %p270
    %p272 = pneg %p271
    // Predicated region
    $region45: #{mvke_forward.1} parent=5 // pred_check
      _
    $region46: #{mvke_forward.1} parent=5 // pred_check_branch
      %274 = sbr.rel (%p271) target = $region48
    $region47: #{mvke_forward.1} parent=5 // pred_region
      %s275 = ssub.s32 %s13, 1
      %s276 = smul.u32 192, %s18
      %p277 = scmp.lt.s32.totalorder %s276, 383
      %s278 = scalar_select %p277, %s276, 383
      %s279 = smul.addr %s278, 4
      %s280 = scalar_lea.vmem %s0, %s279
      %p281 = pneg %p39
      %p282 = pneg %p36
      %s283 = smul.u32 16, %s18
      %p284 = scmp.lt.s32.totalorder %s283, 31
      %s285 = scalar_select %p284, %s283, 31
      %s286 = scalar_lea.vmem %s1, %s285
      %p287 = pneg %p65
      %p288 = pneg %p62
      %s289 = smul.u32 16, %s18
      %p290 = scmp.lt.s32.totalorder %s289, 31
      %s291 = scalar_select %p290, %s289, 31
      %s292 = smul.addr %s291, 4
      %s293 = scalar_lea.vmem %s2, %s292
      %p294 = pneg %p91
      %p295 = pneg %p88
      %s296 = smul.u32 16, %s18
      %p297 = scmp.lt.s32.totalorder %s296, 31
      %s298 = scalar_select %p297, %s296, 31
      %s299 = smul.addr %s298, 4
      %s300 = scalar_lea.vmem %s3, %s299
      %p301 = pneg %p117
      %p302 = pneg %p114
      %p303 = pneg %p138
      %p304 = pneg %p135
      %p305 = pneg %p159
      %p306 = pneg %p156
      %p307 = pneg %p180
      %p308 = pneg %p177
      %p309 = pneg %p206
      %p310 = pneg %p203
      %s311 = smul.u32 2, %s18
      %p312 = scmp.lt.s32.totalorder %s311, 3
      %s313 = scalar_select %p312, %s311, 3
      %s314 = smul.addr %s313, 8
      %s315 = scalar_lea.vmem %s7, %s314
      %s316 = smul.u32 192, %s18
      %p317 = scmp.lt.s32.totalorder %s316, 383
      %s318 = scalar_select %p317, %s316, 383
      %s319 = smul.addr %s318, 4
      %s320 = scalar_lea.vmem %s0, %s319
      %s321 = smul.u32 192, %s18
      %s322 = smul.u32 16, %s18
      %p323 = scmp.lt.s32.totalorder %s322, 31
      %s324 = scalar_select %p323, %s322, 31
      %s325 = scalar_lea.vmem %s1, %s324
      %s326 = smul.u32 16, %s18
      %s327 = smul.u32 16, %s18
      %p328 = scmp.lt.s32.totalorder %s327, 31
      %s329 = scalar_select %p328, %s327, 31
      %s330 = smul.addr %s329, 4
      %s331 = scalar_lea.vmem %s2, %s330
      %s332 = smul.u32 16, %s18
      %s333 = smul.u32 16, %s18
      %p334 = scmp.lt.s32.totalorder %s333, 31
      %s335 = scalar_select %p334, %s333, 31
      %s336 = smul.addr %s335, 4
      %s337 = scalar_lea.vmem %s3, %s336
      %s338 = smul.u32 16, %s18
      %s339 = smul.u32 2, %s18
      %p340 = scmp.lt.s32.totalorder %s339, 3
      %s341 = scalar_select %p340, %s339, 3
      %s342 = smul.addr %s341, 8
      %s343 = scalar_lea.vmem %s7, %s342
      %s344 = smul.u32 2, %s18
      %v346 = vld [vmem:[%s320] sm:$0xf]
      %v347 = vld [vmem:[%s320 + $0x4] sm:$0xf]
      %v348 = vld [vmem:[%s320 + $0x8] sm:$0xf]
      %v349 = vld [vmem:[%s320 + $0xc] sm:$0xf]
      %v350 = vld [vmem:[%s320 + $0x10] sm:$0xf]
      %v351 = vld [vmem:[%s320 + $0x14] sm:$0xf]
      %v352 = vld [vmem:[%s320 + $0x18] sm:$0xf]
      %v353 = vld [vmem:[%s320 + $0x1c] sm:$0xf]
      %v354 = vld [vmem:[%s320 + $0x20] sm:$0xf]
      %v355 = vld [vmem:[%s320 + $0x24] sm:$0xf]
      %v356 = vld [vmem:[%s320 + $0x28] sm:$0xf]
      %v357 = vld [vmem:[%s320 + $0x2c] sm:$0xf]
      %v358 = vld [vmem:[%s320 + $0x30] sm:$0xf]
      %v359 = vld [vmem:[%s320 + $0x34] sm:$0xf]
      %v360 = vld [vmem:[%s320 + $0x38] sm:$0xf]
      %v361 = vld [vmem:[%s320 + $0x3c] sm:$0xf]
      %v362 = vld [vmem:[%s320 + $0x40] sm:$0xf]
      %v363 = vld [vmem:[%s320 + $0x44] sm:$0xf]
      %v364 = vld [vmem:[%s320 + $0x48] sm:$0xf]
      %v365 = vld [vmem:[%s320 + $0x4c] sm:$0xf]
      %v366 = vld [vmem:[%s320 + $0x50] sm:$0xf]
      %v367 = vld [vmem:[%s320 + $0x54] sm:$0xf]
      %v368 = vld [vmem:[%s320 + $0x58] sm:$0xf]
      %v369 = vld [vmem:[%s320 + $0x5c] sm:$0xf]
      %v370 = vld [vmem:[%s320 + $0x60] sm:$0xf]
      %v371 = vld [vmem:[%s320 + $0x64] sm:$0xf]
      %v372 = vld [vmem:[%s320 + $0x68] sm:$0xf]
      %v373 = vld [vmem:[%s320 + $0x6c] sm:$0xf]
      %v374 = vld [vmem:[%s320 + $0x70] sm:$0xf]
      %v375 = vld [vmem:[%s320 + $0x74] sm:$0xf]
      %v376 = vld [vmem:[%s320 + $0x78] sm:$0xf]
      %v377 = vld [vmem:[%s320 + $0x7c] sm:$0xf]
      %v378 = vld [vmem:[%s320 + $0x80] sm:$0xf]
      %v379 = vld [vmem:[%s320 + $0x84] sm:$0xf]
      %v380 = vld [vmem:[%s320 + $0x88] sm:$0xf]
      %v381 = vld [vmem:[%s320 + $0x8c] sm:$0xf]
      %v382 = vld [vmem:[%s320 + $0x90] sm:$0xf]
      %v383 = vld [vmem:[%s320 + $0x94] sm:$0xf]
      %v384 = vld [vmem:[%s320 + $0x98] sm:$0xf]
      %v385 = vld [vmem:[%s320 + $0x9c] sm:$0xf]
      %v386 = vld [vmem:[%s320 + $0xa0] sm:$0xf]
      %v387 = vld [vmem:[%s320 + $0xa4] sm:$0xf]
      %v388 = vld [vmem:[%s320 + $0xa8] sm:$0xf]
      %v389 = vld [vmem:[%s320 + $0xac] sm:$0xf]
      %v390 = vld [vmem:[%s320 + $0xb0] sm:$0xf]
      %v391 = vld [vmem:[%s320 + $0xb4] sm:$0xf]
      %v392 = vld [vmem:[%s320 + $0xb8] sm:$0xf]
      %v393 = vld [vmem:[%s320 + $0xbc] sm:$0xf]
      %v394 = vld [vmem:[%s320 + $0xc0] sm:$0xf]
      %v395 = vld [vmem:[%s320 + $0xc4] sm:$0xf]
      %v396 = vld [vmem:[%s320 + $0xc8] sm:$0xf]
      %v397 = vld [vmem:[%s320 + $0xcc] sm:$0xf]
      %v398 = vld [vmem:[%s320 + $0xd0] sm:$0xf]
      %v399 = vld [vmem:[%s320 + $0xd4] sm:$0xf]
      %v400 = vld [vmem:[%s320 + $0xd8] sm:$0xf]
      %v401 = vld [vmem:[%s320 + $0xdc] sm:$0xf]
      %v402 = vld [vmem:[%s320 + $0xe0] sm:$0xf]
      %v403 = vld [vmem:[%s320 + $0xe4] sm:$0xf]
      %v404 = vld [vmem:[%s320 + $0xe8] sm:$0xf]
      %v405 = vld [vmem:[%s320 + $0xec] sm:$0xf]
      %v406 = vld [vmem:[%s320 + $0xf0] sm:$0xf]
      %v407 = vld [vmem:[%s320 + $0xf4] sm:$0xf]
      %v408 = vld [vmem:[%s320 + $0xf8] sm:$0xf]
      %v409 = vld [vmem:[%s320 + $0xfc] sm:$0xf]
      %v410 = vld [vmem:[%s320 + $0x100] sm:$0xf]
      %v411 = vld [vmem:[%s320 + $0x104] sm:$0xf]
      %v412 = vld [vmem:[%s320 + $0x108] sm:$0xf]
      %v413 = vld [vmem:[%s320 + $0x10c] sm:$0xf]
      %v414 = vld [vmem:[%s320 + $0x110] sm:$0xf]
      %v415 = vld [vmem:[%s320 + $0x114] sm:$0xf]
      %v416 = vld [vmem:[%s320 + $0x118] sm:$0xf]
      %v417 = vld [vmem:[%s320 + $0x11c] sm:$0xf]
      %v418 = vld [vmem:[%s320 + $0x120] sm:$0xf]
      %v419 = vld [vmem:[%s320 + $0x124] sm:$0xf]
      %v420 = vld [vmem:[%s320 + $0x128] sm:$0xf]
      %v421 = vld [vmem:[%s320 + $0x12c] sm:$0xf]
      %v422 = vld [vmem:[%s320 + $0x130] sm:$0xf]
      %v423 = vld [vmem:[%s320 + $0x134] sm:$0xf]
      %v424 = vld [vmem:[%s320 + $0x138] sm:$0xf]
      %v425 = vld [vmem:[%s320 + $0x13c] sm:$0xf]
      %v426 = vld [vmem:[%s320 + $0x140] sm:$0xf]
      %v427 = vld [vmem:[%s320 + $0x144] sm:$0xf]
      %v428 = vld [vmem:[%s320 + $0x148] sm:$0xf]
      %v429 = vld [vmem:[%s320 + $0x14c] sm:$0xf]
      %v430 = vld [vmem:[%s320 + $0x150] sm:$0xf]
      %v431 = vld [vmem:[%s320 + $0x154] sm:$0xf]
      %v432 = vld [vmem:[%s320 + $0x158] sm:$0xf]
      %v433 = vld [vmem:[%s320 + $0x15c] sm:$0xf]
      %v434 = vld [vmem:[%s320 + $0x160] sm:$0xf]
      %v435 = vld [vmem:[%s320 + $0x164] sm:$0xf]
      %v436 = vld [vmem:[%s320 + $0x168] sm:$0xf]
      %v437 = vld [vmem:[%s320 + $0x16c] sm:$0xf]
      %v438 = vld [vmem:[%s320 + $0x170] sm:$0xf]
      %v439 = vld [vmem:[%s320 + $0x174] sm:$0xf]
      %v440 = vld [vmem:[%s320 + $0x178] sm:$0xf]
      %v441 = vld [vmem:[%s320 + $0x17c] sm:$0xf]
      %v442 = vld [vmem:[%s320 + $0x180] sm:$0xf]
      %v443 = vld [vmem:[%s320 + $0x184] sm:$0xf]
      %v444 = vld [vmem:[%s320 + $0x188] sm:$0xf]
      %v445 = vld [vmem:[%s320 + $0x18c] sm:$0xf]
      %v446 = vld [vmem:[%s320 + $0x190] sm:$0xf]
      %v447 = vld [vmem:[%s320 + $0x194] sm:$0xf]
      %v448 = vld [vmem:[%s320 + $0x198] sm:$0xf]
      %v449 = vld [vmem:[%s320 + $0x19c] sm:$0xf]
      %v450 = vld [vmem:[%s320 + $0x1a0] sm:$0xf]
      %v451 = vld [vmem:[%s320 + $0x1a4] sm:$0xf]
      %v452 = vld [vmem:[%s320 + $0x1a8] sm:$0xf]
      %v453 = vld [vmem:[%s320 + $0x1ac] sm:$0xf]
      %v454 = vld [vmem:[%s320 + $0x1b0] sm:$0xf]
      %v455 = vld [vmem:[%s320 + $0x1b4] sm:$0xf]
      %v456 = vld [vmem:[%s320 + $0x1b8] sm:$0xf]
      %v457 = vld [vmem:[%s320 + $0x1bc] sm:$0xf]
      %v458 = vld [vmem:[%s320 + $0x1c0] sm:$0xf]
      %v459 = vld [vmem:[%s320 + $0x1c4] sm:$0xf]
      %v460 = vld [vmem:[%s320 + $0x1c8] sm:$0xf]
      %v461 = vld [vmem:[%s320 + $0x1cc] sm:$0xf]
      %v462 = vld [vmem:[%s320 + $0x1d0] sm:$0xf]
      %v463 = vld [vmem:[%s320 + $0x1d4] sm:$0xf]
      %v464 = vld [vmem:[%s320 + $0x1d8] sm:$0xf]
      %v465 = vld [vmem:[%s320 + $0x1dc] sm:$0xf]
      %v466 = vld [vmem:[%s320 + $0x1e0] sm:$0xf]
      %v467 = vld [vmem:[%s320 + $0x1e4] sm:$0xf]
      %v468 = vld [vmem:[%s320 + $0x1e8] sm:$0xf]
      %v469 = vld [vmem:[%s320 + $0x1ec] sm:$0xf]
      %v470 = vld [vmem:[%s320 + $0x1f0] sm:$0xf]
      %v471 = vld [vmem:[%s320 + $0x1f4] sm:$0xf]
      %v472 = vld [vmem:[%s320 + $0x1f8] sm:$0xf]
      %v473 = vld [vmem:[%s320 + $0x1fc] sm:$0xf]
      %v474 = vld [vmem:[%s320 + $0x200] sm:$0xf]
      %v475 = vld [vmem:[%s320 + $0x204] sm:$0xf]
      %v476 = vld [vmem:[%s320 + $0x208] sm:$0xf]
      %v477 = vld [vmem:[%s320 + $0x20c] sm:$0xf]
      %v478 = vld [vmem:[%s320 + $0x210] sm:$0xf]
      %v479 = vld [vmem:[%s320 + $0x214] sm:$0xf]
      %v480 = vld [vmem:[%s320 + $0x218] sm:$0xf]
      %v481 = vld [vmem:[%s320 + $0x21c] sm:$0xf]
      %v482 = vld [vmem:[%s320 + $0x220] sm:$0xf]
      %v483 = vld [vmem:[%s320 + $0x224] sm:$0xf]
      %v484 = vld [vmem:[%s320 + $0x228] sm:$0xf]
      %v485 = vld [vmem:[%s320 + $0x22c] sm:$0xf]
      %v486 = vld [vmem:[%s320 + $0x230] sm:$0xf]
      %v487 = vld [vmem:[%s320 + $0x234] sm:$0xf]
      %v488 = vld [vmem:[%s320 + $0x238] sm:$0xf]
      %v489 = vld [vmem:[%s320 + $0x23c] sm:$0xf]
      %v490 = vld [vmem:[%s320 + $0x240] sm:$0xf]
      %v491 = vld [vmem:[%s320 + $0x244] sm:$0xf]
      %v492 = vld [vmem:[%s320 + $0x248] sm:$0xf]
      %v493 = vld [vmem:[%s320 + $0x24c] sm:$0xf]
      %v494 = vld [vmem:[%s320 + $0x250] sm:$0xf]
      %v495 = vld [vmem:[%s320 + $0x254] sm:$0xf]
      %v496 = vld [vmem:[%s320 + $0x258] sm:$0xf]
      %v497 = vld [vmem:[%s320 + $0x25c] sm:$0xf]
      %v498 = vld [vmem:[%s320 + $0x260] sm:$0xf]
      %v499 = vld [vmem:[%s320 + $0x264] sm:$0xf]
      %v500 = vld [vmem:[%s320 + $0x268] sm:$0xf]
      %v501 = vld [vmem:[%s320 + $0x26c] sm:$0xf]
      %v502 = vld [vmem:[%s320 + $0x270] sm:$0xf]
      %v503 = vld [vmem:[%s320 + $0x274] sm:$0xf]
      %v504 = vld [vmem:[%s320 + $0x278] sm:$0xf]
      %v505 = vld [vmem:[%s320 + $0x27c] sm:$0xf]
      %v506 = vld [vmem:[%s320 + $0x280] sm:$0xf]
      %v507 = vld [vmem:[%s320 + $0x284] sm:$0xf]
      %v508 = vld [vmem:[%s320 + $0x288] sm:$0xf]
      %v509 = vld [vmem:[%s320 + $0x28c] sm:$0xf]
      %v510 = vld [vmem:[%s320 + $0x290] sm:$0xf]
      %v511 = vld [vmem:[%s320 + $0x294] sm:$0xf]
      %v512 = vld [vmem:[%s320 + $0x298] sm:$0xf]
      %v513 = vld [vmem:[%s320 + $0x29c] sm:$0xf]
      %v514 = vld [vmem:[%s320 + $0x2a0] sm:$0xf]
      %v515 = vld [vmem:[%s320 + $0x2a4] sm:$0xf]
      %v516 = vld [vmem:[%s320 + $0x2a8] sm:$0xf]
      %v517 = vld [vmem:[%s320 + $0x2ac] sm:$0xf]
      %v518 = vld [vmem:[%s320 + $0x2b0] sm:$0xf]
      %v519 = vld [vmem:[%s320 + $0x2b4] sm:$0xf]
      %v520 = vld [vmem:[%s320 + $0x2b8] sm:$0xf]
      %v521 = vld [vmem:[%s320 + $0x2bc] sm:$0xf]
      %v522 = vld [vmem:[%s320 + $0x2c0] sm:$0xf]
      %v523 = vld [vmem:[%s320 + $0x2c4] sm:$0xf]
      %v524 = vld [vmem:[%s320 + $0x2c8] sm:$0xf]
      %v525 = vld [vmem:[%s320 + $0x2cc] sm:$0xf]
      %v526 = vld [vmem:[%s320 + $0x2d0] sm:$0xf]
      %v527 = vld [vmem:[%s320 + $0x2d4] sm:$0xf]
      %v528 = vld [vmem:[%s320 + $0x2d8] sm:$0xf]
      %v529 = vld [vmem:[%s320 + $0x2dc] sm:$0xf]
      %v530 = vld [vmem:[%s320 + $0x2e0] sm:$0xf]
      %v531 = vld [vmem:[%s320 + $0x2e4] sm:$0xf]
      %v532 = vld [vmem:[%s320 + $0x2e8] sm:$0xf]
      %v533 = vld [vmem:[%s320 + $0x2ec] sm:$0xf]
      %v534 = vld [vmem:[%s320 + $0x2f0] sm:$0xf]
      %v535 = vld [vmem:[%s320 + $0x2f4] sm:$0xf]
      %v536 = vld [vmem:[%s320 + $0x2f8] sm:$0xf]
      %v537 = vld [vmem:[%s320 + $0x2fc] sm:$0xf]
      %v538 = vld [vmem:[%s4] sm:$0xf]
      %v539 = vld [vmem:[%s4 + $0x4] sm:$0xf]
      %v540 = vld [vmem:[%s4 + $0x8] sm:$0xf]
      %v541 = vld [vmem:[%s4 + $0xc] sm:$0xf]
      %v542 = vld [vmem:[%s4 + $0x10] sm:$0xf]
      %v543 = vld [vmem:[%s4 + $0x14] sm:$0xf]
      %v544 = vld [vmem:[%s4 + $0x18] sm:$0xf]
      %v545 = vld [vmem:[%s4 + $0x1c] sm:$0xf]
      %v546 = vld [vmem:[%s4 + $0x20] sm:$0xf]
      %v547 = vld [vmem:[%s4 + $0x24] sm:$0xf]
      %v548 = vld [vmem:[%s4 + $0x28] sm:$0xf]
      %v549 = vld [vmem:[%s4 + $0x2c] sm:$0xf]
      %v550 = vld [vmem:[%s4 + $0x30] sm:$0xf]
      %v551 = vld [vmem:[%s4 + $0x34] sm:$0xf]
      %v552 = vld [vmem:[%s4 + $0x38] sm:$0xf]
      %v553 = vld [vmem:[%s4 + $0x3c] sm:$0xf]
      %v554 = vld [vmem:[%s5] sm:$0x1]
      %v556 = vlaneseq
      %v557 = vshrl.u32 %v556, 7
      %v558 = vsub.s32 0, %v557
      %v559 = vrot.slane %v554, %v558
      %v753 = vunpack.c.l.b16 %v346
      %v754 = vunpack.c.l.b16 %v347
      %v755 = vunpack.c.l.b16 %v348
      %v756 = vunpack.c.l.b16 %v349
      %v757 = vunpack.c.l.b16 %v350
      %v758 = vunpack.c.l.b16 %v351
      %v759 = vunpack.c.l.b16 %v352
      %v760 = vunpack.c.l.b16 %v353
      %v761 = vunpack.c.l.b16 %v354
      %v762 = vunpack.c.l.b16 %v355
      %v763 = vunpack.c.l.b16 %v356
      %v764 = vunpack.c.l.b16 %v357
      %v765 = vunpack.c.l.b16 %v358
      %v766 = vunpack.c.l.b16 %v359
      %v767 = vunpack.c.l.b16 %v360
      %v768 = vunpack.c.l.b16 %v361
      %v769 = vunpack.c.l.b16 %v362
      %v770 = vunpack.c.l.b16 %v363
      %v771 = vunpack.c.l.b16 %v364
      %v772 = vunpack.c.l.b16 %v365
      %v773 = vunpack.c.l.b16 %v366
      %v774 = vunpack.c.l.b16 %v367
      %v775 = vunpack.c.l.b16 %v368
      %v776 = vunpack.c.l.b16 %v369
      %v777 = vunpack.c.l.b16 %v370
      %v778 = vunpack.c.l.b16 %v371
      %v779 = vunpack.c.l.b16 %v372
      %v780 = vunpack.c.l.b16 %v373
      %v781 = vunpack.c.l.b16 %v374
      %v782 = vunpack.c.l.b16 %v375
      %v783 = vunpack.c.l.b16 %v376
      %v784 = vunpack.c.l.b16 %v377
      %v785 = vunpack.c.l.b16 %v378
      %v786 = vunpack.c.l.b16 %v379
      %v787 = vunpack.c.l.b16 %v380
      %v788 = vunpack.c.l.b16 %v381
      %v789 = vunpack.c.l.b16 %v382
      %v790 = vunpack.c.l.b16 %v383
      %v791 = vunpack.c.l.b16 %v384
      %v792 = vunpack.c.l.b16 %v385
      %v793 = vunpack.c.l.b16 %v386
      %v794 = vunpack.c.l.b16 %v387
      %v795 = vunpack.c.l.b16 %v388
      %v796 = vunpack.c.l.b16 %v389
      %v797 = vunpack.c.l.b16 %v390
      %v798 = vunpack.c.l.b16 %v391
      %v799 = vunpack.c.l.b16 %v392
      %v800 = vunpack.c.l.b16 %v393
      %v801 = vunpack.c.l.b16 %v394
      %v802 = vunpack.c.l.b16 %v395
      %v803 = vunpack.c.l.b16 %v396
      %v804 = vunpack.c.l.b16 %v397
      %v805 = vunpack.c.l.b16 %v398
      %v806 = vunpack.c.l.b16 %v399
      %v807 = vunpack.c.l.b16 %v400
      %v808 = vunpack.c.l.b16 %v401
      %v809 = vunpack.c.l.b16 %v402
      %v810 = vunpack.c.l.b16 %v403
      %v811 = vunpack.c.l.b16 %v404
      %v812 = vunpack.c.l.b16 %v405
      %v813 = vunpack.c.l.b16 %v406
      %v814 = vunpack.c.l.b16 %v407
      %v815 = vunpack.c.l.b16 %v408
      %v816 = vunpack.c.l.b16 %v409
      %v817 = vunpack.c.l.b16 %v410
      %v818 = vunpack.c.l.b16 %v411
      %v819 = vunpack.c.l.b16 %v412
      %v820 = vunpack.c.l.b16 %v413
      %v821 = vunpack.c.l.b16 %v414
      %v822 = vunpack.c.l.b16 %v415
      %v823 = vunpack.c.l.b16 %v416
      %v824 = vunpack.c.l.b16 %v417
      %v825 = vunpack.c.l.b16 %v418
      %v826 = vunpack.c.l.b16 %v419
      %v827 = vunpack.c.l.b16 %v420
      %v828 = vunpack.c.l.b16 %v421
      %v829 = vunpack.c.l.b16 %v422
      %v830 = vunpack.c.l.b16 %v423
      %v831 = vunpack.c.l.b16 %v424
      %v832 = vunpack.c.l.b16 %v425
      %v833 = vunpack.c.l.b16 %v426
      %v834 = vunpack.c.l.b16 %v427
      %v835 = vunpack.c.l.b16 %v428
      %v836 = vunpack.c.l.b16 %v429
      %v837 = vunpack.c.l.b16 %v430
      %v838 = vunpack.c.l.b16 %v431
      %v839 = vunpack.c.l.b16 %v432
      %v840 = vunpack.c.l.b16 %v433
      %v841 = vunpack.c.l.b16 %v434
      %v842 = vunpack.c.l.b16 %v435
      %v843 = vunpack.c.l.b16 %v436
      %v844 = vunpack.c.l.b16 %v437
      %v845 = vunpack.c.l.b16 %v438
      %v846 = vunpack.c.l.b16 %v439
      %v847 = vunpack.c.l.b16 %v440
      %v848 = vunpack.c.l.b16 %v441
      %v849 = vunpack.c.l.b16 %v442
      %v850 = vunpack.c.l.b16 %v443
      %v851 = vunpack.c.l.b16 %v444
      %v852 = vunpack.c.l.b16 %v445
      %v853 = vunpack.c.l.b16 %v446
      %v854 = vunpack.c.l.b16 %v447
      %v855 = vunpack.c.l.b16 %v448
      %v856 = vunpack.c.l.b16 %v449
      %v857 = vunpack.c.l.b16 %v450
      %v858 = vunpack.c.l.b16 %v451
      %v859 = vunpack.c.l.b16 %v452
      %v860 = vunpack.c.l.b16 %v453
      %v861 = vunpack.c.l.b16 %v454
      %v862 = vunpack.c.l.b16 %v455
      %v863 = vunpack.c.l.b16 %v456
      %v864 = vunpack.c.l.b16 %v457
      %v865 = vunpack.c.l.b16 %v458
      %v866 = vunpack.c.l.b16 %v459
      %v867 = vunpack.c.l.b16 %v460
      %v868 = vunpack.c.l.b16 %v461
      %v869 = vunpack.c.l.b16 %v462
      %v870 = vunpack.c.l.b16 %v463
      %v871 = vunpack.c.l.b16 %v464
      %v872 = vunpack.c.l.b16 %v465
      %v873 = vunpack.c.l.b16 %v466
      %v874 = vunpack.c.l.b16 %v467
      %v875 = vunpack.c.l.b16 %v468
      %v876 = vunpack.c.l.b16 %v469
      %v877 = vunpack.c.l.b16 %v470
      %v878 = vunpack.c.l.b16 %v471
      %v879 = vunpack.c.l.b16 %v472
      %v880 = vunpack.c.l.b16 %v473
      %v881 = vunpack.c.l.b16 %v474
      %v882 = vunpack.c.l.b16 %v475
      %v883 = vunpack.c.l.b16 %v476
      %v884 = vunpack.c.l.b16 %v477
      %v885 = vunpack.c.l.b16 %v478
      %v886 = vunpack.c.l.b16 %v479
      %v887 = vunpack.c.l.b16 %v480
      %v888 = vunpack.c.l.b16 %v481
      %v889 = vunpack.c.l.b16 %v482
      %v890 = vunpack.c.l.b16 %v483
      %v891 = vunpack.c.l.b16 %v484
      %v892 = vunpack.c.l.b16 %v485
      %v893 = vunpack.c.l.b16 %v486
      %v894 = vunpack.c.l.b16 %v487
      %v895 = vunpack.c.l.b16 %v488
      %v896 = vunpack.c.l.b16 %v489
      %v897 = vunpack.c.l.b16 %v490
      %v898 = vunpack.c.l.b16 %v491
      %v899 = vunpack.c.l.b16 %v492
      %v900 = vunpack.c.l.b16 %v493
      %v901 = vunpack.c.l.b16 %v494
      %v902 = vunpack.c.l.b16 %v495
      %v903 = vunpack.c.l.b16 %v496
      %v904 = vunpack.c.l.b16 %v497
      %v905 = vunpack.c.l.b16 %v498
      %v906 = vunpack.c.l.b16 %v499
      %v907 = vunpack.c.l.b16 %v500
      %v908 = vunpack.c.l.b16 %v501
      %v909 = vunpack.c.l.b16 %v502
      %v910 = vunpack.c.l.b16 %v503
      %v911 = vunpack.c.l.b16 %v504
      %v912 = vunpack.c.l.b16 %v505
      %v913 = vunpack.c.l.b16 %v506
      %v914 = vunpack.c.l.b16 %v507
      %v915 = vunpack.c.l.b16 %v508
      %v916 = vunpack.c.l.b16 %v509
      %v917 = vunpack.c.l.b16 %v510
      %v918 = vunpack.c.l.b16 %v511
      %v919 = vunpack.c.l.b16 %v512
      %v920 = vunpack.c.l.b16 %v513
      %v921 = vunpack.c.l.b16 %v514
      %v922 = vunpack.c.l.b16 %v515
      %v923 = vunpack.c.l.b16 %v516
      %v924 = vunpack.c.l.b16 %v517
      %v925 = vunpack.c.l.b16 %v518
      %v926 = vunpack.c.l.b16 %v519
      %v927 = vunpack.c.l.b16 %v520
      %v928 = vunpack.c.l.b16 %v521
      %v929 = vunpack.c.l.b16 %v522
      %v930 = vunpack.c.l.b16 %v523
      %v931 = vunpack.c.l.b16 %v524
      %v932 = vunpack.c.l.b16 %v525
      %v933 = vunpack.c.l.b16 %v526
      %v934 = vunpack.c.l.b16 %v527
      %v935 = vunpack.c.l.b16 %v528
      %v936 = vunpack.c.l.b16 %v529
      %v937 = vunpack.c.l.b16 %v530
      %v938 = vunpack.c.l.b16 %v531
      %v939 = vunpack.c.l.b16 %v532
      %v940 = vunpack.c.l.b16 %v533
      %v941 = vunpack.c.l.b16 %v534
      %v942 = vunpack.c.l.b16 %v535
      %v943 = vunpack.c.l.b16 %v536
      %v944 = vunpack.c.l.b16 %v537
      %v945 = vpack.c.b16 %v754, %v753
      %v946 = vpack.c.b16 %v756, %v755
      %v947 = vpack.c.b16 %v758, %v757
      %v948 = vpack.c.b16 %v760, %v759
      %v949 = vpack.c.b16 %v762, %v761
      %v950 = vpack.c.b16 %v764, %v763
      %v951 = vpack.c.b16 %v766, %v765
      %v952 = vpack.c.b16 %v768, %v767
      %v953 = vpack.c.b16 %v770, %v769
      %v954 = vpack.c.b16 %v772, %v771
      %v955 = vpack.c.b16 %v774, %v773
      %v956 = vpack.c.b16 %v776, %v775
      %v957 = vpack.c.b16 %v778, %v777
      %v958 = vpack.c.b16 %v780, %v779
      %v959 = vpack.c.b16 %v782, %v781
      %v960 = vpack.c.b16 %v784, %v783
      %v961 = vpack.c.b16 %v786, %v785
      %v962 = vpack.c.b16 %v788, %v787
      %v963 = vpack.c.b16 %v790, %v789
      %v964 = vpack.c.b16 %v792, %v791
      %v965 = vpack.c.b16 %v794, %v793
      %v966 = vpack.c.b16 %v796, %v795
      %v967 = vpack.c.b16 %v798, %v797
      %v968 = vpack.c.b16 %v800, %v799
      %v969 = vpack.c.b16 %v802, %v801
      %v970 = vpack.c.b16 %v804, %v803
      %v971 = vpack.c.b16 %v806, %v805
      %v972 = vpack.c.b16 %v808, %v807
      %v973 = vpack.c.b16 %v810, %v809
      %v974 = vpack.c.b16 %v812, %v811
      %v975 = vpack.c.b16 %v814, %v813
      %v976 = vpack.c.b16 %v816, %v815
      %v977 = vpack.c.b16 %v818, %v817
      %v978 = vpack.c.b16 %v820, %v819
      %v979 = vpack.c.b16 %v822, %v821
      %v980 = vpack.c.b16 %v824, %v823
      %v981 = vpack.c.b16 %v826, %v825
      %v982 = vpack.c.b16 %v828, %v827
      %v983 = vpack.c.b16 %v830, %v829
      %v984 = vpack.c.b16 %v832, %v831
      %v985 = vpack.c.b16 %v834, %v833
      %v986 = vpack.c.b16 %v836, %v835
      %v987 = vpack.c.b16 %v838, %v837
      %v988 = vpack.c.b16 %v840, %v839
      %v989 = vpack.c.b16 %v842, %v841
      %v990 = vpack.c.b16 %v844, %v843
      %v991 = vpack.c.b16 %v846, %v845
      %v992 = vpack.c.b16 %v848, %v847
      %v993 = vpack.c.b16 %v850, %v849
      %v994 = vpack.c.b16 %v852, %v851
      %v995 = vpack.c.b16 %v854, %v853
      %v996 = vpack.c.b16 %v856, %v855
      %v997 = vpack.c.b16 %v858, %v857
      %v998 = vpack.c.b16 %v860, %v859
      %v999 = vpack.c.b16 %v862, %v861
      %v1000 = vpack.c.b16 %v864, %v863
      %v1001 = vpack.c.b16 %v866, %v865
      %v1002 = vpack.c.b16 %v868, %v867
      %v1003 = vpack.c.b16 %v870, %v869
      %v1004 = vpack.c.b16 %v872, %v871
      %v1005 = vpack.c.b16 %v874, %v873
      %v1006 = vpack.c.b16 %v876, %v875
      %v1007 = vpack.c.b16 %v878, %v877
      %v1008 = vpack.c.b16 %v880, %v879
      %v1009 = vpack.c.b16 %v882, %v881
      %v1010 = vpack.c.b16 %v884, %v883
      %v1011 = vpack.c.b16 %v886, %v885
      %v1012 = vpack.c.b16 %v888, %v887
      %v1013 = vpack.c.b16 %v890, %v889
      %v1014 = vpack.c.b16 %v892, %v891
      %v1015 = vpack.c.b16 %v894, %v893
      %v1016 = vpack.c.b16 %v896, %v895
      %v1017 = vpack.c.b16 %v898, %v897
      %v1018 = vpack.c.b16 %v900, %v899
      %v1019 = vpack.c.b16 %v902, %v901
      %v1020 = vpack.c.b16 %v904, %v903
      %v1021 = vpack.c.b16 %v906, %v905
      %v1022 = vpack.c.b16 %v908, %v907
      %v1023 = vpack.c.b16 %v910, %v909
      %v1024 = vpack.c.b16 %v912, %v911
      %v1025 = vpack.c.b16 %v914, %v913
      %v1026 = vpack.c.b16 %v916, %v915
      %v1027 = vpack.c.b16 %v918, %v917
      %v1028 = vpack.c.b16 %v920, %v919
      %v1029 = vpack.c.b16 %v922, %v921
      %v1030 = vpack.c.b16 %v924, %v923
      %v1031 = vpack.c.b16 %v926, %v925
      %v1032 = vpack.c.b16 %v928, %v927
      %v1033 = vpack.c.b16 %v930, %v929
      %v1034 = vpack.c.b16 %v932, %v931
      %v1035 = vpack.c.b16 %v934, %v933
      %v1036 = vpack.c.b16 %v936, %v935
      %v1037 = vpack.c.b16 %v938, %v937
      %v1038 = vpack.c.b16 %v940, %v939
      %v1039 = vpack.c.b16 %v942, %v941
      %v1040 = vpack.c.b16 %v944, %v943
      %v1153 = vunpack.c.l.b16 %v538
      %v1154 = vunpack.c.l.b16 %v539
      %v1155 = vunpack.c.l.b16 %v540
      %v1156 = vunpack.c.l.b16 %v541
      %v1157 = vunpack.c.l.b16 %v542
      %v1158 = vunpack.c.l.b16 %v543
      %v1159 = vunpack.c.l.b16 %v544
      %v1160 = vunpack.c.l.b16 %v545
      %v1161 = vunpack.c.l.b16 %v546
      %v1162 = vunpack.c.l.b16 %v547
      %v1163 = vunpack.c.l.b16 %v548
      %v1164 = vunpack.c.l.b16 %v549
      %v1165 = vunpack.c.l.b16 %v550
      %v1166 = vunpack.c.l.b16 %v551
      %v1167 = vunpack.c.l.b16 %v552
      %v1168 = vunpack.c.l.b16 %v553
      %v1169 = vpack.c.b16 %v1154, %v1153
      %v1170 = vpack.c.b16 %v1156, %v1155
      %v1171 = vpack.c.b16 %v1158, %v1157
      %v1172 = vpack.c.b16 %v1160, %v1159
      %v1173 = vpack.c.b16 %v1162, %v1161
      %v1174 = vpack.c.b16 %v1164, %v1163
      %v1175 = vpack.c.b16 %v1166, %v1165
      %v1176 = vpack.c.b16 %v1168, %v1167
      %1185 = vmatprep.subr.bf16.mxu0 0
      %1186 = vmatpush1.bf16.msra.mxu0 %v1169
      %1187 = vmatprep.subr.bf16.mxu0 0
      %1188 = vmatpush1.bf16.msra.mxu0 %v1170
      %1189 = vmatprep.subr.bf16.mxu0 0
      %1190 = vmatpush1.bf16.msra.mxu0 %v1171
      %1191 = vmatprep.subr.bf16.mxu0 0
      %1192 = vmatpush1.bf16.msra.mxu0 %v1172
      %1193 = vmatprep.subr.bf16.mxu0 0
      %1194 = vmatpush1.bf16.msra.mxu0 %v1173
      %1195 = vmatprep.subr.bf16.mxu0 0
      %1196 = vmatpush1.bf16.msra.mxu0 %v1174
      %1197 = vmatprep.subr.bf16.mxu0 0
      %1198 = vmatpush1.bf16.msra.mxu0 %v1175
      %1199 = vmatprep.subr.bf16.mxu0 0
      %1200 = vmatpush1.bf16.msra.mxu0 %v1176
      %1201 = vmatprep.subr.bf16.mxu0 0
      %1202 = vmatpush1.bf16.msra.mxu0 0
      %1203 = vmatprep.subr.bf16.mxu0 0
      %1204 = vmatpush1.bf16.msra.mxu0 0
      %1205 = vmatprep.subr.bf16.mxu0 0
      %1206 = vmatpush1.bf16.msra.mxu0 0
      %1207 = vmatprep.subr.bf16.mxu0 0
      %1208 = vmatpush1.bf16.msra.mxu0 0
      %1209 = vmatprep.subr.bf16.mxu0 0
      %1210 = vmatpush1.bf16.msra.mxu0 0
      %1211 = vmatprep.subr.bf16.mxu0 0
      %1212 = vmatpush1.bf16.msra.mxu0 0
      %1213 = vmatprep.subr.bf16.mxu0 0
      %1214 = vmatpush1.bf16.msra.mxu0 0
      %1215 = vmatprep.subr.bf16.mxu0 0
      %1216 = vmatpush1.bf16.msra.mxu0 0
      %1217 = vmatprep.mubr.bf16.mxu0 0
      %1218 = vmatmul.mubr.bf16.gmra.mrb[0].mxu0 %v945
      %v1219 = vpop.f32.mrb[0].mxu0
      %v1220 = vadd.f32 %v559, %v1219
      %v1221 = vpop.f32.mrb[0].mxu0
      %v1222 = vpop.f32.mrb[0].mxu0
      %v1223 = vadd.f32 %v559, %v1222
      %v1224 = vpop.f32.mrb[0].mxu0
      %1225 = vmatprep.mubr.bf16.mxu0 0
      %1226 = vmatmul.mubr.bf16.gmra.mrb[0].mxu0 %v946
      %v1227 = vpop.f32.mrb[0].mxu0
      %v1228 = vadd.f32 %v559, %v1227
      %v1229 = vpop.f32.mrb[0].mxu0
      %v1230 = vpop.f32.mrb[0].mxu0
      %v1231 = vadd.f32 %v559, %v1230
      %v1232 = vpop.f32.mrb[0].mxu0
      %1233 = vmatprep.mubr.bf16.mxu0 0
      %1234 = vmatmul.mubr.bf16.gmra.mrb[0].mxu0 %v947
      %v1235 = vpop.f32.mrb[0].mxu0
      %v1236 = vadd.f32 %v559, %v1235
      %v1237 = vpop.f32.mrb[0].mxu0
      %v1238 = vpop.f32.mrb[0].mxu0
      %v1239 = vadd.f32 %v559, %v1238
      %v1240 = vpop.f32.mrb[0].mxu0
      %1241 = vmatprep.mubr.bf16.mxu0 0
      %1242 = vmatmul.mubr.bf16.gmra.mrb[0].mxu0 %v948
      %v1243 = vpop.f32.mrb[0].mxu0
      %v1244 = vadd.f32 %v559, %v1243
      %v1245 = vpop.f32.mrb[0].mxu0
      %v1246 = vpop.f32.mrb[0].mxu0
      %v1247 = vadd.f32 %v559, %v1246
      %v1248 = vpop.f32.mrb[0].mxu0
      %1249 = vmatprep.mubr.bf16.mxu0 0
      %1250 = vmatmul.mubr.bf16.gmra.mrb[0].mxu0 %v949
      %v1251 = vpop.f32.mrb[0].mxu0
      %v1252 = vadd.f32 %v559, %v1251
      %v1253 = vpop.f32.mrb[0].mxu0
      %v1254 = vpop.f32.mrb[0].mxu0
      %v1255 = vadd.f32 %v559, %v1254
      %v1256 = vpop.f32.mrb[0].mxu0
      %1257 = vmatprep.mubr.bf16.mxu0 0
      %1258 = vmatmul.mubr.bf16.gmra.mrb[0].mxu0 %v950
      %v1259 = vpop.f32.mrb[0].mxu0
      %v1260 = vadd.f32 %v559, %v1259
      %v1261 = vpop.f32.mrb[0].mxu0
      %v1262 = vpop.f32.mrb[0].mxu0
      %v1263 = vadd.f32 %v559, %v1262
      %v1264 = vpop.f32.mrb[0].mxu0
      %1265 = vmatprep.mubr.bf16.mxu0 0
      %1266 = vmatmul.mubr.bf16.gmra.mrb[0].mxu0 %v951
      %v1267 = vpop.f32.mrb[0].mxu0
      %v1268 = vadd.f32 %v559, %v1267
      %v1269 = vpop.f32.mrb[0].mxu0
      %v1270 = vpop.f32.mrb[0].mxu0
      %v1271 = vadd.f32 %v559, %v1270
      %v1272 = vpop.f32.mrb[0].mxu0
      %1273 = vmatprep.mubr.bf16.mxu0 0
      %1274 = vmatmul.mubr.bf16.gmra.mrb[0].mxu0 %v952
      %v1275 = vpop.f32.mrb[0].mxu0
      %v1276 = vadd.f32 %v559, %v1275
      %v1277 = vpop.f32.mrb[0].mxu0
      %v1278 = vpop.f32.mrb[0].mxu0
      %v1279 = vadd.f32 %v559, %v1278
      %v1280 = vpop.f32.mrb[0].mxu0
      %1281 = vmatprep.mubr.bf16.mxu0 0
      %1282 = vmatmul.mubr.bf16.gmra.mrb[0].mxu0 %v953
      %v1283 = vpop.f32.mrb[0].mxu0
      %v1284 = vadd.f32 %v559, %v1283
      %v1285 = vpop.f32.mrb[0].mxu0
      %v1286 = vpop.f32.mrb[0].mxu0
      %v1287 = vadd.f32 %v559, %v1286
      %v1288 = vpop.f32.mrb[0].mxu0
      %1289 = vmatprep.mubr.bf16.mxu0 0
      %1290 = vmatmul.mubr.bf16.gmra.mrb[0].mxu0 %v954
      %v1291 = vpop.f32.mrb[0].mxu0
      %v1292 = vadd.f32 %v559, %v1291
      %v1293 = vpop.f32.mrb[0].mxu0
      %v1294 = vpop.f32.mrb[0].mxu0
      %v1295 = vadd.f32 %v559, %v1294
      %v1296 = vpop.f32.mrb[0].mxu0
      %1297 = vmatprep.mubr.bf16.mxu0 0
      %1298 = vmatmul.mubr.bf16.gmra.mrb[0].mxu0 %v955
      %v1299 = vpop.f32.mrb[0].mxu0
      %v1300 = vadd.f32 %v559, %v1299
      %v1301 = vpop.f32.mrb[0].mxu0
      %v1302 = vpop.f32.mrb[0].mxu0
      %v1303 = vadd.f32 %v559, %v1302
      %v1304 = vpop.f32.mrb[0].mxu0
      %1305 = vmatprep.mubr.bf16.mxu0 0
      %1306 = vmatmul.mubr.bf16.gmra.mrb[0].mxu0 %v956
      %v1307 = vpop.f32.mrb[0].mxu0
      %v1308 = vadd.f32 %v559, %v1307
      %v1309 = vpop.f32.mrb[0].mxu0
      %v1310 = vpop.f32.mrb[0].mxu0
      %v1311 = vadd.f32 %v559, %v1310
      %v1312 = vpop.f32.mrb[0].mxu0
      %1313 = vmatprep.mubr.bf16.mxu0 0
      %1314 = vmatmul.mubr.bf16.gmra.mrb[0].mxu0 %v957
      %v1315 = vpop.f32.mrb[0].mxu0
      %v1316 = vadd.f32 %v559, %v1315
      %v1317 = vpop.f32.mrb[0].mxu0
      %v1318 = vpop.f32.mrb[0].mxu0
      %v1319 = vadd.f32 %v559, %v1318
      %v1320 = vpop.f32.mrb[0].mxu0
      %1321 = vmatprep.mubr.bf16.mxu0 0
      %1322 = vmatmul.mubr.bf16.gmra.mrb[0].mxu0 %v958
      %v1323 = vpop.f32.mrb[0].mxu0
      %v1324 = vadd.f32 %v559, %v1323
      %v1325 = vpop.f32.mrb[0].mxu0
      %v1326 = vpop.f32.mrb[0].mxu0
      %v1327 = vadd.f32 %v559, %v1326
      %v1328 = vpop.f32.mrb[0].mxu0
      %1329 = vmatprep.mubr.bf16.mxu0 0
      %1330 = vmatmul.mubr.bf16.gmra.mrb[0].mxu0 %v959
      %v1331 = vpop.f32.mrb[0].mxu0
      %v1332 = vadd.f32 %v559, %v1331
      %v1333 = vpop.f32.mrb[0].mxu0
      %v1334 = vpop.f32.mrb[0].mxu0
      %v1335 = vadd.f32 %v559, %v1334
      %v1336 = vpop.f32.mrb[0].mxu0
      %1337 = vmatprep.mubr.bf16.mxu0 0
      %1338 = vmatmul.mubr.bf16.gmra.mrb[0].mxu0 %v960
      %v1339 = vpop.f32.mrb[0].mxu0
      %v1340 = vadd.f32 %v559, %v1339
      %v1341 = vpop.f32.mrb[0].mxu0
      %v1342 = vpop.f32.mrb[0].mxu0
      %v1343 = vadd.f32 %v559, %v1342
      %v1344 = vpop.f32.mrb[0].mxu0
      %1345 = vmatprep.mubr.bf16.mxu0 0
      %1346 = vmatmul.mubr.bf16.gmra.mrb[0].mxu0 %v961
      %v1347 = vpop.f32.mrb[0].mxu0
      %v1348 = vadd.f32 %v559, %v1347
      %v1349 = vpop.f32.mrb[0].mxu0
      %v1350 = vpop.f32.mrb[0].mxu0
      %v1351 = vadd.f32 %v559, %v1350
      %v1352 = vpop.f32.mrb[0].mxu0
      %1353 = vmatprep.mubr.bf16.mxu0 0
      %1354 = vmatmul.mubr.bf16.gmra.mrb[0].mxu0 %v962
      %v1355 = vpop.f32.mrb[0].mxu0
      %v1356 = vadd.f32 %v559, %v1355
      %v1357 = vpop.f32.mrb[0].mxu0
      %v1358 = vpop.f32.mrb[0].mxu0
      %v1359 = vadd.f32 %v559, %v1358
      %v1360 = vpop.f32.mrb[0].mxu0
      %1361 = vmatprep.mubr.bf16.mxu0 0
      %1362 = vmatmul.mubr.bf16.gmra.mrb[0].mxu0 %v963
      %v1363 = vpop.f32.mrb[0].mxu0
      %v1364 = vadd.f32 %v559, %v1363
      %v1365 = vpop.f32.mrb[0].mxu0
      %v1366 = vpop.f32.mrb[0].mxu0
      %v1367 = vadd.f32 %v559, %v1366
      %v1368 = vpop.f32.mrb[0].mxu0
      %1369 = vmatprep.mubr.bf16.mxu0 0
      %1370 = vmatmul.mubr.bf16.gmra.mrb[0].mxu0 %v964
      %v1371 = vpop.f32.mrb[0].mxu0
      %v1372 = vadd.f32 %v559, %v1371
      %v1373 = vpop.f32.mrb[0].mxu0
      %v1374 = vpop.f32.mrb[0].mxu0
      %v1375 = vadd.f32 %v559, %v1374
      %v1376 = vpop.f32.mrb[0].mxu0
      %1377 = vmatprep.mubr.bf16.mxu0 0
      %1378 = vmatmul.mubr.bf16.gmra.mrb[0].mxu0 %v965
      %v1379 = vpop.f32.mrb[0].mxu0
      %v1380 = vadd.f32 %v559, %v1379
      %v1381 = vpop.f32.mrb[0].mxu0
      %v1382 = vpop.f32.mrb[0].mxu0
      %v1383 = vadd.f32 %v559, %v1382
      %v1384 = vpop.f32.mrb[0].mxu0
      %1385 = vmatprep.mubr.bf16.mxu0 0
      %1386 = vmatmul.mubr.bf16.gmra.mrb[0].mxu0 %v966
      %v1387 = vpop.f32.mrb[0].mxu0
      %v1388 = vadd.f32 %v559, %v1387
      %v1389 = vpop.f32.mrb[0].mxu0
      %v1390 = vpop.f32.mrb[0].mxu0
      %v1391 = vadd.f32 %v559, %v1390
      %v1392 = vpop.f32.mrb[0].mxu0
      %1393 = vmatprep.mubr.bf16.mxu0 0
      %1394 = vmatmul.mubr.bf16.gmra.mrb[0].mxu0 %v967
      %v1395 = vpop.f32.mrb[0].mxu0
      %v1396 = vadd.f32 %v559, %v1395
      %v1397 = vpop.f32.mrb[0].mxu0
      %v1398 = vpop.f32.mrb[0].mxu0
      %v1399 = vadd.f32 %v559, %v1398
      %v1400 = vpop.f32.mrb[0].mxu0
      %1401 = vmatprep.mubr.bf16.mxu0 0
      %1402 = vmatmul.mubr.bf16.gmra.mrb[0].mxu0 %v968
      %v1403 = vpop.f32.mrb[0].mxu0
      %v1404 = vadd.f32 %v559, %v1403
      %v1405 = vpop.f32.mrb[0].mxu0
      %v1406 = vpop.f32.mrb[0].mxu0
      %v1407 = vadd.f32 %v559, %v1406
      %v1408 = vpop.f32.mrb[0].mxu0
      %1409 = vmatprep.mubr.bf16.mxu0 0
      %1410 = vmatmul.mubr.bf16.gmra.mrb[0].mxu0 %v969
      %v1411 = vpop.f32.mrb[0].mxu0
      %v1412 = vadd.f32 %v559, %v1411
      %v1413 = vpop.f32.mrb[0].mxu0
      %v1414 = vpop.f32.mrb[0].mxu0
      %v1415 = vadd.f32 %v559, %v1414
      %v1416 = vpop.f32.mrb[0].mxu0
      %1417 = vmatprep.mubr.bf16.mxu0 0
      %1418 = vmatmul.mubr.bf16.gmra.mrb[0].mxu0 %v970
      %v1419 = vpop.f32.mrb[0].mxu0
      %v1420 = vadd.f32 %v559, %v1419
      %v1421 = vpop.f32.mrb[0].mxu0
      %v1422 = vpop.f32.mrb[0].mxu0
      %v1423 = vadd.f32 %v559, %v1422
      %v1424 = vpop.f32.mrb[0].mxu0
      %1425 = vmatprep.mubr.bf16.mxu0 0
      %1426 = vmatmul.mubr.bf16.gmra.mrb[0].mxu0 %v971
      %v1427 = vpop.f32.mrb[0].mxu0
      %v1428 = vadd.f32 %v559, %v1427
      %v1429 = vpop.f32.mrb[0].mxu0
      %v1430 = vpop.f32.mrb[0].mxu0
      %v1431 = vadd.f32 %v559, %v1430
      %v1432 = vpop.f32.mrb[0].mxu0
      %1433 = vmatprep.mubr.bf16.mxu0 0
      %1434 = vmatmul.mubr.bf16.gmra.mrb[0].mxu0 %v972
      %v1435 = vpop.f32.mrb[0].mxu0
      %v1436 = vadd.f32 %v559, %v1435
      %v1437 = vpop.f32.mrb[0].mxu0
      %v1438 = vpop.f32.mrb[0].mxu0
      %v1439 = vadd.f32 %v559, %v1438
      %v1440 = vpop.f32.mrb[0].mxu0
      %1441 = vmatprep.mubr.bf16.mxu0 0
      %1442 = vmatmul.mubr.bf16.gmra.mrb[0].mxu0 %v973
      %v1443 = vpop.f32.mrb[0].mxu0
      %v1444 = vadd.f32 %v559, %v1443
      %v1445 = vpop.f32.mrb[0].mxu0
      %v1446 = vpop.f32.mrb[0].mxu0
      %v1447 = vadd.f32 %v559, %v1446
      %v1448 = vpop.f32.mrb[0].mxu0
      %1449 = vmatprep.mubr.bf16.mxu0 0
      %1450 = vmatmul.mubr.bf16.gmra.mrb[0].mxu0 %v974
      %v1451 = vpop.f32.mrb[0].mxu0
      %v1452 = vadd.f32 %v559, %v1451
      %v1453 = vpop.f32.mrb[0].mxu0
      %v1454 = vpop.f32.mrb[0].mxu0
      %v1455 = vadd.f32 %v559, %v1454
      %v1456 = vpop.f32.mrb[0].mxu0
      %1457 = vmatprep.mubr.bf16.mxu0 0
      %1458 = vmatmul.mubr.bf16.gmra.mrb[0].mxu0 %v975
      %v1459 = vpop.f32.mrb[0].mxu0
      %v1460 = vadd.f32 %v559, %v1459
      %v1461 = vpop.f32.mrb[0].mxu0
      %v1462 = vpop.f32.mrb[0].mxu0
      %v1463 = vadd.f32 %v559, %v1462
      %v1464 = vpop.f32.mrb[0].mxu0
      %1465 = vmatprep.mubr.bf16.mxu0 0
      %1466 = vmatmul.mubr.bf16.gmra.mrb[0].mxu0 %v976
      %v1467 = vpop.f32.mrb[0].mxu0
      %v1468 = vadd.f32 %v559, %v1467
      %v1469 = vpop.f32.mrb[0].mxu0
      %v1470 = vpop.f32.mrb[0].mxu0
      %v1471 = vadd.f32 %v559, %v1470
      %v1472 = vpop.f32.mrb[0].mxu0
      %1473 = vmatprep.mubr.bf16.mxu0 0
      %1474 = vmatmul.mubr.bf16.gmra.mrb[0].mxu0 %v977
      %v1475 = vpop.f32.mrb[0].mxu0
      %v1476 = vadd.f32 %v559, %v1475
      %v1477 = vpop.f32.mrb[0].mxu0
      %v1478 = vpop.f32.mrb[0].mxu0
      %v1479 = vadd.f32 %v559, %v1478
      %v1480 = vpop.f32.mrb[0].mxu0
      %1481 = vmatprep.mubr.bf16.mxu0 0
      %1482 = vmatmul.mubr.bf16.gmra.mrb[0].mxu0 %v978
      %v1483 = vpop.f32.mrb[0].mxu0
      %v1484 = vadd.f32 %v559, %v1483
      %v1485 = vpop.f32.mrb[0].mxu0
      %v1486 = vpop.f32.mrb[0].mxu0
      %v1487 = vadd.f32 %v559, %v1486
      %v1488 = vpop.f32.mrb[0].mxu0
      %1489 = vmatprep.mubr.bf16.mxu0 0
      %1490 = vmatmul.mubr.bf16.gmra.mrb[0].mxu0 %v979
      %v1491 = vpop.f32.mrb[0].mxu0
      %v1492 = vadd.f32 %v559, %v1491
      %v1493 = vpop.f32.mrb[0].mxu0
      %v1494 = vpop.f32.mrb[0].mxu0
      %v1495 = vadd.f32 %v559, %v1494
      %v1496 = vpop.f32.mrb[0].mxu0
      %1497 = vmatprep.mubr.bf16.mxu0 0
      %1498 = vmatmul.mubr.bf16.gmra.mrb[0].mxu0 %v980
      %v1499 = vpop.f32.mrb[0].mxu0
      %v1500 = vadd.f32 %v559, %v1499
      %v1501 = vpop.f32.mrb[0].mxu0
      %v1502 = vpop.f32.mrb[0].mxu0
      %v1503 = vadd.f32 %v559, %v1502
      %v1504 = vpop.f32.mrb[0].mxu0
      %1505 = vmatprep.mubr.bf16.mxu0 0
      %1506 = vmatmul.mubr.bf16.gmra.mrb[0].mxu0 %v981
      %v1507 = vpop.f32.mrb[0].mxu0
      %v1508 = vadd.f32 %v559, %v1507
      %v1509 = vpop.f32.mrb[0].mxu0
      %v1510 = vpop.f32.mrb[0].mxu0
      %v1511 = vadd.f32 %v559, %v1510
      %v1512 = vpop.f32.mrb[0].mxu0
      %1513 = vmatprep.mubr.bf16.mxu0 0
      %1514 = vmatmul.mubr.bf16.gmra.mrb[0].mxu0 %v982
      %v1515 = vpop.f32.mrb[0].mxu0
      %v1516 = vadd.f32 %v559, %v1515
      %v1517 = vpop.f32.mrb[0].mxu0
      %v1518 = vpop.f32.mrb[0].mxu0
      %v1519 = vadd.f32 %v559, %v1518
      %v1520 = vpop.f32.mrb[0].mxu0
      %1521 = vmatprep.mubr.bf16.mxu0 0
      %1522 = vmatmul.mubr.bf16.gmra.mrb[0].mxu0 %v983
      %v1523 = vpop.f32.mrb[0].mxu0
      %v1524 = vadd.f32 %v559, %v1523
      %v1525 = vpop.f32.mrb[0].mxu0
      %v1526 = vpop.f32.mrb[0].mxu0
      %v1527 = vadd.f32 %v559, %v1526
      %v1528 = vpop.f32.mrb[0].mxu0
      %1529 = vmatprep.mubr.bf16.mxu0 0
      %1530 = vmatmul.mubr.bf16.gmra.mrb[0].mxu0 %v984
      %v1531 = vpop.f32.mrb[0].mxu0
      %v1532 = vadd.f32 %v559, %v1531
      %v1533 = vpop.f32.mrb[0].mxu0
      %v1534 = vpop.f32.mrb[0].mxu0
      %v1535 = vadd.f32 %v559, %v1534
      %v1536 = vpop.f32.mrb[0].mxu0
      %1537 = vmatprep.mubr.bf16.mxu0 0
      %1538 = vmatmul.mubr.bf16.gmra.mrb[0].mxu0 %v985
      %v1539 = vpop.f32.mrb[0].mxu0
      %v1540 = vadd.f32 %v559, %v1539
      %v1541 = vpop.f32.mrb[0].mxu0
      %v1542 = vpop.f32.mrb[0].mxu0
      %v1543 = vadd.f32 %v559, %v1542
      %v1544 = vpop.f32.mrb[0].mxu0
      %1545 = vmatprep.mubr.bf16.mxu0 0
      %1546 = vmatmul.mubr.bf16.gmra.mrb[0].mxu0 %v986
      %v1547 = vpop.f32.mrb[0].mxu0
      %v1548 = vadd.f32 %v559, %v1547
      %v1549 = vpop.f32.mrb[0].mxu0
      %v1550 = vpop.f32.mrb[0].mxu0
      %v1551 = vadd.f32 %v559, %v1550
      %v1552 = vpop.f32.mrb[0].mxu0
      %1553 = vmatprep.mubr.bf16.mxu0 0
      %1554 = vmatmul.mubr.bf16.gmra.mrb[0].mxu0 %v987
      %v1555 = vpop.f32.mrb[0].mxu0
      %v1556 = vadd.f32 %v559, %v1555
      %v1557 = vpop.f32.mrb[0].mxu0
      %v1558 = vpop.f32.mrb[0].mxu0
      %v1559 = vadd.f32 %v559, %v1558
      %v1560 = vpop.f32.mrb[0].mxu0
      %1561 = vmatprep.mubr.bf16.mxu0 0
      %1562 = vmatmul.mubr.bf16.gmra.mrb[0].mxu0 %v988
      %v1563 = vpop.f32.mrb[0].mxu0
      %v1564 = vadd.f32 %v559, %v1563
      %v1565 = vpop.f32.mrb[0].mxu0
      %v1566 = vpop.f32.mrb[0].mxu0
      %v1567 = vadd.f32 %v559, %v1566
      %v1568 = vpop.f32.mrb[0].mxu0
      %1569 = vmatprep.mubr.bf16.mxu0 0
      %1570 = vmatmul.mubr.bf16.gmra.mrb[0].mxu0 %v989
      %v1571 = vpop.f32.mrb[0].mxu0
      %v1572 = vadd.f32 %v559, %v1571
      %v1573 = vpop.f32.mrb[0].mxu0
      %v1574 = vpop.f32.mrb[0].mxu0
      %v1575 = vadd.f32 %v559, %v1574
      %v1576 = vpop.f32.mrb[0].mxu0
      %1577 = vmatprep.mubr.bf16.mxu0 0
      %1578 = vmatmul.mubr.bf16.gmra.mrb[0].mxu0 %v990
      %v1579 = vpop.f32.mrb[0].mxu0
      %v1580 = vadd.f32 %v559, %v1579
      %v1581 = vpop.f32.mrb[0].mxu0
      %v1582 = vpop.f32.mrb[0].mxu0
      %v1583 = vadd.f32 %v559, %v1582
      %v1584 = vpop.f32.mrb[0].mxu0
      %1585 = vmatprep.mubr.bf16.mxu0 0
      %1586 = vmatmul.mubr.bf16.gmra.mrb[0].mxu0 %v991
      %v1587 = vpop.f32.mrb[0].mxu0
      %v1588 = vadd.f32 %v559, %v1587
      %v1589 = vpop.f32.mrb[0].mxu0
      %v1590 = vpop.f32.mrb[0].mxu0
      %v1591 = vadd.f32 %v559, %v1590
      %v1592 = vpop.f32.mrb[0].mxu0
      %1593 = vmatprep.mubr.bf16.mxu0 0
      %1594 = vmatmul.mubr.bf16.gmra.mrb[0].mxu0 %v992
      %v1595 = vpop.f32.mrb[0].mxu0
      %v1596 = vadd.f32 %v559, %v1595
      %v1597 = vpop.f32.mrb[0].mxu0
      %v1598 = vpop.f32.mrb[0].mxu0
      %v1599 = vadd.f32 %v559, %v1598
      %v1600 = vpop.f32.mrb[0].mxu0
      %1601 = vmatprep.mubr.bf16.mxu0 0
      %1602 = vmatmul.mubr.bf16.gmra.mrb[0].mxu0 %v993
      %v1603 = vpop.f32.mrb[0].mxu0
      %v1604 = vadd.f32 %v559, %v1603
      %v1605 = vpop.f32.mrb[0].mxu0
      %v1606 = vpop.f32.mrb[0].mxu0
      %v1607 = vadd.f32 %v559, %v1606
      %v1608 = vpop.f32.mrb[0].mxu0
      %1609 = vmatprep.mubr.bf16.mxu0 0
      %1610 = vmatmul.mubr.bf16.gmra.mrb[0].mxu0 %v994
      %v1611 = vpop.f32.mrb[0].mxu0
      %v1612 = vadd.f32 %v559, %v1611
      %v1613 = vpop.f32.mrb[0].mxu0
      %v1614 = vpop.f32.mrb[0].mxu0
      %v1615 = vadd.f32 %v559, %v1614
      %v1616 = vpop.f32.mrb[0].mxu0
      %1617 = vmatprep.mubr.bf16.mxu0 0
      %1618 = vmatmul.mubr.bf16.gmra.mrb[0].mxu0 %v995
      %v1619 = vpop.f32.mrb[0].mxu0
      %v1620 = vadd.f32 %v559, %v1619
      %v1621 = vpop.f32.mrb[0].mxu0
      %v1622 = vpop.f32.mrb[0].mxu0
      %v1623 = vadd.f32 %v559, %v1622
      %v1624 = vpop.f32.mrb[0].mxu0
      %1625 = vmatprep.mubr.bf16.mxu0 0
      %1626 = vmatmul.mubr.bf16.gmra.mrb[0].mxu0 %v996
      %v1627 = vpop.f32.mrb[0].mxu0
      %v1628 = vadd.f32 %v559, %v1627
      %v1629 = vpop.f32.mrb[0].mxu0
      %v1630 = vpop.f32.mrb[0].mxu0
      %v1631 = vadd.f32 %v559, %v1630
      %v1632 = vpop.f32.mrb[0].mxu0
      %1633 = vmatprep.mubr.bf16.mxu0 0
      %1634 = vmatmul.mubr.bf16.gmra.mrb[0].mxu0 %v997
      %v1635 = vpop.f32.mrb[0].mxu0
      %v1636 = vadd.f32 %v559, %v1635
      %v1637 = vpop.f32.mrb[0].mxu0
      %v1638 = vpop.f32.mrb[0].mxu0
      %v1639 = vadd.f32 %v559, %v1638
      %v1640 = vpop.f32.mrb[0].mxu0
      %1641 = vmatprep.mubr.bf16.mxu0 0
      %1642 = vmatmul.mubr.bf16.gmra.mrb[0].mxu0 %v998
      %v1643 = vpop.f32.mrb[0].mxu0
      %v1644 = vadd.f32 %v559, %v1643
      %v1645 = vpop.f32.mrb[0].mxu0
      %v1646 = vpop.f32.mrb[0].mxu0
      %v1647 = vadd.f32 %v559, %v1646
      %v1648 = vpop.f32.mrb[0].mxu0
      %1649 = vmatprep.mubr.bf16.mxu0 0
      %1650 = vmatmul.mubr.bf16.gmra.mrb[0].mxu0 %v999
      %v1651 = vpop.f32.mrb[0].mxu0
      %v1652 = vadd.f32 %v559, %v1651
      %v1653 = vpop.f32.mrb[0].mxu0
      %v1654 = vpop.f32.mrb[0].mxu0
      %v1655 = vadd.f32 %v559, %v1654
      %v1656 = vpop.f32.mrb[0].mxu0
      %1657 = vmatprep.mubr.bf16.mxu0 0
      %1658 = vmatmul.mubr.bf16.gmra.mrb[0].mxu0 %v1000
      %v1659 = vpop.f32.mrb[0].mxu0
      %v1660 = vadd.f32 %v559, %v1659
      %v1661 = vpop.f32.mrb[0].mxu0
      %v1662 = vpop.f32.mrb[0].mxu0
      %v1663 = vadd.f32 %v559, %v1662
      %v1664 = vpop.f32.mrb[0].mxu0
      %1665 = vmatprep.mubr.bf16.mxu0 0
      %1666 = vmatmul.mubr.bf16.gmra.mrb[0].mxu0 %v1001
      %v1667 = vpop.f32.mrb[0].mxu0
      %v1668 = vadd.f32 %v559, %v1667
      %v1669 = vpop.f32.mrb[0].mxu0
      %v1670 = vpop.f32.mrb[0].mxu0
      %v1671 = vadd.f32 %v559, %v1670
      %v1672 = vpop.f32.mrb[0].mxu0
      %1673 = vmatprep.mubr.bf16.mxu0 0
      %1674 = vmatmul.mubr.bf16.gmra.mrb[0].mxu0 %v1002
      %v1675 = vpop.f32.mrb[0].mxu0
      %v1676 = vadd.f32 %v559, %v1675
      %v1677 = vpop.f32.mrb[0].mxu0
      %v1678 = vpop.f32.mrb[0].mxu0
      %v1679 = vadd.f32 %v559, %v1678
      %v1680 = vpop.f32.mrb[0].mxu0
      %1681 = vmatprep.mubr.bf16.mxu0 0
      %1682 = vmatmul.mubr.bf16.gmra.mrb[0].mxu0 %v1003
      %v1683 = vpop.f32.mrb[0].mxu0
      %v1684 = vadd.f32 %v559, %v1683
      %v1685 = vpop.f32.mrb[0].mxu0
      %v1686 = vpop.f32.mrb[0].mxu0
      %v1687 = vadd.f32 %v559, %v1686
      %v1688 = vpop.f32.mrb[0].mxu0
      %1689 = vmatprep.mubr.bf16.mxu0 0
      %1690 = vmatmul.mubr.bf16.gmra.mrb[0].mxu0 %v1004
      %v1691 = vpop.f32.mrb[0].mxu0
      %v1692 = vadd.f32 %v559, %v1691
      %v1693 = vpop.f32.mrb[0].mxu0
      %v1694 = vpop.f32.mrb[0].mxu0
      %v1695 = vadd.f32 %v559, %v1694
      %v1696 = vpop.f32.mrb[0].mxu0
      %1697 = vmatprep.mubr.bf16.mxu0 0
      %1698 = vmatmul.mubr.bf16.gmra.mrb[0].mxu0 %v1005
      %v1699 = vpop.f32.mrb[0].mxu0
      %v1700 = vadd.f32 %v559, %v1699
      %v1701 = vpop.f32.mrb[0].mxu0
      %v1702 = vpop.f32.mrb[0].mxu0
      %v1703 = vadd.f32 %v559, %v1702
      %v1704 = vpop.f32.mrb[0].mxu0
      %1705 = vmatprep.mubr.bf16.mxu0 0
      %1706 = vmatmul.mubr.bf16.gmra.mrb[0].mxu0 %v1006
      %v1707 = vpop.f32.mrb[0].mxu0
      %v1708 = vadd.f32 %v559, %v1707
      %v1709 = vpop.f32.mrb[0].mxu0
      %v1710 = vpop.f32.mrb[0].mxu0
      %v1711 = vadd.f32 %v559, %v1710
      %v1712 = vpop.f32.mrb[0].mxu0
      %1713 = vmatprep.mubr.bf16.mxu0 0
      %1714 = vmatmul.mubr.bf16.gmra.mrb[0].mxu0 %v1007
      %v1715 = vpop.f32.mrb[0].mxu0
      %v1716 = vadd.f32 %v559, %v1715
      %v1717 = vpop.f32.mrb[0].mxu0
      %v1718 = vpop.f32.mrb[0].mxu0
      %v1719 = vadd.f32 %v559, %v1718
      %v1720 = vpop.f32.mrb[0].mxu0
      %1721 = vmatprep.mubr.bf16.mxu0 0
      %1722 = vmatmul.mubr.bf16.gmra.mrb[0].mxu0 %v1008
      %v1723 = vpop.f32.mrb[0].mxu0
      %v1724 = vadd.f32 %v559, %v1723
      %v1725 = vpop.f32.mrb[0].mxu0
      %v1726 = vpop.f32.mrb[0].mxu0
      %v1727 = vadd.f32 %v559, %v1726
      %v1728 = vpop.f32.mrb[0].mxu0
      %1729 = vmatprep.mubr.bf16.mxu0 0
      %1730 = vmatmul.mubr.bf16.gmra.mrb[0].mxu0 %v1009
      %v1731 = vpop.f32.mrb[0].mxu0
      %v1732 = vadd.f32 %v559, %v1731
      %v1733 = vpop.f32.mrb[0].mxu0
      %v1734 = vpop.f32.mrb[0].mxu0
      %v1735 = vadd.f32 %v559, %v1734
      %v1736 = vpop.f32.mrb[0].mxu0
      %1737 = vmatprep.mubr.bf16.mxu0 0
      %1738 = vmatmul.mubr.bf16.gmra.mrb[0].mxu0 %v1010
      %v1739 = vpop.f32.mrb[0].mxu0
      %v1740 = vadd.f32 %v559, %v1739
      %v1741 = vpop.f32.mrb[0].mxu0
      %v1742 = vpop.f32.mrb[0].mxu0
      %v1743 = vadd.f32 %v559, %v1742
      %v1744 = vpop.f32.mrb[0].mxu0
      %1745 = vmatprep.mubr.bf16.mxu0 0
      %1746 = vmatmul.mubr.bf16.gmra.mrb[0].mxu0 %v1011
      %v1747 = vpop.f32.mrb[0].mxu0
      %v1748 = vadd.f32 %v559, %v1747
      %v1749 = vpop.f32.mrb[0].mxu0
      %v1750 = vpop.f32.mrb[0].mxu0
      %v1751 = vadd.f32 %v559, %v1750
      %v1752 = vpop.f32.mrb[0].mxu0
      %1753 = vmatprep.mubr.bf16.mxu0 0
      %1754 = vmatmul.mubr.bf16.gmra.mrb[0].mxu0 %v1012
      %v1755 = vpop.f32.mrb[0].mxu0
      %v1756 = vadd.f32 %v559, %v1755
      %v1757 = vpop.f32.mrb[0].mxu0
      %v1758 = vpop.f32.mrb[0].mxu0
      %v1759 = vadd.f32 %v559, %v1758
      %v1760 = vpop.f32.mrb[0].mxu0
      %1761 = vmatprep.mubr.bf16.mxu0 0
      %1762 = vmatmul.mubr.bf16.gmra.mrb[0].mxu0 %v1013
      %v1763 = vpop.f32.mrb[0].mxu0
      %v1764 = vadd.f32 %v559, %v1763
      %v1765 = vpop.f32.mrb[0].mxu0
      %v1766 = vpop.f32.mrb[0].mxu0
      %v1767 = vadd.f32 %v559, %v1766
      %v1768 = vpop.f32.mrb[0].mxu0
      %1769 = vmatprep.mubr.bf16.mxu0 0
      %1770 = vmatmul.mubr.bf16.gmra.mrb[0].mxu0 %v1014
      %v1771 = vpop.f32.mrb[0].mxu0
      %v1772 = vadd.f32 %v559, %v1771
      %v1773 = vpop.f32.mrb[0].mxu0
      %v1774 = vpop.f32.mrb[0].mxu0
      %v1775 = vadd.f32 %v559, %v1774
      %v1776 = vpop.f32.mrb[0].mxu0
      %1777 = vmatprep.mubr.bf16.mxu0 0
      %1778 = vmatmul.mubr.bf16.gmra.mrb[0].mxu0 %v1015
      %v1779 = vpop.f32.mrb[0].mxu0
      %v1780 = vadd.f32 %v559, %v1779
      %v1781 = vpop.f32.mrb[0].mxu0
      %v1782 = vpop.f32.mrb[0].mxu0
      %v1783 = vadd.f32 %v559, %v1782
      %v1784 = vpop.f32.mrb[0].mxu0
      %1785 = vmatprep.mubr.bf16.mxu0 0
      %1786 = vmatmul.mubr.bf16.gmra.mrb[0].mxu0 %v1016
      %v1787 = vpop.f32.mrb[0].mxu0
      %v1788 = vadd.f32 %v559, %v1787
      %v1789 = vpop.f32.mrb[0].mxu0
      %v1790 = vpop.f32.mrb[0].mxu0
      %v1791 = vadd.f32 %v559, %v1790
      %v1792 = vpop.f32.mrb[0].mxu0
      %1793 = vmatprep.mubr.bf16.mxu0 0
      %1794 = vmatmul.mubr.bf16.gmra.mrb[0].mxu0 %v1017
      %v1795 = vpop.f32.mrb[0].mxu0
      %v1796 = vadd.f32 %v559, %v1795
      %v1797 = vpop.f32.mrb[0].mxu0
      %v1798 = vpop.f32.mrb[0].mxu0
      %v1799 = vadd.f32 %v559, %v1798
      %v1800 = vpop.f32.mrb[0].mxu0
      %1801 = vmatprep.mubr.bf16.mxu0 0
      %1802 = vmatmul.mubr.bf16.gmra.mrb[0].mxu0 %v1018
      %v1803 = vpop.f32.mrb[0].mxu0
      %v1804 = vadd.f32 %v559, %v1803
      %v1805 = vpop.f32.mrb[0].mxu0
      %v1806 = vpop.f32.mrb[0].mxu0
      %v1807 = vadd.f32 %v559, %v1806
      %v1808 = vpop.f32.mrb[0].mxu0
      %1809 = vmatprep.mubr.bf16.mxu0 0
      %1810 = vmatmul.mubr.bf16.gmra.mrb[0].mxu0 %v1019
      %v1811 = vpop.f32.mrb[0].mxu0
      %v1812 = vadd.f32 %v559, %v1811
      %v1813 = vpop.f32.mrb[0].mxu0
      %v1814 = vpop.f32.mrb[0].mxu0
      %v1815 = vadd.f32 %v559, %v1814
      %v1816 = vpop.f32.mrb[0].mxu0
      %1817 = vmatprep.mubr.bf16.mxu0 0
      %1818 = vmatmul.mubr.bf16.gmra.mrb[0].mxu0 %v1020
      %v1819 = vpop.f32.mrb[0].mxu0
      %v1820 = vadd.f32 %v559, %v1819
      %v1821 = vpop.f32.mrb[0].mxu0
      %v1822 = vpop.f32.mrb[0].mxu0
      %v1823 = vadd.f32 %v559, %v1822
      %v1824 = vpop.f32.mrb[0].mxu0
      %1825 = vmatprep.mubr.bf16.mxu0 0
      %1826 = vmatmul.mubr.bf16.gmra.mrb[0].mxu0 %v1021
      %v1827 = vpop.f32.mrb[0].mxu0
      %v1828 = vadd.f32 %v559, %v1827
      %v1829 = vpop.f32.mrb[0].mxu0
      %v1830 = vpop.f32.mrb[0].mxu0
      %v1831 = vadd.f32 %v559, %v1830
      %v1832 = vpop.f32.mrb[0].mxu0
      %1833 = vmatprep.mubr.bf16.mxu0 0
      %1834 = vmatmul.mubr.bf16.gmra.mrb[0].mxu0 %v1022
      %v1835 = vpop.f32.mrb[0].mxu0
      %v1836 = vadd.f32 %v559, %v1835
      %v1837 = vpop.f32.mrb[0].mxu0
      %v1838 = vpop.f32.mrb[0].mxu0
      %v1839 = vadd.f32 %v559, %v1838
      %v1840 = vpop.f32.mrb[0].mxu0
      %1841 = vmatprep.mubr.bf16.mxu0 0
      %1842 = vmatmul.mubr.bf16.gmra.mrb[0].mxu0 %v1023
      %v1843 = vpop.f32.mrb[0].mxu0
      %v1844 = vadd.f32 %v559, %v1843
      %v1845 = vpop.f32.mrb[0].mxu0
      %v1846 = vpop.f32.mrb[0].mxu0
      %v1847 = vadd.f32 %v559, %v1846
      %v1848 = vpop.f32.mrb[0].mxu0
      %1849 = vmatprep.mubr.bf16.mxu0 0
      %1850 = vmatmul.mubr.bf16.gmra.mrb[0].mxu0 %v1024
      %v1851 = vpop.f32.mrb[0].mxu0
      %v1852 = vadd.f32 %v559, %v1851
      %v1853 = vpop.f32.mrb[0].mxu0
      %v1854 = vpop.f32.mrb[0].mxu0
      %v1855 = vadd.f32 %v559, %v1854
      %v1856 = vpop.f32.mrb[0].mxu0
      %1857 = vmatprep.mubr.bf16.mxu0 0
      %1858 = vmatmul.mubr.bf16.gmra.mrb[0].mxu0 %v1025
      %v1859 = vpop.f32.mrb[0].mxu0
      %v1860 = vadd.f32 %v559, %v1859
      %v1861 = vpop.f32.mrb[0].mxu0
      %v1862 = vpop.f32.mrb[0].mxu0
      %v1863 = vadd.f32 %v559, %v1862
      %v1864 = vpop.f32.mrb[0].mxu0
      %1865 = vmatprep.mubr.bf16.mxu0 0
      %1866 = vmatmul.mubr.bf16.gmra.mrb[0].mxu0 %v1026
      %v1867 = vpop.f32.mrb[0].mxu0
      %v1868 = vadd.f32 %v559, %v1867
      %v1869 = vpop.f32.mrb[0].mxu0
      %v1870 = vpop.f32.mrb[0].mxu0
      %v1871 = vadd.f32 %v559, %v1870
      %v1872 = vpop.f32.mrb[0].mxu0
      %1873 = vmatprep.mubr.bf16.mxu0 0
      %1874 = vmatmul.mubr.bf16.gmra.mrb[0].mxu0 %v1027
      %v1875 = vpop.f32.mrb[0].mxu0
      %v1876 = vadd.f32 %v559, %v1875
      %v1877 = vpop.f32.mrb[0].mxu0
      %v1878 = vpop.f32.mrb[0].mxu0
      %v1879 = vadd.f32 %v559, %v1878
      %v1880 = vpop.f32.mrb[0].mxu0
      %1881 = vmatprep.mubr.bf16.mxu0 0
      %1882 = vmatmul.mubr.bf16.gmra.mrb[0].mxu0 %v1028
      %v1883 = vpop.f32.mrb[0].mxu0
      %v1884 = vadd.f32 %v559, %v1883
      %v1885 = vpop.f32.mrb[0].mxu0
      %v1886 = vpop.f32.mrb[0].mxu0
      %v1887 = vadd.f32 %v559, %v1886
      %v1888 = vpop.f32.mrb[0].mxu0
      %1889 = vmatprep.mubr.bf16.mxu0 0
      %1890 = vmatmul.mubr.bf16.gmra.mrb[0].mxu0 %v1029
      %v1891 = vpop.f32.mrb[0].mxu0
      %v1892 = vadd.f32 %v559, %v1891
      %v1893 = vpop.f32.mrb[0].mxu0
      %v1894 = vpop.f32.mrb[0].mxu0
      %v1895 = vadd.f32 %v559, %v1894
      %v1896 = vpop.f32.mrb[0].mxu0
      %1897 = vmatprep.mubr.bf16.mxu0 0
      %1898 = vmatmul.mubr.bf16.gmra.mrb[0].mxu0 %v1030
      %v1899 = vpop.f32.mrb[0].mxu0
      %v1900 = vadd.f32 %v559, %v1899
      %v1901 = vpop.f32.mrb[0].mxu0
      %v1902 = vpop.f32.mrb[0].mxu0
      %v1903 = vadd.f32 %v559, %v1902
      %v1904 = vpop.f32.mrb[0].mxu0
      %1905 = vmatprep.mubr.bf16.mxu0 0
      %1906 = vmatmul.mubr.bf16.gmra.mrb[0].mxu0 %v1031
      %v1907 = vpop.f32.mrb[0].mxu0
      %v1908 = vadd.f32 %v559, %v1907
      %v1909 = vpop.f32.mrb[0].mxu0
      %v1910 = vpop.f32.mrb[0].mxu0
      %v1911 = vadd.f32 %v559, %v1910
      %v1912 = vpop.f32.mrb[0].mxu0
      %1913 = vmatprep.mubr.bf16.mxu0 0
      %1914 = vmatmul.mubr.bf16.gmra.mrb[0].mxu0 %v1032
      %v1915 = vpop.f32.mrb[0].mxu0
      %v1916 = vadd.f32 %v559, %v1915
      %v1917 = vpop.f32.mrb[0].mxu0
      %v1918 = vpop.f32.mrb[0].mxu0
      %v1919 = vadd.f32 %v559, %v1918
      %v1920 = vpop.f32.mrb[0].mxu0
      %1921 = vmatprep.mubr.bf16.mxu0 0
      %1922 = vmatmul.mubr.bf16.gmra.mrb[0].mxu0 %v1033
      %v1923 = vpop.f32.mrb[0].mxu0
      %v1924 = vadd.f32 %v559, %v1923
      %v1925 = vpop.f32.mrb[0].mxu0
      %v1926 = vpop.f32.mrb[0].mxu0
      %v1927 = vadd.f32 %v559, %v1926
      %v1928 = vpop.f32.mrb[0].mxu0
      %1929 = vmatprep.mubr.bf16.mxu0 0
      %1930 = vmatmul.mubr.bf16.gmra.mrb[0].mxu0 %v1034
      %v1931 = vpop.f32.mrb[0].mxu0
      %v1932 = vadd.f32 %v559, %v1931
      %v1933 = vpop.f32.mrb[0].mxu0
      %v1934 = vpop.f32.mrb[0].mxu0
      %v1935 = vadd.f32 %v559, %v1934
      %v1936 = vpop.f32.mrb[0].mxu0
      %1937 = vmatprep.mubr.bf16.mxu0 0
      %1938 = vmatmul.mubr.bf16.gmra.mrb[0].mxu0 %v1035
      %v1939 = vpop.f32.mrb[0].mxu0
      %v1940 = vadd.f32 %v559, %v1939
      %v1941 = vpop.f32.mrb[0].mxu0
      %v1942 = vpop.f32.mrb[0].mxu0
      %v1943 = vadd.f32 %v559, %v1942
      %v1944 = vpop.f32.mrb[0].mxu0
      %1945 = vmatprep.mubr.bf16.mxu0 0
      %1946 = vmatmul.mubr.bf16.gmra.mrb[0].mxu0 %v1036
      %v1947 = vpop.f32.mrb[0].mxu0
      %v1948 = vadd.f32 %v559, %v1947
      %v1949 = vpop.f32.mrb[0].mxu0
      %v1950 = vpop.f32.mrb[0].mxu0
      %v1951 = vadd.f32 %v559, %v1950
      %v1952 = vpop.f32.mrb[0].mxu0
      %1953 = vmatprep.mubr.bf16.mxu0 0
      %1954 = vmatmul.mubr.bf16.gmra.mrb[0].mxu0 %v1037
      %v1955 = vpop.f32.mrb[0].mxu0
      %v1956 = vadd.f32 %v559, %v1955
      %v1957 = vpop.f32.mrb[0].mxu0
      %v1958 = vpop.f32.mrb[0].mxu0
      %v1959 = vadd.f32 %v559, %v1958
      %v1960 = vpop.f32.mrb[0].mxu0
      %1961 = vmatprep.mubr.bf16.mxu0 0
      %1962 = vmatmul.mubr.bf16.gmra.mrb[0].mxu0 %v1038
      %v1963 = vpop.f32.mrb[0].mxu0
      %v1964 = vadd.f32 %v559, %v1963
      %v1965 = vpop.f32.mrb[0].mxu0
      %v1966 = vpop.f32.mrb[0].mxu0
      %v1967 = vadd.f32 %v559, %v1966
      %v1968 = vpop.f32.mrb[0].mxu0
      %1969 = vmatprep.mubr.bf16.mxu0 0
      %1970 = vmatmul.mubr.bf16.gmra.mrb[0].mxu0 %v1039
      %v1971 = vpop.f32.mrb[0].mxu0
      %v1972 = vadd.f32 %v559, %v1971
      %v1973 = vpop.f32.mrb[0].mxu0
      %v1974 = vpop.f32.mrb[0].mxu0
      %v1975 = vadd.f32 %v559, %v1974
      %v1976 = vpop.f32.mrb[0].mxu0
      %1977 = vmatprep.mubr.bf16.mxu0 0
      %1978 = vmatmul.mubr.bf16.gmra.mrb[0].mxu0 %v1040
      %v1979 = vpop.f32.mrb[0].mxu0
      %v1980 = vadd.f32 %v559, %v1979
      %v1981 = vpop.f32.mrb[0].mxu0
      %v1982 = vpop.f32.mrb[0].mxu0
      %v1983 = vadd.f32 %v559, %v1982
      %v1984 = vpop.f32.mrb[0].mxu0
      %1985 = vdwg.mxu0
      %v1986 = vpack.c.bf16 %v1223, %v1220
      %v1987 = vpack.c.bf16 %v1231, %v1228
      %v1988 = vpack.c.bf16 %v1239, %v1236
      %v1989 = vpack.c.bf16 %v1247, %v1244
      %v1990 = vpack.c.bf16 %v1255, %v1252
      %v1991 = vpack.c.bf16 %v1263, %v1260
      %v1992 = vpack.c.bf16 %v1271, %v1268
      %v1993 = vpack.c.bf16 %v1279, %v1276
      %v1994 = vpack.c.bf16 %v1287, %v1284
      %v1995 = vpack.c.bf16 %v1295, %v1292
      %v1996 = vpack.c.bf16 %v1303, %v1300
      %v1997 = vpack.c.bf16 %v1311, %v1308
      %v1998 = vpack.c.bf16 %v1319, %v1316
      %v1999 = vpack.c.bf16 %v1327, %v1324
      %v2000 = vpack.c.bf16 %v1335, %v1332
      %v2001 = vpack.c.bf16 %v1343, %v1340
      %v2002 = vpack.c.bf16 %v1351, %v1348
      %v2003 = vpack.c.bf16 %v1359, %v1356
      %v2004 = vpack.c.bf16 %v1367, %v1364
      %v2005 = vpack.c.bf16 %v1375, %v1372
      %v2006 = vpack.c.bf16 %v1383, %v1380
      %v2007 = vpack.c.bf16 %v1391, %v1388
      %v2008 = vpack.c.bf16 %v1399, %v1396
      %v2009 = vpack.c.bf16 %v1407, %v1404
      %v2010 = vpack.c.bf16 %v1415, %v1412
      %v2011 = vpack.c.bf16 %v1423, %v1420
      %v2012 = vpack.c.bf16 %v1431, %v1428
      %v2013 = vpack.c.bf16 %v1439, %v1436
      %v2014 = vpack.c.bf16 %v1447, %v1444
      %v2015 = vpack.c.bf16 %v1455, %v1452
      %v2016 = vpack.c.bf16 %v1463, %v1460
      %v2017 = vpack.c.bf16 %v1471, %v1468
      %v2018 = vpack.c.bf16 %v1479, %v1476
      %v2019 = vpack.c.bf16 %v1487, %v1484
      %v2020 = vpack.c.bf16 %v1495, %v1492
      %v2021 = vpack.c.bf16 %v1503, %v1500
      %v2022 = vpack.c.bf16 %v1511, %v1508
      %v2023 = vpack.c.bf16 %v1519, %v1516
      %v2024 = vpack.c.bf16 %v1527, %v1524
      %v2025 = vpack.c.bf16 %v1535, %v1532
      %v2026 = vpack.c.bf16 %v1543, %v1540
      %v2027 = vpack.c.bf16 %v1551, %v1548
      %v2028 = vpack.c.bf16 %v1559, %v1556
      %v2029 = vpack.c.bf16 %v1567, %v1564
      %v2030 = vpack.c.bf16 %v1575, %v1572
      %v2031 = vpack.c.bf16 %v1583, %v1580
      %v2032 = vpack.c.bf16 %v1591, %v1588
      %v2033 = vpack.c.bf16 %v1599, %v1596
      %v2034 = vpack.c.bf16 %v1607, %v1604
      %v2035 = vpack.c.bf16 %v1615, %v1612
      %v2036 = vpack.c.bf16 %v1623, %v1620
      %v2037 = vpack.c.bf16 %v1631, %v1628
      %v2038 = vpack.c.bf16 %v1639, %v1636
      %v2039 = vpack.c.bf16 %v1647, %v1644
      %v2040 = vpack.c.bf16 %v1655, %v1652
      %v2041 = vpack.c.bf16 %v1663, %v1660
      %v2042 = vpack.c.bf16 %v1671, %v1668
      %v2043 = vpack.c.bf16 %v1679, %v1676
      %v2044 = vpack.c.bf16 %v1687, %v1684
      %v2045 = vpack.c.bf16 %v1695, %v1692
      %v2046 = vpack.c.bf16 %v1703, %v1700
      %v2047 = vpack.c.bf16 %v1711, %v1708
      %v2048 = vpack.c.bf16 %v1719, %v1716
      %v2049 = vpack.c.bf16 %v1727, %v1724
      %v2050 = vpack.c.bf16 %v1735, %v1732
      %v2051 = vpack.c.bf16 %v1743, %v1740
      %v2052 = vpack.c.bf16 %v1751, %v1748
      %v2053 = vpack.c.bf16 %v1759, %v1756
      %v2054 = vpack.c.bf16 %v1767, %v1764
      %v2055 = vpack.c.bf16 %v1775, %v1772
      %v2056 = vpack.c.bf16 %v1783, %v1780
      %v2057 = vpack.c.bf16 %v1791, %v1788
      %v2058 = vpack.c.bf16 %v1799, %v1796
      %v2059 = vpack.c.bf16 %v1807, %v1804
      %v2060 = vpack.c.bf16 %v1815, %v1812
      %v2061 = vpack.c.bf16 %v1823, %v1820
      %v2062 = vpack.c.bf16 %v1831, %v1828
      %v2063 = vpack.c.bf16 %v1839, %v1836
      %v2064 = vpack.c.bf16 %v1847, %v1844
      %v2065 = vpack.c.bf16 %v1855, %v1852
      %v2066 = vpack.c.bf16 %v1863, %v1860
      %v2067 = vpack.c.bf16 %v1871, %v1868
      %v2068 = vpack.c.bf16 %v1879, %v1876
      %v2069 = vpack.c.bf16 %v1887, %v1884
      %v2070 = vpack.c.bf16 %v1895, %v1892
      %v2071 = vpack.c.bf16 %v1903, %v1900
      %v2072 = vpack.c.bf16 %v1911, %v1908
      %v2073 = vpack.c.bf16 %v1919, %v1916
      %v2074 = vpack.c.bf16 %v1927, %v1924
      %v2075 = vpack.c.bf16 %v1935, %v1932
      %v2076 = vpack.c.bf16 %v1943, %v1940
      %v2077 = vpack.c.bf16 %v1951, %v1948
      %v2078 = vpack.c.bf16 %v1959, %v1956
      %v2079 = vpack.c.bf16 %v1967, %v1964
      %v2080 = vpack.c.bf16 %v1975, %v1972
      %v2081 = vpack.c.bf16 %v1983, %v1980
      %v2082 = vld [vmem:[%s6] sm:$0x3]
      %2083 = vmatprep.subr.bf16.mxu0 0
      %2084 = vmatpush1.bf16.xpose.msra.mxu0 %v1986
      %2085 = vmatprep.subr.bf16.mxu0 0
      %2086 = vmatpush1.bf16.xpose.msra.mxu0 %v1987
      %2087 = vmatprep.subr.bf16.mxu0 0
      %2088 = vmatpush1.bf16.xpose.msra.mxu0 %v1988
      %2089 = vmatprep.subr.bf16.mxu0 0
      %2090 = vmatpush1.bf16.xpose.msra.mxu0 %v1989
      %2091 = vmatprep.subr.bf16.mxu0 0
      %2092 = vmatpush1.bf16.xpose.msra.mxu0 %v1990
      %2093 = vmatprep.subr.bf16.mxu0 0
      %2094 = vmatpush1.bf16.xpose.msra.mxu0 %v1991
      %2095 = vmatprep.subr.bf16.mxu0 0
      %2096 = vmatpush1.bf16.xpose.msra.mxu0 0
      %2097 = vmatprep.subr.bf16.mxu0 0
      %2098 = vmatpush1.bf16.xpose.msra.mxu0 0
      %2099 = vmatprep.subr.bf16.mxu0 0
      %2100 = vmatpush1.bf16.xpose.msra.mxu0 0
      %2101 = vmatprep.subr.bf16.mxu0 0
      %2102 = vmatpush1.bf16.xpose.msra.mxu0 0
      %2103 = vmatprep.subr.bf16.mxu0 0
      %2104 = vmatpush1.bf16.xpose.msra.mxu0 0
      %2105 = vmatprep.subr.bf16.mxu0 0
      %2106 = vmatpush1.bf16.xpose.msra.mxu0 0
      %2107 = vmatprep.subr.bf16.mxu0 0
      %2108 = vmatpush1.bf16.xpose.msra.mxu0 0
      %2109 = vmatprep.subr.bf16.mxu0 0
      %2110 = vmatpush1.bf16.xpose.msra.mxu0 0
      %2111 = vmatprep.subr.bf16.mxu0 0
      %2112 = vmatpush1.bf16.xpose.msra.mxu0 0
      %2113 = vmatprep.subr.bf16.mxu0 0
      %2114 = vmatpush1.bf16.xpose.msra.mxu0 0
      %2115 = vmatprep.mubr.bf16.mxu0 0
      %2116 = vmatmul.mubr.bf16.gmra.mrb[0].mxu0 %v2082
      %v2117 = vpop.f32.mrb[0].mxu0
      %v2118 = vadd.f32 0.0, %v2117
      %v2119 = vpop.f32.mrb[0].mxu0
      %v2120 = vpop.f32.mrb[0].mxu0
      %v2121 = vpop.f32.mrb[0].mxu0
      %2122 = vdwg.mxu0
      %2123 = vmatprep.subr.bf16.mxu0 0
      %2124 = vmatpush1.bf16.xpose.msra.mxu0 %v1992
      %2125 = vmatprep.subr.bf16.mxu0 0
      %2126 = vmatpush1.bf16.xpose.msra.mxu0 %v1993
      %2127 = vmatprep.subr.bf16.mxu0 0
      %2128 = vmatpush1.bf16.xpose.msra.mxu0 %v1994
      %2129 = vmatprep.subr.bf16.mxu0 0
      %2130 = vmatpush1.bf16.xpose.msra.mxu0 %v1995
      %2131 = vmatprep.subr.bf16.mxu0 0
      %2132 = vmatpush1.bf16.xpose.msra.mxu0 %v1996
      %2133 = vmatprep.subr.bf16.mxu0 0
      %2134 = vmatpush1.bf16.xpose.msra.mxu0 %v1997
      %2135 = vmatprep.subr.bf16.mxu0 0
      %2136 = vmatpush1.bf16.xpose.msra.mxu0 0
      %2137 = vmatprep.subr.bf16.mxu0 0
      %2138 = vmatpush1.bf16.xpose.msra.mxu0 0
      %2139 = vmatprep.subr.bf16.mxu0 0
      %2140 = vmatpush1.bf16.xpose.msra.mxu0 0
      %2141 = vmatprep.subr.bf16.mxu0 0
      %2142 = vmatpush1.bf16.xpose.msra.mxu0 0
      %2143 = vmatprep.subr.bf16.mxu0 0
      %2144 = vmatpush1.bf16.xpose.msra.mxu0 0
      %2145 = vmatprep.subr.bf16.mxu0 0
      %2146 = vmatpush1.bf16.xpose.msra.mxu0 0
      %2147 = vmatprep.subr.bf16.mxu0 0
      %2148 = vmatpush1.bf16.xpose.msra.mxu0 0
      %2149 = vmatprep.subr.bf16.mxu0 0
      %2150 = vmatpush1.bf16.xpose.msra.mxu0 0
      %2151 = vmatprep.subr.bf16.mxu0 0
      %2152 = vmatpush1.bf16.xpose.msra.mxu0 0
      %2153 = vmatprep.subr.bf16.mxu0 0
      %2154 = vmatpush1.bf16.xpose.msra.mxu0 0
      %2155 = vmatprep.mubr.bf16.mxu0 0
      %2156 = vmatmul.mubr.bf16.gmra.mrb[0].mxu0 %v2082
      %v2157 = vpop.f32.mrb[0].mxu0
      %v2158 = vadd.f32 0.0, %v2157
      %v2159 = vpop.f32.mrb[0].mxu0
      %v2160 = vpop.f32.mrb[0].mxu0
      %v2161 = vpop.f32.mrb[0].mxu0
      %2162 = vdwg.mxu0
      %2163 = vmatprep.subr.bf16.mxu0 0
      %2164 = vmatpush1.bf16.xpose.msra.mxu0 %v1998
      %2165 = vmatprep.subr.bf16.mxu0 0
      %2166 = vmatpush1.bf16.xpose.msra.mxu0 %v1999
      %2167 = vmatprep.subr.bf16.mxu0 0
      %2168 = vmatpush1.bf16.xpose.msra.mxu0 %v2000
      %2169 = vmatprep.subr.bf16.mxu0 0
      %2170 = vmatpush1.bf16.xpose.msra.mxu0 %v2001
      %2171 = vmatprep.subr.bf16.mxu0 0
      %2172 = vmatpush1.bf16.xpose.msra.mxu0 %v2002
      %2173 = vmatprep.subr.bf16.mxu0 0
      %2174 = vmatpush1.bf16.xpose.msra.mxu0 %v2003
      %2175 = vmatprep.subr.bf16.mxu0 0
      %2176 = vmatpush1.bf16.xpose.msra.mxu0 0
      %2177 = vmatprep.subr.bf16.mxu0 0
      %2178 = vmatpush1.bf16.xpose.msra.mxu0 0
      %2179 = vmatprep.subr.bf16.mxu0 0
      %2180 = vmatpush1.bf16.xpose.msra.mxu0 0
      %2181 = vmatprep.subr.bf16.mxu0 0
      %2182 = vmatpush1.bf16.xpose.msra.mxu0 0
      %2183 = vmatprep.subr.bf16.mxu0 0
      %2184 = vmatpush1.bf16.xpose.msra.mxu0 0
      %2185 = vmatprep.subr.bf16.mxu0 0
      %2186 = vmatpush1.bf16.xpose.msra.mxu0 0
      %2187 = vmatprep.subr.bf16.mxu0 0
      %2188 = vmatpush1.bf16.xpose.msra.mxu0 0
      %2189 = vmatprep.subr.bf16.mxu0 0
      %2190 = vmatpush1.bf16.xpose.msra.mxu0 0
      %2191 = vmatprep.subr.bf16.mxu0 0
      %2192 = vmatpush1.bf16.xpose.msra.mxu0 0
      %2193 = vmatprep.subr.bf16.mxu0 0
      %2194 = vmatpush1.bf16.xpose.msra.mxu0 0
      %2195 = vmatprep.mubr.bf16.mxu0 0
      %2196 = vmatmul.mubr.bf16.gmra.mrb[0].mxu0 %v2082
      %v2197 = vpop.f32.mrb[0].mxu0
      %v2198 = vadd.f32 0.0, %v2197
      %v2199 = vpop.f32.mrb[0].mxu0
      %v2200 = vpop.f32.mrb[0].mxu0
      %v2201 = vpop.f32.mrb[0].mxu0
      %2202 = vdwg.mxu0
      %2203 = vmatprep.subr.bf16.mxu0 0
      %2204 = vmatpush1.bf16.xpose.msra.mxu0 %v2004
      %2205 = vmatprep.subr.bf16.mxu0 0
      %2206 = vmatpush1.bf16.xpose.msra.mxu0 %v2005
      %2207 = vmatprep.subr.bf16.mxu0 0
      %2208 = vmatpush1.bf16.xpose.msra.mxu0 %v2006
      %2209 = vmatprep.subr.bf16.mxu0 0
      %2210 = vmatpush1.bf16.xpose.msra.mxu0 %v2007
      %2211 = vmatprep.subr.bf16.mxu0 0
      %2212 = vmatpush1.bf16.xpose.msra.mxu0 %v2008
      %2213 = vmatprep.subr.bf16.mxu0 0
      %2214 = vmatpush1.bf16.xpose.msra.mxu0 %v2009
      %2215 = vmatprep.subr.bf16.mxu0 0
      %2216 = vmatpush1.bf16.xpose.msra.mxu0 0
      %2217 = vmatprep.subr.bf16.mxu0 0
      %2218 = vmatpush1.bf16.xpose.msra.mxu0 0
      %2219 = vmatprep.subr.bf16.mxu0 0
      %2220 = vmatpush1.bf16.xpose.msra.mxu0 0
      %2221 = vmatprep.subr.bf16.mxu0 0
      %2222 = vmatpush1.bf16.xpose.msra.mxu0 0
      %2223 = vmatprep.subr.bf16.mxu0 0
      %2224 = vmatpush1.bf16.xpose.msra.mxu0 0
      %2225 = vmatprep.subr.bf16.mxu0 0
      %2226 = vmatpush1.bf16.xpose.msra.mxu0 0
      %2227 = vmatprep.subr.bf16.mxu0 0
      %2228 = vmatpush1.bf16.xpose.msra.mxu0 0
      %2229 = vmatprep.subr.bf16.mxu0 0
      %2230 = vmatpush1.bf16.xpose.msra.mxu0 0
      %2231 = vmatprep.subr.bf16.mxu0 0
      %2232 = vmatpush1.bf16.xpose.msra.mxu0 0
      %2233 = vmatprep.subr.bf16.mxu0 0
      %2234 = vmatpush1.bf16.xpose.msra.mxu0 0
      %2235 = vmatprep.mubr.bf16.mxu0 0
      %2236 = vmatmul.mubr.bf16.gmra.mrb[0].mxu0 %v2082
      %v2237 = vpop.f32.mrb[0].mxu0
      %v2238 = vadd.f32 0.0, %v2237
      %v2239 = vpop.f32.mrb[0].mxu0
      %v2240 = vpop.f32.mrb[0].mxu0
      %v2241 = vpop.f32.mrb[0].mxu0
      %2242 = vdwg.mxu0
      %2243 = vmatprep.subr.bf16.mxu0 0
      %2244 = vmatpush1.bf16.xpose.msra.mxu0 %v2010
      %2245 = vmatprep.subr.bf16.mxu0 0
      %2246 = vmatpush1.bf16.xpose.msra.mxu0 %v2011
      %2247 = vmatprep.subr.bf16.mxu0 0
      %2248 = vmatpush1.bf16.xpose.msra.mxu0 %v2012
      %2249 = vmatprep.subr.bf16.mxu0 0
      %2250 = vmatpush1.bf16.xpose.msra.mxu0 %v2013
      %2251 = vmatprep.subr.bf16.mxu0 0
      %2252 = vmatpush1.bf16.xpose.msra.mxu0 %v2014
      %2253 = vmatprep.subr.bf16.mxu0 0
      %2254 = vmatpush1.bf16.xpose.msra.mxu0 %v2015
      %2255 = vmatprep.subr.bf16.mxu0 0
      %2256 = vmatpush1.bf16.xpose.msra.mxu0 0
      %2257 = vmatprep.subr.bf16.mxu0 0
      %2258 = vmatpush1.bf16.xpose.msra.mxu0 0
      %2259 = vmatprep.subr.bf16.mxu0 0
      %2260 = vmatpush1.bf16.xpose.msra.mxu0 0
      %2261 = vmatprep.subr.bf16.mxu0 0
      %2262 = vmatpush1.bf16.xpose.msra.mxu0 0
      %2263 = vmatprep.subr.bf16.mxu0 0
      %2264 = vmatpush1.bf16.xpose.msra.mxu0 0
      %2265 = vmatprep.subr.bf16.mxu0 0
      %2266 = vmatpush1.bf16.xpose.msra.mxu0 0
      %2267 = vmatprep.subr.bf16.mxu0 0
      %2268 = vmatpush1.bf16.xpose.msra.mxu0 0
      %2269 = vmatprep.subr.bf16.mxu0 0
      %2270 = vmatpush1.bf16.xpose.msra.mxu0 0
      %2271 = vmatprep.subr.bf16.mxu0 0
      %2272 = vmatpush1.bf16.xpose.msra.mxu0 0
      %2273 = vmatprep.subr.bf16.mxu0 0
      %2274 = vmatpush1.bf16.xpose.msra.mxu0 0
      %2275 = vmatprep.mubr.bf16.mxu0 0
      %2276 = vmatmul.mubr.bf16.gmra.mrb[0].mxu0 %v2082
      %v2277 = vpop.f32.mrb[0].mxu0
      %v2278 = vadd.f32 0.0, %v2277
      %v2279 = vpop.f32.mrb[0].mxu0
      %v2280 = vpop.f32.mrb[0].mxu0
      %v2281 = vpop.f32.mrb[0].mxu0
      %2282 = vdwg.mxu0
      %2283 = vmatprep.subr.bf16.mxu0 0
      %2284 = vmatpush1.bf16.xpose.msra.mxu0 %v2016
      %2285 = vmatprep.subr.bf16.mxu0 0
      %2286 = vmatpush1.bf16.xpose.msra.mxu0 %v2017
      %2287 = vmatprep.subr.bf16.mxu0 0
      %2288 = vmatpush1.bf16.xpose.msra.mxu0 %v2018
      %2289 = vmatprep.subr.bf16.mxu0 0
      %2290 = vmatpush1.bf16.xpose.msra.mxu0 %v2019
      %2291 = vmatprep.subr.bf16.mxu0 0
      %2292 = vmatpush1.bf16.xpose.msra.mxu0 %v2020
      %2293 = vmatprep.subr.bf16.mxu0 0
      %2294 = vmatpush1.bf16.xpose.msra.mxu0 %v2021
      %2295 = vmatprep.subr.bf16.mxu0 0
      %2296 = vmatpush1.bf16.xpose.msra.mxu0 0
      %2297 = vmatprep.subr.bf16.mxu0 0
      %2298 = vmatpush1.bf16.xpose.msra.mxu0 0
      %2299 = vmatprep.subr.bf16.mxu0 0
      %2300 = vmatpush1.bf16.xpose.msra.mxu0 0
      %2301 = vmatprep.subr.bf16.mxu0 0
      %2302 = vmatpush1.bf16.xpose.msra.mxu0 0
      %2303 = vmatprep.subr.bf16.mxu0 0
      %2304 = vmatpush1.bf16.xpose.msra.mxu0 0
      %2305 = vmatprep.subr.bf16.mxu0 0
      %2306 = vmatpush1.bf16.xpose.msra.mxu0 0
      %2307 = vmatprep.subr.bf16.mxu0 0
      %2308 = vmatpush1.bf16.xpose.msra.mxu0 0
      %2309 = vmatprep.subr.bf16.mxu0 0
      %2310 = vmatpush1.bf16.xpose.msra.mxu0 0
      %2311 = vmatprep.subr.bf16.mxu0 0
      %2312 = vmatpush1.bf16.xpose.msra.mxu0 0
      %2313 = vmatprep.subr.bf16.mxu0 0
      %2314 = vmatpush1.bf16.xpose.msra.mxu0 0
      %2315 = vmatprep.mubr.bf16.mxu0 0
      %2316 = vmatmul.mubr.bf16.gmra.mrb[0].mxu0 %v2082
      %v2317 = vpop.f32.mrb[0].mxu0
      %v2318 = vadd.f32 0.0, %v2317
      %v2319 = vpop.f32.mrb[0].mxu0
      %v2320 = vpop.f32.mrb[0].mxu0
      %v2321 = vpop.f32.mrb[0].mxu0
      %2322 = vdwg.mxu0
      %2323 = vmatprep.subr.bf16.mxu0 0
      %2324 = vmatpush1.bf16.xpose.msra.mxu0 %v2022
      %2325 = vmatprep.subr.bf16.mxu0 0
      %2326 = vmatpush1.bf16.xpose.msra.mxu0 %v2023
      %2327 = vmatprep.subr.bf16.mxu0 0
      %2328 = vmatpush1.bf16.xpose.msra.mxu0 %v2024
      %2329 = vmatprep.subr.bf16.mxu0 0
      %2330 = vmatpush1.bf16.xpose.msra.mxu0 %v2025
      %2331 = vmatprep.subr.bf16.mxu0 0
      %2332 = vmatpush1.bf16.xpose.msra.mxu0 %v2026
      %2333 = vmatprep.subr.bf16.mxu0 0
      %2334 = vmatpush1.bf16.xpose.msra.mxu0 %v2027
      %2335 = vmatprep.subr.bf16.mxu0 0
      %2336 = vmatpush1.bf16.xpose.msra.mxu0 0
      %2337 = vmatprep.subr.bf16.mxu0 0
      %2338 = vmatpush1.bf16.xpose.msra.mxu0 0
      %2339 = vmatprep.subr.bf16.mxu0 0
      %2340 = vmatpush1.bf16.xpose.msra.mxu0 0
      %2341 = vmatprep.subr.bf16.mxu0 0
      %2342 = vmatpush1.bf16.xpose.msra.mxu0 0
      %2343 = vmatprep.subr.bf16.mxu0 0
      %2344 = vmatpush1.bf16.xpose.msra.mxu0 0
      %2345 = vmatprep.subr.bf16.mxu0 0
      %2346 = vmatpush1.bf16.xpose.msra.mxu0 0
      %2347 = vmatprep.subr.bf16.mxu0 0
      %2348 = vmatpush1.bf16.xpose.msra.mxu0 0
      %2349 = vmatprep.subr.bf16.mxu0 0
      %2350 = vmatpush1.bf16.xpose.msra.mxu0 0
      %2351 = vmatprep.subr.bf16.mxu0 0
      %2352 = vmatpush1.bf16.xpose.msra.mxu0 0
      %2353 = vmatprep.subr.bf16.mxu0 0
      %2354 = vmatpush1.bf16.xpose.msra.mxu0 0
      %2355 = vmatprep.mubr.bf16.mxu0 0
      %2356 = vmatmul.mubr.bf16.gmra.mrb[0].mxu0 %v2082
      %v2357 = vpop.f32.mrb[0].mxu0
      %v2358 = vadd.f32 0.0, %v2357
      %v2359 = vpop.f32.mrb[0].mxu0
      %v2360 = vpop.f32.mrb[0].mxu0
      %v2361 = vpop.f32.mrb[0].mxu0
      %2362 = vdwg.mxu0
      %2363 = vmatprep.subr.bf16.mxu0 0
      %2364 = vmatpush1.bf16.xpose.msra.mxu0 %v2028
      %2365 = vmatprep.subr.bf16.mxu0 0
      %2366 = vmatpush1.bf16.xpose.msra.mxu0 %v2029
      %2367 = vmatprep.subr.bf16.mxu0 0
      %2368 = vmatpush1.bf16.xpose.msra.mxu0 %v2030
      %2369 = vmatprep.subr.bf16.mxu0 0
      %2370 = vmatpush1.bf16.xpose.msra.mxu0 %v2031
      %2371 = vmatprep.subr.bf16.mxu0 0
      %2372 = vmatpush1.bf16.xpose.msra.mxu0 %v2032
      %2373 = vmatprep.subr.bf16.mxu0 0
      %2374 = vmatpush1.bf16.xpose.msra.mxu0 %v2033
      %2375 = vmatprep.subr.bf16.mxu0 0
      %2376 = vmatpush1.bf16.xpose.msra.mxu0 0
      %2377 = vmatprep.subr.bf16.mxu0 0
      %2378 = vmatpush1.bf16.xpose.msra.mxu0 0
      %2379 = vmatprep.subr.bf16.mxu0 0
      %2380 = vmatpush1.bf16.xpose.msra.mxu0 0
      %2381 = vmatprep.subr.bf16.mxu0 0
      %2382 = vmatpush1.bf16.xpose.msra.mxu0 0
      %2383 = vmatprep.subr.bf16.mxu0 0
      %2384 = vmatpush1.bf16.xpose.msra.mxu0 0
      %2385 = vmatprep.subr.bf16.mxu0 0
      %2386 = vmatpush1.bf16.xpose.msra.mxu0 0
      %2387 = vmatprep.subr.bf16.mxu0 0
      %2388 = vmatpush1.bf16.xpose.msra.mxu0 0
      %2389 = vmatprep.subr.bf16.mxu0 0
      %2390 = vmatpush1.bf16.xpose.msra.mxu0 0
      %2391 = vmatprep.subr.bf16.mxu0 0
      %2392 = vmatpush1.bf16.xpose.msra.mxu0 0
      %2393 = vmatprep.subr.bf16.mxu0 0
      %2394 = vmatpush1.bf16.xpose.msra.mxu0 0
      %2395 = vmatprep.mubr.bf16.mxu0 0
      %2396 = vmatmul.mubr.bf16.gmra.mrb[0].mxu0 %v2082
      %v2397 = vpop.f32.mrb[0].mxu0
      %v2398 = vadd.f32 0.0, %v2397
      %v2399 = vpop.f32.mrb[0].mxu0
      %v2400 = vpop.f32.mrb[0].mxu0
      %v2401 = vpop.f32.mrb[0].mxu0
      %2402 = vdwg.mxu0
      %2403 = vmatprep.subr.bf16.mxu0 0
      %2404 = vmatpush1.bf16.xpose.msra.mxu0 %v2034
      %2405 = vmatprep.subr.bf16.mxu0 0
      %2406 = vmatpush1.bf16.xpose.msra.mxu0 %v2035
      %2407 = vmatprep.subr.bf16.mxu0 0
      %2408 = vmatpush1.bf16.xpose.msra.mxu0 %v2036
      %2409 = vmatprep.subr.bf16.mxu0 0
      %2410 = vmatpush1.bf16.xpose.msra.mxu0 %v2037
      %2411 = vmatprep.subr.bf16.mxu0 0
      %2412 = vmatpush1.bf16.xpose.msra.mxu0 %v2038
      %2413 = vmatprep.subr.bf16.mxu0 0
      %2414 = vmatpush1.bf16.xpose.msra.mxu0 %v2039
      %2415 = vmatprep.subr.bf16.mxu0 0
      %2416 = vmatpush1.bf16.xpose.msra.mxu0 0
      %2417 = vmatprep.subr.bf16.mxu0 0
      %2418 = vmatpush1.bf16.xpose.msra.mxu0 0
      %2419 = vmatprep.subr.bf16.mxu0 0
      %2420 = vmatpush1.bf16.xpose.msra.mxu0 0
      %2421 = vmatprep.subr.bf16.mxu0 0
      %2422 = vmatpush1.bf16.xpose.msra.mxu0 0
      %2423 = vmatprep.subr.bf16.mxu0 0
      %2424 = vmatpush1.bf16.xpose.msra.mxu0 0
      %2425 = vmatprep.subr.bf16.mxu0 0
      %2426 = vmatpush1.bf16.xpose.msra.mxu0 0
      %2427 = vmatprep.subr.bf16.mxu0 0
      %2428 = vmatpush1.bf16.xpose.msra.mxu0 0
      %2429 = vmatprep.subr.bf16.mxu0 0
      %2430 = vmatpush1.bf16.xpose.msra.mxu0 0
      %2431 = vmatprep.subr.bf16.mxu0 0
      %2432 = vmatpush1.bf16.xpose.msra.mxu0 0
      %2433 = vmatprep.subr.bf16.mxu0 0
      %2434 = vmatpush1.bf16.xpose.msra.mxu0 0
      %2435 = vmatprep.mubr.bf16.mxu0 0
      %2436 = vmatmul.mubr.bf16.gmra.mrb[0].mxu0 %v2082
      %v2437 = vpop.f32.mrb[0].mxu0
      %v2438 = vadd.f32 0.0, %v2437
      %v2439 = vpop.f32.mrb[0].mxu0
      %v2440 = vpop.f32.mrb[0].mxu0
      %v2441 = vpop.f32.mrb[0].mxu0
      %2442 = vdwg.mxu0
      %2443 = vmatprep.subr.bf16.mxu0 0
      %2444 = vmatpush1.bf16.xpose.msra.mxu0 %v2040
      %2445 = vmatprep.subr.bf16.mxu0 0
      %2446 = vmatpush1.bf16.xpose.msra.mxu0 %v2041
      %2447 = vmatprep.subr.bf16.mxu0 0
      %2448 = vmatpush1.bf16.xpose.msra.mxu0 %v2042
      %2449 = vmatprep.subr.bf16.mxu0 0
      %2450 = vmatpush1.bf16.xpose.msra.mxu0 %v2043
      %2451 = vmatprep.subr.bf16.mxu0 0
      %2452 = vmatpush1.bf16.xpose.msra.mxu0 %v2044
      %2453 = vmatprep.subr.bf16.mxu0 0
      %2454 = vmatpush1.bf16.xpose.msra.mxu0 %v2045
      %2455 = vmatprep.subr.bf16.mxu0 0
      %2456 = vmatpush1.bf16.xpose.msra.mxu0 0
      %2457 = vmatprep.subr.bf16.mxu0 0
      %2458 = vmatpush1.bf16.xpose.msra.mxu0 0
      %2459 = vmatprep.subr.bf16.mxu0 0
      %2460 = vmatpush1.bf16.xpose.msra.mxu0 0
      %2461 = vmatprep.subr.bf16.mxu0 0
      %2462 = vmatpush1.bf16.xpose.msra.mxu0 0
      %2463 = vmatprep.subr.bf16.mxu0 0
      %2464 = vmatpush1.bf16.xpose.msra.mxu0 0
      %2465 = vmatprep.subr.bf16.mxu0 0
      %2466 = vmatpush1.bf16.xpose.msra.mxu0 0
      %2467 = vmatprep.subr.bf16.mxu0 0
      %2468 = vmatpush1.bf16.xpose.msra.mxu0 0
      %2469 = vmatprep.subr.bf16.mxu0 0
      %2470 = vmatpush1.bf16.xpose.msra.mxu0 0
      %2471 = vmatprep.subr.bf16.mxu0 0
      %2472 = vmatpush1.bf16.xpose.msra.mxu0 0
      %2473 = vmatprep.subr.bf16.mxu0 0
      %2474 = vmatpush1.bf16.xpose.msra.mxu0 0
      %2475 = vmatprep.mubr.bf16.mxu0 0
      %2476 = vmatmul.mubr.bf16.gmra.mrb[0].mxu0 %v2082
      %v2477 = vpop.f32.mrb[0].mxu0
      %v2478 = vadd.f32 0.0, %v2477
      %v2479 = vpop.f32.mrb[0].mxu0
      %v2480 = vpop.f32.mrb[0].mxu0
      %v2481 = vpop.f32.mrb[0].mxu0
      %2482 = vdwg.mxu0
      %2483 = vmatprep.subr.bf16.mxu0 0
      %2484 = vmatpush1.bf16.xpose.msra.mxu0 %v2046
      %2485 = vmatprep.subr.bf16.mxu0 0
      %2486 = vmatpush1.bf16.xpose.msra.mxu0 %v2047
      %2487 = vmatprep.subr.bf16.mxu0 0
      %2488 = vmatpush1.bf16.xpose.msra.mxu0 %v2048
      %2489 = vmatprep.subr.bf16.mxu0 0
      %2490 = vmatpush1.bf16.xpose.msra.mxu0 %v2049
      %2491 = vmatprep.subr.bf16.mxu0 0
      %2492 = vmatpush1.bf16.xpose.msra.mxu0 %v2050
      %2493 = vmatprep.subr.bf16.mxu0 0
      %2494 = vmatpush1.bf16.xpose.msra.mxu0 %v2051
      %2495 = vmatprep.subr.bf16.mxu0 0
      %2496 = vmatpush1.bf16.xpose.msra.mxu0 0
      %2497 = vmatprep.subr.bf16.mxu0 0
      %2498 = vmatpush1.bf16.xpose.msra.mxu0 0
      %2499 = vmatprep.subr.bf16.mxu0 0
      %2500 = vmatpush1.bf16.xpose.msra.mxu0 0
      %2501 = vmatprep.subr.bf16.mxu0 0
      %2502 = vmatpush1.bf16.xpose.msra.mxu0 0
      %2503 = vmatprep.subr.bf16.mxu0 0
      %2504 = vmatpush1.bf16.xpose.msra.mxu0 0
      %2505 = vmatprep.subr.bf16.mxu0 0
      %2506 = vmatpush1.bf16.xpose.msra.mxu0 0
      %2507 = vmatprep.subr.bf16.mxu0 0
      %2508 = vmatpush1.bf16.xpose.msra.mxu0 0
      %2509 = vmatprep.subr.bf16.mxu0 0
      %2510 = vmatpush1.bf16.xpose.msra.mxu0 0
      %2511 = vmatprep.subr.bf16.mxu0 0
      %2512 = vmatpush1.bf16.xpose.msra.mxu0 0
      %2513 = vmatprep.subr.bf16.mxu0 0
      %2514 = vmatpush1.bf16.xpose.msra.mxu0 0
      %2515 = vmatprep.mubr.bf16.mxu0 0
      %2516 = vmatmul.mubr.bf16.gmra.mrb[0].mxu0 %v2082
      %v2517 = vpop.f32.mrb[0].mxu0
      %v2518 = vadd.f32 0.0, %v2517
      %v2519 = vpop.f32.mrb[0].mxu0
      %v2520 = vpop.f32.mrb[0].mxu0
      %v2521 = vpop.f32.mrb[0].mxu0
      %2522 = vdwg.mxu0
      %2523 = vmatprep.subr.bf16.mxu0 0
      %2524 = vmatpush1.bf16.xpose.msra.mxu0 %v2052
      %2525 = vmatprep.subr.bf16.mxu0 0
      %2526 = vmatpush1.bf16.xpose.msra.mxu0 %v2053
      %2527 = vmatprep.subr.bf16.mxu0 0
      %2528 = vmatpush1.bf16.xpose.msra.mxu0 %v2054
      %2529 = vmatprep.subr.bf16.mxu0 0
      %2530 = vmatpush1.bf16.xpose.msra.mxu0 %v2055
      %2531 = vmatprep.subr.bf16.mxu0 0
      %2532 = vmatpush1.bf16.xpose.msra.mxu0 %v2056
      %2533 = vmatprep.subr.bf16.mxu0 0
      %2534 = vmatpush1.bf16.xpose.msra.mxu0 %v2057
      %2535 = vmatprep.subr.bf16.mxu0 0
      %2536 = vmatpush1.bf16.xpose.msra.mxu0 0
      %2537 = vmatprep.subr.bf16.mxu0 0
      %2538 = vmatpush1.bf16.xpose.msra.mxu0 0
      %2539 = vmatprep.subr.bf16.mxu0 0
      %2540 = vmatpush1.bf16.xpose.msra.mxu0 0
      %2541 = vmatprep.subr.bf16.mxu0 0
      %2542 = vmatpush1.bf16.xpose.msra.mxu0 0
      %2543 = vmatprep.subr.bf16.mxu0 0
      %2544 = vmatpush1.bf16.xpose.msra.mxu0 0
      %2545 = vmatprep.subr.bf16.mxu0 0
      %2546 = vmatpush1.bf16.xpose.msra.mxu0 0
      %2547 = vmatprep.subr.bf16.mxu0 0
      %2548 = vmatpush1.bf16.xpose.msra.mxu0 0
      %2549 = vmatprep.subr.bf16.mxu0 0
      %2550 = vmatpush1.bf16.xpose.msra.mxu0 0
      %2551 = vmatprep.subr.bf16.mxu0 0
      %2552 = vmatpush1.bf16.xpose.msra.mxu0 0
      %2553 = vmatprep.subr.bf16.mxu0 0
      %2554 = vmatpush1.bf16.xpose.msra.mxu0 0
      %2555 = vmatprep.mubr.bf16.mxu0 0
      %2556 = vmatmul.mubr.bf16.gmra.mrb[0].mxu0 %v2082
      %v2557 = vpop.f32.mrb[0].mxu0
      %v2558 = vadd.f32 0.0, %v2557
      %v2559 = vpop.f32.mrb[0].mxu0
      %v2560 = vpop.f32.mrb[0].mxu0
      %v2561 = vpop.f32.mrb[0].mxu0
      %2562 = vdwg.mxu0
      %2563 = vmatprep.subr.bf16.mxu0 0
      %2564 = vmatpush1.bf16.xpose.msra.mxu0 %v2058
      %2565 = vmatprep.subr.bf16.mxu0 0
      %2566 = vmatpush1.bf16.xpose.msra.mxu0 %v2059
      %2567 = vmatprep.subr.bf16.mxu0 0
      %2568 = vmatpush1.bf16.xpose.msra.mxu0 %v2060
      %2569 = vmatprep.subr.bf16.mxu0 0
      %2570 = vmatpush1.bf16.xpose.msra.mxu0 %v2061
      %2571 = vmatprep.subr.bf16.mxu0 0
      %2572 = vmatpush1.bf16.xpose.msra.mxu0 %v2062
      %2573 = vmatprep.subr.bf16.mxu0 0
      %2574 = vmatpush1.bf16.xpose.msra.mxu0 %v2063
      %2575 = vmatprep.subr.bf16.mxu0 0
      %2576 = vmatpush1.bf16.xpose.msra.mxu0 0
      %2577 = vmatprep.subr.bf16.mxu0 0
      %2578 = vmatpush1.bf16.xpose.msra.mxu0 0
      %2579 = vmatprep.subr.bf16.mxu0 0
      %2580 = vmatpush1.bf16.xpose.msra.mxu0 0
      %2581 = vmatprep.subr.bf16.mxu0 0
      %2582 = vmatpush1.bf16.xpose.msra.mxu0 0
      %2583 = vmatprep.subr.bf16.mxu0 0
      %2584 = vmatpush1.bf16.xpose.msra.mxu0 0
      %2585 = vmatprep.subr.bf16.mxu0 0
      %2586 = vmatpush1.bf16.xpose.msra.mxu0 0
      %2587 = vmatprep.subr.bf16.mxu0 0
      %2588 = vmatpush1.bf16.xpose.msra.mxu0 0
      %2589 = vmatprep.subr.bf16.mxu0 0
      %2590 = vmatpush1.bf16.xpose.msra.mxu0 0
      %2591 = vmatprep.subr.bf16.mxu0 0
      %2592 = vmatpush1.bf16.xpose.msra.mxu0 0
      %2593 = vmatprep.subr.bf16.mxu0 0
      %2594 = vmatpush1.bf16.xpose.msra.mxu0 0
      %2595 = vmatprep.mubr.bf16.mxu0 0
      %2596 = vmatmul.mubr.bf16.gmra.mrb[0].mxu0 %v2082
      %v2597 = vpop.f32.mrb[0].mxu0
      %v2598 = vadd.f32 0.0, %v2597
      %v2599 = vpop.f32.mrb[0].mxu0
      %v2600 = vpop.f32.mrb[0].mxu0
      %v2601 = vpop.f32.mrb[0].mxu0
      %2602 = vdwg.mxu0
      %2603 = vmatprep.subr.bf16.mxu0 0
      %2604 = vmatpush1.bf16.xpose.msra.mxu0 %v2064
      %2605 = vmatprep.subr.bf16.mxu0 0
      %2606 = vmatpush1.bf16.xpose.msra.mxu0 %v2065
      %2607 = vmatprep.subr.bf16.mxu0 0
      %2608 = vmatpush1.bf16.xpose.msra.mxu0 %v2066
      %2609 = vmatprep.subr.bf16.mxu0 0
      %2610 = vmatpush1.bf16.xpose.msra.mxu0 %v2067
      %2611 = vmatprep.subr.bf16.mxu0 0
      %2612 = vmatpush1.bf16.xpose.msra.mxu0 %v2068
      %2613 = vmatprep.subr.bf16.mxu0 0
      %2614 = vmatpush1.bf16.xpose.msra.mxu0 %v2069
      %2615 = vmatprep.subr.bf16.mxu0 0
      %2616 = vmatpush1.bf16.xpose.msra.mxu0 0
      %2617 = vmatprep.subr.bf16.mxu0 0
      %2618 = vmatpush1.bf16.xpose.msra.mxu0 0
      %2619 = vmatprep.subr.bf16.mxu0 0
      %2620 = vmatpush1.bf16.xpose.msra.mxu0 0
      %2621 = vmatprep.subr.bf16.mxu0 0
      %2622 = vmatpush1.bf16.xpose.msra.mxu0 0
      %2623 = vmatprep.subr.bf16.mxu0 0
      %2624 = vmatpush1.bf16.xpose.msra.mxu0 0
      %2625 = vmatprep.subr.bf16.mxu0 0
      %2626 = vmatpush1.bf16.xpose.msra.mxu0 0
      %2627 = vmatprep.subr.bf16.mxu0 0
      %2628 = vmatpush1.bf16.xpose.msra.mxu0 0
      %2629 = vmatprep.subr.bf16.mxu0 0
      %2630 = vmatpush1.bf16.xpose.msra.mxu0 0
      %2631 = vmatprep.subr.bf16.mxu0 0
      %2632 = vmatpush1.bf16.xpose.msra.mxu0 0
      %2633 = vmatprep.subr.bf16.mxu0 0
      %2634 = vmatpush1.bf16.xpose.msra.mxu0 0
      %2635 = vmatprep.mubr.bf16.mxu0 0
      %2636 = vmatmul.mubr.bf16.gmra.mrb[0].mxu0 %v2082
      %v2637 = vpop.f32.mrb[0].mxu0
      %v2638 = vadd.f32 0.0, %v2637
      %v2639 = vpop.f32.mrb[0].mxu0
      %v2640 = vpop.f32.mrb[0].mxu0
      %v2641 = vpop.f32.mrb[0].mxu0
      %2642 = vdwg.mxu0
      %2643 = vmatprep.subr.bf16.mxu0 0
      %2644 = vmatpush1.bf16.xpose.msra.mxu0 %v2070
      %2645 = vmatprep.subr.bf16.mxu0 0
      %2646 = vmatpush1.bf16.xpose.msra.mxu0 %v2071
      %2647 = vmatprep.subr.bf16.mxu0 0
      %2648 = vmatpush1.bf16.xpose.msra.mxu0 %v2072
      %2649 = vmatprep.subr.bf16.mxu0 0
      %2650 = vmatpush1.bf16.xpose.msra.mxu0 %v2073
      %2651 = vmatprep.subr.bf16.mxu0 0
      %2652 = vmatpush1.bf16.xpose.msra.mxu0 %v2074
      %2653 = vmatprep.subr.bf16.mxu0 0
      %2654 = vmatpush1.bf16.xpose.msra.mxu0 %v2075
      %2655 = vmatprep.subr.bf16.mxu0 0
      %2656 = vmatpush1.bf16.xpose.msra.mxu0 0
      %2657 = vmatprep.subr.bf16.mxu0 0
      %2658 = vmatpush1.bf16.xpose.msra.mxu0 0
      %2659 = vmatprep.subr.bf16.mxu0 0
      %2660 = vmatpush1.bf16.xpose.msra.mxu0 0
      %2661 = vmatprep.subr.bf16.mxu0 0
      %2662 = vmatpush1.bf16.xpose.msra.mxu0 0
      %2663 = vmatprep.subr.bf16.mxu0 0
      %2664 = vmatpush1.bf16.xpose.msra.mxu0 0
      %2665 = vmatprep.subr.bf16.mxu0 0
      %2666 = vmatpush1.bf16.xpose.msra.mxu0 0
      %2667 = vmatprep.subr.bf16.mxu0 0
      %2668 = vmatpush1.bf16.xpose.msra.mxu0 0
      %2669 = vmatprep.subr.bf16.mxu0 0
      %2670 = vmatpush1.bf16.xpose.msra.mxu0 0
      %2671 = vmatprep.subr.bf16.mxu0 0
      %2672 = vmatpush1.bf16.xpose.msra.mxu0 0
      %2673 = vmatprep.subr.bf16.mxu0 0
      %2674 = vmatpush1.bf16.xpose.msra.mxu0 0
      %2675 = vmatprep.mubr.bf16.mxu0 0
      %2676 = vmatmul.mubr.bf16.gmra.mrb[0].mxu0 %v2082
      %v2677 = vpop.f32.mrb[0].mxu0
      %v2678 = vadd.f32 0.0, %v2677
      %v2679 = vpop.f32.mrb[0].mxu0
      %v2680 = vpop.f32.mrb[0].mxu0
      %v2681 = vpop.f32.mrb[0].mxu0
      %2682 = vdwg.mxu0
      %2683 = vmatprep.subr.bf16.mxu0 0
      %2684 = vmatpush1.bf16.xpose.msra.mxu0 %v2076
      %2685 = vmatprep.subr.bf16.mxu0 0
      %2686 = vmatpush1.bf16.xpose.msra.mxu0 %v2077
      %2687 = vmatprep.subr.bf16.mxu0 0
      %2688 = vmatpush1.bf16.xpose.msra.mxu0 %v2078
      %2689 = vmatprep.subr.bf16.mxu0 0
      %2690 = vmatpush1.bf16.xpose.msra.mxu0 %v2079
      %2691 = vmatprep.subr.bf16.mxu0 0
      %2692 = vmatpush1.bf16.xpose.msra.mxu0 %v2080
      %2693 = vmatprep.subr.bf16.mxu0 0
      %2694 = vmatpush1.bf16.xpose.msra.mxu0 %v2081
      %2695 = vmatprep.subr.bf16.mxu0 0
      %2696 = vmatpush1.bf16.xpose.msra.mxu0 0
      %2697 = vmatprep.subr.bf16.mxu0 0
      %2698 = vmatpush1.bf16.xpose.msra.mxu0 0
      %2699 = vmatprep.subr.bf16.mxu0 0
      %2700 = vmatpush1.bf16.xpose.msra.mxu0 0
      %2701 = vmatprep.subr.bf16.mxu0 0
      %2702 = vmatpush1.bf16.xpose.msra.mxu0 0
      %2703 = vmatprep.subr.bf16.mxu0 0
      %2704 = vmatpush1.bf16.xpose.msra.mxu0 0
      %2705 = vmatprep.subr.bf16.mxu0 0
      %2706 = vmatpush1.bf16.xpose.msra.mxu0 0
      %2707 = vmatprep.subr.bf16.mxu0 0
      %2708 = vmatpush1.bf16.xpose.msra.mxu0 0
      %2709 = vmatprep.subr.bf16.mxu0 0
      %2710 = vmatpush1.bf16.xpose.msra.mxu0 0
      %2711 = vmatprep.subr.bf16.mxu0 0
      %2712 = vmatpush1.bf16.xpose.msra.mxu0 0
      %2713 = vmatprep.subr.bf16.mxu0 0
      %2714 = vmatpush1.bf16.xpose.msra.mxu0 0
      %2715 = vmatprep.mubr.bf16.mxu0 0
      %2716 = vmatmul.mubr.bf16.gmra.mrb[0].mxu0 %v2082
      %v2717 = vpop.f32.mrb[0].mxu0
      %v2718 = vadd.f32 0.0, %v2717
      %v2719 = vpop.f32.mrb[0].mxu0
      %v2720 = vpop.f32.mrb[0].mxu0
      %v2721 = vpop.f32.mrb[0].mxu0
      %2722 = vdwg.mxu0
      %v2723 = vld [vmem:[%s325] sm:$0x1]
      %v2724 = vld [vmem:[%s325 + $0x1] sm:$0x1]
      %v2725 = vld [vmem:[%s325 + $0x2] sm:$0x1]
      %v2726 = vld [vmem:[%s325 + $0x3] sm:$0x1]
      %v2727 = vld [vmem:[%s325 + $0x4] sm:$0x1]
      %v2728 = vld [vmem:[%s325 + $0x5] sm:$0x1]
      %v2729 = vld [vmem:[%s325 + $0x6] sm:$0x1]
      %v2730 = vld [vmem:[%s325 + $0x7] sm:$0x1]
      %v2731 = vld [vmem:[%s325 + $0x8] sm:$0x1]
      %v2732 = vld [vmem:[%s325 + $0x9] sm:$0x1]
      %v2733 = vld [vmem:[%s325 + $0xa] sm:$0x1]
      %v2734 = vld [vmem:[%s325 + $0xb] sm:$0x1]
      %v2735 = vld [vmem:[%s325 + $0xc] sm:$0x1]
      %v2736 = vld [vmem:[%s325 + $0xd] sm:$0x1]
      %v2737 = vld [vmem:[%s325 + $0xe] sm:$0x1]
      %v2738 = vld [vmem:[%s325 + $0xf] sm:$0x1]
      %vm2739 = vcmp.eq.f32.partialorder %v2723, 0.0
      %vm2740 = vcmp.eq.f32.partialorder %v2724, 0.0
      %vm2741 = vcmp.eq.f32.partialorder %v2725, 0.0
      %vm2742 = vcmp.eq.f32.partialorder %v2726, 0.0
      %vm2743 = vcmp.eq.f32.partialorder %v2727, 0.0
      %vm2744 = vcmp.eq.f32.partialorder %v2728, 0.0
      %vm2745 = vcmp.eq.f32.partialorder %v2729, 0.0
      %vm2746 = vcmp.eq.f32.partialorder %v2730, 0.0
      %vm2747 = vcmp.eq.f32.partialorder %v2731, 0.0
      %vm2748 = vcmp.eq.f32.partialorder %v2732, 0.0
      %vm2749 = vcmp.eq.f32.partialorder %v2733, 0.0
      %vm2750 = vcmp.eq.f32.partialorder %v2734, 0.0
      %vm2751 = vcmp.eq.f32.partialorder %v2735, 0.0
      %vm2752 = vcmp.eq.f32.partialorder %v2736, 0.0
      %vm2753 = vcmp.eq.f32.partialorder %v2737, 0.0
      %vm2754 = vcmp.eq.f32.partialorder %v2738, 0.0
      %v2755 = vsel %vm2739, 1, 0
      %v2756 = vsel %vm2740, 1, 0
      %v2757 = vsel %vm2741, 1, 0
      %v2758 = vsel %vm2742, 1, 0
      %v2759 = vsel %vm2743, 1, 0
      %v2760 = vsel %vm2744, 1, 0
      %v2761 = vsel %vm2745, 1, 0
      %v2762 = vsel %vm2746, 1, 0
      %v2763 = vsel %vm2747, 1, 0
      %v2764 = vsel %vm2748, 1, 0
      %v2765 = vsel %vm2749, 1, 0
      %v2766 = vsel %vm2750, 1, 0
      %v2767 = vsel %vm2751, 1, 0
      %v2768 = vsel %vm2752, 1, 0
      %v2769 = vsel %vm2753, 1, 0
      %v2770 = vsel %vm2754, 1, 0
      %v2771 = vlaneseq
      %v2772 = vshrl.u32 %v2771, 7
      %v2773 = vsub.s32 0, %v2772
      %v2774 = vrot.slane %v2755, %v2773
      %v2775 = vlaneseq
      %v2776 = vshrl.u32 %v2775, 7
      %v2777 = vsub.s32 0, %v2776
      %v2778 = vrot.slane %v2756, %v2777
      %v2779 = vlaneseq
      %v2780 = vshrl.u32 %v2779, 7
      %v2781 = vsub.s32 0, %v2780
      %v2782 = vrot.slane %v2757, %v2781
      %v2783 = vlaneseq
      %v2784 = vshrl.u32 %v2783, 7
      %v2785 = vsub.s32 0, %v2784
      %v2786 = vrot.slane %v2758, %v2785
      %v2787 = vlaneseq
      %v2788 = vshrl.u32 %v2787, 7
      %v2789 = vsub.s32 0, %v2788
      %v2790 = vrot.slane %v2759, %v2789
      %v2791 = vlaneseq
      %v2792 = vshrl.u32 %v2791, 7
      %v2793 = vsub.s32 0, %v2792
      %v2794 = vrot.slane %v2760, %v2793
      %v2795 = vlaneseq
      %v2796 = vshrl.u32 %v2795, 7
      %v2797 = vsub.s32 0, %v2796
      %v2798 = vrot.slane %v2761, %v2797
      %v2799 = vlaneseq
      %v2800 = vshrl.u32 %v2799, 7
      %v2801 = vsub.s32 0, %v2800
      %v2802 = vrot.slane %v2762, %v2801
      %v2803 = vlaneseq
      %v2804 = vshrl.u32 %v2803, 7
      %v2805 = vsub.s32 0, %v2804
      %v2806 = vrot.slane %v2763, %v2805
      %v2807 = vlaneseq
      %v2808 = vshrl.u32 %v2807, 7
      %v2809 = vsub.s32 0, %v2808
      %v2810 = vrot.slane %v2764, %v2809
      %v2811 = vlaneseq
      %v2812 = vshrl.u32 %v2811, 7
      %v2813 = vsub.s32 0, %v2812
      %v2814 = vrot.slane %v2765, %v2813
      %v2815 = vlaneseq
      %v2816 = vshrl.u32 %v2815, 7
      %v2817 = vsub.s32 0, %v2816
      %v2818 = vrot.slane %v2766, %v2817
      %v2819 = vlaneseq
      %v2820 = vshrl.u32 %v2819, 7
      %v2821 = vsub.s32 0, %v2820
      %v2822 = vrot.slane %v2767, %v2821
      %v2823 = vlaneseq
      %v2824 = vshrl.u32 %v2823, 7
      %v2825 = vsub.s32 0, %v2824
      %v2826 = vrot.slane %v2768, %v2825
      %v2827 = vlaneseq
      %v2828 = vshrl.u32 %v2827, 7
      %v2829 = vsub.s32 0, %v2828
      %v2830 = vrot.slane %v2769, %v2829
      %v2831 = vlaneseq
      %v2832 = vshrl.u32 %v2831, 7
      %v2833 = vsub.s32 0, %v2832
      %v2834 = vrot.slane %v2770, %v2833
      %vm2835 = vcmp.eq.s32.totalorder %v2774, 1
      %vm2836 = vcmp.eq.s32.totalorder %v2778, 1
      %vm2837 = vcmp.eq.s32.totalorder %v2782, 1
      %vm2838 = vcmp.eq.s32.totalorder %v2786, 1
      %vm2839 = vcmp.eq.s32.totalorder %v2790, 1
      %vm2840 = vcmp.eq.s32.totalorder %v2794, 1
      %vm2841 = vcmp.eq.s32.totalorder %v2798, 1
      %vm2842 = vcmp.eq.s32.totalorder %v2802, 1
      %vm2843 = vcmp.eq.s32.totalorder %v2806, 1
      %vm2844 = vcmp.eq.s32.totalorder %v2810, 1
      %vm2845 = vcmp.eq.s32.totalorder %v2814, 1
      %vm2846 = vcmp.eq.s32.totalorder %v2818, 1
      %vm2847 = vcmp.eq.s32.totalorder %v2822, 1
      %vm2848 = vcmp.eq.s32.totalorder %v2826, 1
      %vm2849 = vcmp.eq.s32.totalorder %v2830, 1
      %vm2850 = vcmp.eq.s32.totalorder %v2834, 1
      %v2851 = vsel %vm2835, -4.2949673e+09, %v2118
      %v2852 = vsel %vm2836, -4.2949673e+09, %v2158
      %v2853 = vsel %vm2837, -4.2949673e+09, %v2198
      %v2854 = vsel %vm2838, -4.2949673e+09, %v2238
      %v2855 = vsel %vm2839, -4.2949673e+09, %v2278
      %v2856 = vsel %vm2840, -4.2949673e+09, %v2318
      %v2857 = vsel %vm2841, -4.2949673e+09, %v2358
      %v2858 = vsel %vm2842, -4.2949673e+09, %v2398
      %v2859 = vsel %vm2843, -4.2949673e+09, %v2438
      %v2860 = vsel %vm2844, -4.2949673e+09, %v2478
      %v2861 = vsel %vm2845, -4.2949673e+09, %v2518
      %v2862 = vsel %vm2846, -4.2949673e+09, %v2558
      %v2863 = vsel %vm2847, -4.2949673e+09, %v2598
      %v2864 = vsel %vm2848, -4.2949673e+09, %v2638
      %v2865 = vsel %vm2849, -4.2949673e+09, %v2678
      %v2866 = vsel %vm2850, -4.2949673e+09, %v2718
      %vm2867 = vcmask 780288
      %v2868 = vsel %vm2867, %v2851, -inf
      %2869 = vmax.xlane.f32.xlu0 %v2868
      %v2870 = vpop.xlane.xlu0 %2869
      %v2871 = vsel %vm2867, %v2852, -inf
      %2872 = vmax.xlane.f32.xlu0 %v2871
      %v2873 = vpop.xlane.xlu0 %2872
      %v2874 = vsel %vm2867, %v2853, -inf
      %2875 = vmax.xlane.f32.xlu0 %v2874
      %v2876 = vpop.xlane.xlu0 %2875
      %v2877 = vsel %vm2867, %v2854, -inf
      %2878 = vmax.xlane.f32.xlu0 %v2877
      %v2879 = vpop.xlane.xlu0 %2878
      %v2880 = vsel %vm2867, %v2855, -inf
      %2881 = vmax.xlane.f32.xlu0 %v2880
      %v2882 = vpop.xlane.xlu0 %2881
      %v2883 = vsel %vm2867, %v2856, -inf
      %2884 = vmax.xlane.f32.xlu0 %v2883
      %v2885 = vpop.xlane.xlu0 %2884
      %v2886 = vsel %vm2867, %v2857, -inf
      %2887 = vmax.xlane.f32.xlu0 %v2886
      %v2888 = vpop.xlane.xlu0 %2887
      %v2889 = vsel %vm2867, %v2858, -inf
      %2890 = vmax.xlane.f32.xlu0 %v2889
      %v2891 = vpop.xlane.xlu0 %2890
      %v2892 = vsel %vm2867, %v2859, -inf
      %2893 = vmax.xlane.f32.xlu0 %v2892
      %v2894 = vpop.xlane.xlu0 %2893
      %v2895 = vsel %vm2867, %v2860, -inf
      %2896 = vmax.xlane.f32.xlu0 %v2895
      %v2897 = vpop.xlane.xlu0 %2896
      %v2898 = vsel %vm2867, %v2861, -inf
      %2899 = vmax.xlane.f32.xlu0 %v2898
      %v2900 = vpop.xlane.xlu0 %2899
      %v2901 = vsel %vm2867, %v2862, -inf
      %2902 = vmax.xlane.f32.xlu0 %v2901
      %v2903 = vpop.xlane.xlu0 %2902
      %v2904 = vsel %vm2867, %v2863, -inf
      %2905 = vmax.xlane.f32.xlu0 %v2904
      %v2906 = vpop.xlane.xlu0 %2905
      %v2907 = vsel %vm2867, %v2864, -inf
      %2908 = vmax.xlane.f32.xlu0 %v2907
      %v2909 = vpop.xlane.xlu0 %2908
      %v2910 = vsel %vm2867, %v2865, -inf
      %2911 = vmax.xlane.f32.xlu0 %v2910
      %v2912 = vpop.xlane.xlu0 %2911
      %v2913 = vsel %vm2867, %v2866, -inf
      %2914 = vmax.xlane.f32.xlu0 %v2913
      %v2915 = vpop.xlane.xlu0 %2914
      %v2916 = vsub.f32 %v2851, %v2870
      %v2917 = vsub.f32 %v2852, %v2873
      %v2918 = vsub.f32 %v2853, %v2876
      %v2919 = vsub.f32 %v2854, %v2879
      %v2920 = vsub.f32 %v2855, %v2882
      %v2921 = vsub.f32 %v2856, %v2885
      %v2922 = vsub.f32 %v2857, %v2888
      %v2923 = vsub.f32 %v2858, %v2891
      %v2924 = vsub.f32 %v2859, %v2894
      %v2925 = vsub.f32 %v2860, %v2897
      %v2926 = vsub.f32 %v2861, %v2900
      %v2927 = vsub.f32 %v2862, %v2903
      %v2928 = vsub.f32 %v2863, %v2906
      %v2929 = vsub.f32 %v2864, %v2909
      %v2930 = vsub.f32 %v2865, %v2912
      %v2931 = vsub.f32 %v2866, %v2915
      %v2932 = vmul.f32 %v2916, 1.442695
      %v2933 = vpow.pop %v2932
      %v2934 = vmul.f32 %v2917, 1.442695
      %v2935 = vpow.pop %v2934
      %v2936 = vmul.f32 %v2918, 1.442695
      %v2937 = vpow.pop %v2936
      %v2938 = vmul.f32 %v2919, 1.442695
      %v2939 = vpow.pop %v2938
      %v2940 = vmul.f32 %v2920, 1.442695
      %v2941 = vpow.pop %v2940
      %v2942 = vmul.f32 %v2921, 1.442695
      %v2943 = vpow.pop %v2942
      %v2944 = vmul.f32 %v2922, 1.442695
      %v2945 = vpow.pop %v2944
      %v2946 = vmul.f32 %v2923, 1.442695
      %v2947 = vpow.pop %v2946
      %v2948 = vmul.f32 %v2924, 1.442695
      %v2949 = vpow.pop %v2948
      %v2950 = vmul.f32 %v2925, 1.442695
      %v2951 = vpow.pop %v2950
      %v2952 = vmul.f32 %v2926, 1.442695
      %v2953 = vpow.pop %v2952
      %v2954 = vmul.f32 %v2927, 1.442695
      %v2955 = vpow.pop %v2954
      %v2956 = vmul.f32 %v2928, 1.442695
      %v2957 = vpow.pop %v2956
      %v2958 = vmul.f32 %v2929, 1.442695
      %v2959 = vpow.pop %v2958
      %v2960 = vmul.f32 %v2930, 1.442695
      %v2961 = vpow.pop %v2960
      %v2962 = vmul.f32 %v2931, 1.442695
      %v2963 = vpow.pop %v2962
      %v2964 = vsel %vm2867, %v2933, 0.0
      %2965 = vadd.xlane.f32.xlu0 %v2964
      %v2966 = vpop.xlane.xlu0 %2965
      %v2967 = vsel %vm2867, %v2935, 0.0
      %2968 = vadd.xlane.f32.xlu0 %v2967
      %v2969 = vpop.xlane.xlu0 %2968
      %v2970 = vsel %vm2867, %v2937, 0.0
      %2971 = vadd.xlane.f32.xlu0 %v2970
      %v2972 = vpop.xlane.xlu0 %2971
      %v2973 = vsel %vm2867, %v2939, 0.0
      %2974 = vadd.xlane.f32.xlu0 %v2973
      %v2975 = vpop.xlane.xlu0 %2974
      %v2976 = vsel %vm2867, %v2941, 0.0
      %2977 = vadd.xlane.f32.xlu0 %v2976
      %v2978 = vpop.xlane.xlu0 %2977
      %v2979 = vsel %vm2867, %v2943, 0.0
      %2980 = vadd.xlane.f32.xlu0 %v2979
      %v2981 = vpop.xlane.xlu0 %2980
      %v2982 = vsel %vm2867, %v2945, 0.0
      %2983 = vadd.xlane.f32.xlu0 %v2982
      %v2984 = vpop.xlane.xlu0 %2983
      %v2985 = vsel %vm2867, %v2947, 0.0
      %2986 = vadd.xlane.f32.xlu0 %v2985
      %v2987 = vpop.xlane.xlu0 %2986
      %v2988 = vsel %vm2867, %v2949, 0.0
      %2989 = vadd.xlane.f32.xlu0 %v2988
      %v2990 = vpop.xlane.xlu0 %2989
      %v2991 = vsel %vm2867, %v2951, 0.0
      %2992 = vadd.xlane.f32.xlu0 %v2991
      %v2993 = vpop.xlane.xlu0 %2992
      %v2994 = vsel %vm2867, %v2953, 0.0
      %2995 = vadd.xlane.f32.xlu0 %v2994
      %v2996 = vpop.xlane.xlu0 %2995
      %v2997 = vsel %vm2867, %v2955, 0.0
      %2998 = vadd.xlane.f32.xlu0 %v2997
      %v2999 = vpop.xlane.xlu0 %2998
      %v3000 = vsel %vm2867, %v2957, 0.0
      %3001 = vadd.xlane.f32.xlu0 %v3000
      %v3002 = vpop.xlane.xlu0 %3001
      %v3003 = vsel %vm2867, %v2959, 0.0
      %3004 = vadd.xlane.f32.xlu0 %v3003
      %v3005 = vpop.xlane.xlu0 %3004
      %v3006 = vsel %vm2867, %v2961, 0.0
      %3007 = vadd.xlane.f32.xlu0 %v3006
      %v3008 = vpop.xlane.xlu0 %3007
      %v3009 = vsel %vm2867, %v2963, 0.0
      %3010 = vadd.xlane.f32.xlu0 %v3009
      %v3011 = vpop.xlane.xlu0 %3010
      %v3012 = vrcp.pop %v2966
      %v3013 = vrcp.pop %v2969
      %v3014 = vrcp.pop %v2972
      %v3015 = vrcp.pop %v2975
      %v3016 = vrcp.pop %v2978
      %v3017 = vrcp.pop %v2981
      %v3018 = vrcp.pop %v2984
      %v3019 = vrcp.pop %v2987
      %v3020 = vrcp.pop %v2990
      %v3021 = vrcp.pop %v2993
      %v3022 = vrcp.pop %v2996
      %v3023 = vrcp.pop %v2999
      %v3024 = vrcp.pop %v3002
      %v3025 = vrcp.pop %v3005
      %v3026 = vrcp.pop %v3008
      %v3027 = vrcp.pop %v3011
      %v3028 = vmul.f32 %v2933, %v3012
      %v3029 = vmul.f32 %v2935, %v3013
      %v3030 = vmul.f32 %v2937, %v3014
      %v3031 = vmul.f32 %v2939, %v3015
      %v3032 = vmul.f32 %v2941, %v3016
      %v3033 = vmul.f32 %v2943, %v3017
      %v3034 = vmul.f32 %v2945, %v3018
      %v3035 = vmul.f32 %v2947, %v3019
      %v3036 = vmul.f32 %v2949, %v3020
      %v3037 = vmul.f32 %v2951, %v3021
      %v3038 = vmul.f32 %v2953, %v3022
      %v3039 = vmul.f32 %v2955, %v3023
      %v3040 = vmul.f32 %v2957, %v3024
      %v3041 = vmul.f32 %v2959, %v3025
      %v3042 = vmul.f32 %v2961, %v3026
      %v3043 = vmul.f32 %v2963, %v3027
      %v3044 = vpack.c.bf16 %v3028, %v3028
      %v3045 = vpack.c.bf16 %v3029, %v3029
      %v3046 = vpack.c.bf16 %v3030, %v3030
      %v3047 = vpack.c.bf16 %v3031, %v3031
      %v3048 = vpack.c.bf16 %v3032, %v3032
      %v3049 = vpack.c.bf16 %v3033, %v3033
      %v3050 = vpack.c.bf16 %v3034, %v3034
      %v3051 = vpack.c.bf16 %v3035, %v3035
      %v3052 = vpack.c.bf16 %v3036, %v3036
      %v3053 = vpack.c.bf16 %v3037, %v3037
      %v3054 = vpack.c.bf16 %v3038, %v3038
      %v3055 = vpack.c.bf16 %v3039, %v3039
      %v3056 = vpack.c.bf16 %v3040, %v3040
      %v3057 = vpack.c.bf16 %v3041, %v3041
      %v3058 = vpack.c.bf16 %v3042, %v3042
      %v3059 = vpack.c.bf16 %v3043, %v3043
      %vm3060 = vcmask 785408
      %v3062 = vsel %vm3060, %v3044, 0
      %3064 = vmatprep.subr.bf16.mxu0 0
      %3065 = vmatpush1.bf16.msra.mxu0 %v1986
      %3066 = vmatprep.subr.bf16.mxu0 0
      %3067 = vmatpush1.bf16.msra.mxu0 %v1987
      %3068 = vmatprep.subr.bf16.mxu0 0
      %3069 = vmatpush1.bf16.msra.mxu0 %v1988
      %3070 = vmatprep.subr.bf16.mxu0 0
      %3071 = vmatpush1.bf16.msra.mxu0 %v1989
      %3072 = vmatprep.subr.bf16.mxu0 0
      %3073 = vmatpush1.bf16.msra.mxu0 %v1990
      %3074 = vmatprep.subr.bf16.mxu0 0
      %3075 = vmatpush1.bf16.msra.mxu0 %v1991
      %3076 = vmatprep.subr.bf16.mxu0 0
      %3077 = vmatpush1.bf16.msra.mxu0 0
      %3078 = vmatprep.subr.bf16.mxu0 0
      %3079 = vmatpush1.bf16.msra.mxu0 0
      %3080 = vmatprep.subr.bf16.mxu0 0
      %3081 = vmatpush1.bf16.msra.mxu0 0
      %3082 = vmatprep.subr.bf16.mxu0 0
      %3083 = vmatpush1.bf16.msra.mxu0 0
      %3084 = vmatprep.subr.bf16.mxu0 0
      %3085 = vmatpush1.bf16.msra.mxu0 0
      %3086 = vmatprep.subr.bf16.mxu0 0
      %3087 = vmatpush1.bf16.msra.mxu0 0
      %3088 = vmatprep.subr.bf16.mxu0 0
      %3089 = vmatpush1.bf16.msra.mxu0 0
      %3090 = vmatprep.subr.bf16.mxu0 0
      %3091 = vmatpush1.bf16.msra.mxu0 0
      %3092 = vmatprep.subr.bf16.mxu0 0
      %3093 = vmatpush1.bf16.msra.mxu0 0
      %3094 = vmatprep.subr.bf16.mxu0 0
      %3095 = vmatpush1.bf16.msra.mxu0 0
      %3096 = vmatprep.mubr.bf16.mxu0 0
      %3097 = vmatmul.mubr.bf16.gmra.mrb[0].mxu0 %v3062
      %v3098 = vpop.f32.mrb[0].mxu0
      %v3099 = vadd.f32 0.0, %v3098
      %v3100 = vpop.f32.mrb[0].mxu0
      %v3101 = vpop.f32.mrb[0].mxu0
      %v3102 = vpop.f32.mrb[0].mxu0
      %3103 = vdwg.mxu0
      %v3105 = vsel %vm3060, %v3045, 0
      %3107 = vmatprep.subr.bf16.mxu0 0
      %3108 = vmatpush1.bf16.msra.mxu0 %v1992
      %3109 = vmatprep.subr.bf16.mxu0 0
      %3110 = vmatpush1.bf16.msra.mxu0 %v1993
      %3111 = vmatprep.subr.bf16.mxu0 0
      %3112 = vmatpush1.bf16.msra.mxu0 %v1994
      %3113 = vmatprep.subr.bf16.mxu0 0
      %3114 = vmatpush1.bf16.msra.mxu0 %v1995
      %3115 = vmatprep.subr.bf16.mxu0 0
      %3116 = vmatpush1.bf16.msra.mxu0 %v1996
      %3117 = vmatprep.subr.bf16.mxu0 0
      %3118 = vmatpush1.bf16.msra.mxu0 %v1997
      %3119 = vmatprep.subr.bf16.mxu0 0
      %3120 = vmatpush1.bf16.msra.mxu0 0
      %3121 = vmatprep.subr.bf16.mxu0 0
      %3122 = vmatpush1.bf16.msra.mxu0 0
      %3123 = vmatprep.subr.bf16.mxu0 0
      %3124 = vmatpush1.bf16.msra.mxu0 0
      %3125 = vmatprep.subr.bf16.mxu0 0
      %3126 = vmatpush1.bf16.msra.mxu0 0
      %3127 = vmatprep.subr.bf16.mxu0 0
      %3128 = vmatpush1.bf16.msra.mxu0 0
      %3129 = vmatprep.subr.bf16.mxu0 0
      %3130 = vmatpush1.bf16.msra.mxu0 0
      %3131 = vmatprep.subr.bf16.mxu0 0
      %3132 = vmatpush1.bf16.msra.mxu0 0
      %3133 = vmatprep.subr.bf16.mxu0 0
      %3134 = vmatpush1.bf16.msra.mxu0 0
      %3135 = vmatprep.subr.bf16.mxu0 0
      %3136 = vmatpush1.bf16.msra.mxu0 0
      %3137 = vmatprep.subr.bf16.mxu0 0
      %3138 = vmatpush1.bf16.msra.mxu0 0
      %3139 = vmatprep.mubr.bf16.mxu0 0
      %3140 = vmatmul.mubr.bf16.gmra.mrb[0].mxu0 %v3105
      %v3141 = vpop.f32.mrb[0].mxu0
      %v3142 = vadd.f32 0.0, %v3141
      %v3143 = vpop.f32.mrb[0].mxu0
      %v3144 = vpop.f32.mrb[0].mxu0
      %v3145 = vpop.f32.mrb[0].mxu0
      %3146 = vdwg.mxu0
      %v3148 = vsel %vm3060, %v3046, 0
      %3150 = vmatprep.subr.bf16.mxu0 0
      %3151 = vmatpush1.bf16.msra.mxu0 %v1998
      %3152 = vmatprep.subr.bf16.mxu0 0
      %3153 = vmatpush1.bf16.msra.mxu0 %v1999
      %3154 = vmatprep.subr.bf16.mxu0 0
      %3155 = vmatpush1.bf16.msra.mxu0 %v2000
      %3156 = vmatprep.subr.bf16.mxu0 0
      %3157 = vmatpush1.bf16.msra.mxu0 %v2001
      %3158 = vmatprep.subr.bf16.mxu0 0
      %3159 = vmatpush1.bf16.msra.mxu0 %v2002
      %3160 = vmatprep.subr.bf16.mxu0 0
      %3161 = vmatpush1.bf16.msra.mxu0 %v2003
      %3162 = vmatprep.subr.bf16.mxu0 0
      %3163 = vmatpush1.bf16.msra.mxu0 0
      %3164 = vmatprep.subr.bf16.mxu0 0
      %3165 = vmatpush1.bf16.msra.mxu0 0
      %3166 = vmatprep.subr.bf16.mxu0 0
      %3167 = vmatpush1.bf16.msra.mxu0 0
      %3168 = vmatprep.subr.bf16.mxu0 0
      %3169 = vmatpush1.bf16.msra.mxu0 0
      %3170 = vmatprep.subr.bf16.mxu0 0
      %3171 = vmatpush1.bf16.msra.mxu0 0
      %3172 = vmatprep.subr.bf16.mxu0 0
      %3173 = vmatpush1.bf16.msra.mxu0 0
      %3174 = vmatprep.subr.bf16.mxu0 0
      %3175 = vmatpush1.bf16.msra.mxu0 0
      %3176 = vmatprep.subr.bf16.mxu0 0
      %3177 = vmatpush1.bf16.msra.mxu0 0
      %3178 = vmatprep.subr.bf16.mxu0 0
      %3179 = vmatpush1.bf16.msra.mxu0 0
      %3180 = vmatprep.subr.bf16.mxu0 0
      %3181 = vmatpush1.bf16.msra.mxu0 0
      %3182 = vmatprep.mubr.bf16.mxu0 0
      %3183 = vmatmul.mubr.bf16.gmra.mrb[0].mxu0 %v3148
      %v3184 = vpop.f32.mrb[0].mxu0
      %v3185 = vadd.f32 0.0, %v3184
      %v3186 = vpop.f32.mrb[0].mxu0
      %v3187 = vpop.f32.mrb[0].mxu0
      %v3188 = vpop.f32.mrb[0].mxu0
      %3189 = vdwg.mxu0
      %v3191 = vsel %vm3060, %v3047, 0
      %3193 = vmatprep.subr.bf16.mxu0 0
      %3194 = vmatpush1.bf16.msra.mxu0 %v2004
      %3195 = vmatprep.subr.bf16.mxu0 0
      %3196 = vmatpush1.bf16.msra.mxu0 %v2005
      %3197 = vmatprep.subr.bf16.mxu0 0
      %3198 = vmatpush1.bf16.msra.mxu0 %v2006
      %3199 = vmatprep.subr.bf16.mxu0 0
      %3200 = vmatpush1.bf16.msra.mxu0 %v2007
      %3201 = vmatprep.subr.bf16.mxu0 0
      %3202 = vmatpush1.bf16.msra.mxu0 %v2008
      %3203 = vmatprep.subr.bf16.mxu0 0
      %3204 = vmatpush1.bf16.msra.mxu0 %v2009
      %3205 = vmatprep.subr.bf16.mxu0 0
      %3206 = vmatpush1.bf16.msra.mxu0 0
      %3207 = vmatprep.subr.bf16.mxu0 0
      %3208 = vmatpush1.bf16.msra.mxu0 0
      %3209 = vmatprep.subr.bf16.mxu0 0
      %3210 = vmatpush1.bf16.msra.mxu0 0
      %3211 = vmatprep.subr.bf16.mxu0 0
      %3212 = vmatpush1.bf16.msra.mxu0 0
      %3213 = vmatprep.subr.bf16.mxu0 0
      %3214 = vmatpush1.bf16.msra.mxu0 0
      %3215 = vmatprep.subr.bf16.mxu0 0
      %3216 = vmatpush1.bf16.msra.mxu0 0
      %3217 = vmatprep.subr.bf16.mxu0 0
      %3218 = vmatpush1.bf16.msra.mxu0 0
      %3219 = vmatprep.subr.bf16.mxu0 0
      %3220 = vmatpush1.bf16.msra.mxu0 0
      %3221 = vmatprep.subr.bf16.mxu0 0
      %3222 = vmatpush1.bf16.msra.mxu0 0
      %3223 = vmatprep.subr.bf16.mxu0 0
      %3224 = vmatpush1.bf16.msra.mxu0 0
      %3225 = vmatprep.mubr.bf16.mxu0 0
      %3226 = vmatmul.mubr.bf16.gmra.mrb[0].mxu0 %v3191
      %v3227 = vpop.f32.mrb[0].mxu0
      %v3228 = vadd.f32 0.0, %v3227
      %v3229 = vpop.f32.mrb[0].mxu0
      %v3230 = vpop.f32.mrb[0].mxu0
      %v3231 = vpop.f32.mrb[0].mxu0
      %3232 = vdwg.mxu0
      %v3234 = vsel %vm3060, %v3048, 0
      %3236 = vmatprep.subr.bf16.mxu0 0
      %3237 = vmatpush1.bf16.msra.mxu0 %v2010
      %3238 = vmatprep.subr.bf16.mxu0 0
      %3239 = vmatpush1.bf16.msra.mxu0 %v2011
      %3240 = vmatprep.subr.bf16.mxu0 0
      %3241 = vmatpush1.bf16.msra.mxu0 %v2012
      %3242 = vmatprep.subr.bf16.mxu0 0
      %3243 = vmatpush1.bf16.msra.mxu0 %v2013
      %3244 = vmatprep.subr.bf16.mxu0 0
      %3245 = vmatpush1.bf16.msra.mxu0 %v2014
      %3246 = vmatprep.subr.bf16.mxu0 0
      %3247 = vmatpush1.bf16.msra.mxu0 %v2015
      %3248 = vmatprep.subr.bf16.mxu0 0
      %3249 = vmatpush1.bf16.msra.mxu0 0
      %3250 = vmatprep.subr.bf16.mxu0 0
      %3251 = vmatpush1.bf16.msra.mxu0 0
      %3252 = vmatprep.subr.bf16.mxu0 0
      %3253 = vmatpush1.bf16.msra.mxu0 0
      %3254 = vmatprep.subr.bf16.mxu0 0
      %3255 = vmatpush1.bf16.msra.mxu0 0
      %3256 = vmatprep.subr.bf16.mxu0 0
      %3257 = vmatpush1.bf16.msra.mxu0 0
      %3258 = vmatprep.subr.bf16.mxu0 0
      %3259 = vmatpush1.bf16.msra.mxu0 0
      %3260 = vmatprep.subr.bf16.mxu0 0
      %3261 = vmatpush1.bf16.msra.mxu0 0
      %3262 = vmatprep.subr.bf16.mxu0 0
      %3263 = vmatpush1.bf16.msra.mxu0 0
      %3264 = vmatprep.subr.bf16.mxu0 0
      %3265 = vmatpush1.bf16.msra.mxu0 0
      %3266 = vmatprep.subr.bf16.mxu0 0
      %3267 = vmatpush1.bf16.msra.mxu0 0
      %3268 = vmatprep.mubr.bf16.mxu0 0
      %3269 = vmatmul.mubr.bf16.gmra.mrb[0].mxu0 %v3234
      %v3270 = vpop.f32.mrb[0].mxu0
      %v3271 = vadd.f32 0.0, %v3270
      %v3272 = vpop.f32.mrb[0].mxu0
      %v3273 = vpop.f32.mrb[0].mxu0
      %v3274 = vpop.f32.mrb[0].mxu0
      %3275 = vdwg.mxu0
      %v3277 = vsel %vm3060, %v3049, 0
      %3279 = vmatprep.subr.bf16.mxu0 0
      %3280 = vmatpush1.bf16.msra.mxu0 %v2016
      %3281 = vmatprep.subr.bf16.mxu0 0
      %3282 = vmatpush1.bf16.msra.mxu0 %v2017
      %3283 = vmatprep.subr.bf16.mxu0 0
      %3284 = vmatpush1.bf16.msra.mxu0 %v2018
      %3285 = vmatprep.subr.bf16.mxu0 0
      %3286 = vmatpush1.bf16.msra.mxu0 %v2019
      %3287 = vmatprep.subr.bf16.mxu0 0
      %3288 = vmatpush1.bf16.msra.mxu0 %v2020
      %3289 = vmatprep.subr.bf16.mxu0 0
      %3290 = vmatpush1.bf16.msra.mxu0 %v2021
      %3291 = vmatprep.subr.bf16.mxu0 0
      %3292 = vmatpush1.bf16.msra.mxu0 0
      %3293 = vmatprep.subr.bf16.mxu0 0
      %3294 = vmatpush1.bf16.msra.mxu0 0
      %3295 = vmatprep.subr.bf16.mxu0 0
      %3296 = vmatpush1.bf16.msra.mxu0 0
      %3297 = vmatprep.subr.bf16.mxu0 0
      %3298 = vmatpush1.bf16.msra.mxu0 0
      %3299 = vmatprep.subr.bf16.mxu0 0
      %3300 = vmatpush1.bf16.msra.mxu0 0
      %3301 = vmatprep.subr.bf16.mxu0 0
      %3302 = vmatpush1.bf16.msra.mxu0 0
      %3303 = vmatprep.subr.bf16.mxu0 0
      %3304 = vmatpush1.bf16.msra.mxu0 0
      %3305 = vmatprep.subr.bf16.mxu0 0
      %3306 = vmatpush1.bf16.msra.mxu0 0
      %3307 = vmatprep.subr.bf16.mxu0 0
      %3308 = vmatpush1.bf16.msra.mxu0 0
      %3309 = vmatprep.subr.bf16.mxu0 0
      %3310 = vmatpush1.bf16.msra.mxu0 0
      %3311 = vmatprep.mubr.bf16.mxu0 0
      %3312 = vmatmul.mubr.bf16.gmra.mrb[0].mxu0 %v3277
      %v3313 = vpop.f32.mrb[0].mxu0
      %v3314 = vadd.f32 0.0, %v3313
      %v3315 = vpop.f32.mrb[0].mxu0
      %v3316 = vpop.f32.mrb[0].mxu0
      %v3317 = vpop.f32.mrb[0].mxu0
      %3318 = vdwg.mxu0
      %v3320 = vsel %vm3060, %v3050, 0
      %3322 = vmatprep.subr.bf16.mxu0 0
      %3323 = vmatpush1.bf16.msra.mxu0 %v2022
      %3324 = vmatprep.subr.bf16.mxu0 0
      %3325 = vmatpush1.bf16.msra.mxu0 %v2023
      %3326 = vmatprep.subr.bf16.mxu0 0
      %3327 = vmatpush1.bf16.msra.mxu0 %v2024
      %3328 = vmatprep.subr.bf16.mxu0 0
      %3329 = vmatpush1.bf16.msra.mxu0 %v2025
      %3330 = vmatprep.subr.bf16.mxu0 0
      %3331 = vmatpush1.bf16.msra.mxu0 %v2026
      %3332 = vmatprep.subr.bf16.mxu0 0
      %3333 = vmatpush1.bf16.msra.mxu0 %v2027
      %3334 = vmatprep.subr.bf16.mxu0 0
      %3335 = vmatpush1.bf16.msra.mxu0 0
      %3336 = vmatprep.subr.bf16.mxu0 0
      %3337 = vmatpush1.bf16.msra.mxu0 0
      %3338 = vmatprep.subr.bf16.mxu0 0
      %3339 = vmatpush1.bf16.msra.mxu0 0
      %3340 = vmatprep.subr.bf16.mxu0 0
      %3341 = vmatpush1.bf16.msra.mxu0 0
      %3342 = vmatprep.subr.bf16.mxu0 0
      %3343 = vmatpush1.bf16.msra.mxu0 0
      %3344 = vmatprep.subr.bf16.mxu0 0
      %3345 = vmatpush1.bf16.msra.mxu0 0
      %3346 = vmatprep.subr.bf16.mxu0 0
      %3347 = vmatpush1.bf16.msra.mxu0 0
      %3348 = vmatprep.subr.bf16.mxu0 0
      %3349 = vmatpush1.bf16.msra.mxu0 0
      %3350 = vmatprep.subr.bf16.mxu0 0
      %3351 = vmatpush1.bf16.msra.mxu0 0
      %3352 = vmatprep.subr.bf16.mxu0 0
      %3353 = vmatpush1.bf16.msra.mxu0 0
      %3354 = vmatprep.mubr.bf16.mxu0 0
      %3355 = vmatmul.mubr.bf16.gmra.mrb[0].mxu0 %v3320
      %v3356 = vpop.f32.mrb[0].mxu0
      %v3357 = vadd.f32 0.0, %v3356
      %v3358 = vpop.f32.mrb[0].mxu0
      %v3359 = vpop.f32.mrb[0].mxu0
      %v3360 = vpop.f32.mrb[0].mxu0
      %3361 = vdwg.mxu0
      %v3363 = vsel %vm3060, %v3051, 0
      %3365 = vmatprep.subr.bf16.mxu0 0
      %3366 = vmatpush1.bf16.msra.mxu0 %v2028
      %3367 = vmatprep.subr.bf16.mxu0 0
      %3368 = vmatpush1.bf16.msra.mxu0 %v2029
      %3369 = vmatprep.subr.bf16.mxu0 0
      %3370 = vmatpush1.bf16.msra.mxu0 %v2030
      %3371 = vmatprep.subr.bf16.mxu0 0
      %3372 = vmatpush1.bf16.msra.mxu0 %v2031
      %3373 = vmatprep.subr.bf16.mxu0 0
      %3374 = vmatpush1.bf16.msra.mxu0 %v2032
      %3375 = vmatprep.subr.bf16.mxu0 0
      %3376 = vmatpush1.bf16.msra.mxu0 %v2033
      %3377 = vmatprep.subr.bf16.mxu0 0
      %3378 = vmatpush1.bf16.msra.mxu0 0
      %3379 = vmatprep.subr.bf16.mxu0 0
      %3380 = vmatpush1.bf16.msra.mxu0 0
      %3381 = vmatprep.subr.bf16.mxu0 0
      %3382 = vmatpush1.bf16.msra.mxu0 0
      %3383 = vmatprep.subr.bf16.mxu0 0
      %3384 = vmatpush1.bf16.msra.mxu0 0
      %3385 = vmatprep.subr.bf16.mxu0 0
      %3386 = vmatpush1.bf16.msra.mxu0 0
      %3387 = vmatprep.subr.bf16.mxu0 0
      %3388 = vmatpush1.bf16.msra.mxu0 0
      %3389 = vmatprep.subr.bf16.mxu0 0
      %3390 = vmatpush1.bf16.msra.mxu0 0
      %3391 = vmatprep.subr.bf16.mxu0 0
      %3392 = vmatpush1.bf16.msra.mxu0 0
      %3393 = vmatprep.subr.bf16.mxu0 0
      %3394 = vmatpush1.bf16.msra.mxu0 0
      %3395 = vmatprep.subr.bf16.mxu0 0
      %3396 = vmatpush1.bf16.msra.mxu0 0
      %3397 = vmatprep.mubr.bf16.mxu0 0
      %3398 = vmatmul.mubr.bf16.gmra.mrb[0].mxu0 %v3363
      %v3399 = vpop.f32.mrb[0].mxu0
      %v3400 = vadd.f32 0.0, %v3399
      %v3401 = vpop.f32.mrb[0].mxu0
      %v3402 = vpop.f32.mrb[0].mxu0
      %v3403 = vpop.f32.mrb[0].mxu0
      %3404 = vdwg.mxu0
      %v3406 = vsel %vm3060, %v3052, 0
      %3408 = vmatprep.subr.bf16.mxu0 0
      %3409 = vmatpush1.bf16.msra.mxu0 %v2034
      %3410 = vmatprep.subr.bf16.mxu0 0
      %3411 = vmatpush1.bf16.msra.mxu0 %v2035
      %3412 = vmatprep.subr.bf16.mxu0 0
      %3413 = vmatpush1.bf16.msra.mxu0 %v2036
      %3414 = vmatprep.subr.bf16.mxu0 0
      %3415 = vmatpush1.bf16.msra.mxu0 %v2037
      %3416 = vmatprep.subr.bf16.mxu0 0
      %3417 = vmatpush1.bf16.msra.mxu0 %v2038
      %3418 = vmatprep.subr.bf16.mxu0 0
      %3419 = vmatpush1.bf16.msra.mxu0 %v2039
      %3420 = vmatprep.subr.bf16.mxu0 0
      %3421 = vmatpush1.bf16.msra.mxu0 0
      %3422 = vmatprep.subr.bf16.mxu0 0
      %3423 = vmatpush1.bf16.msra.mxu0 0
      %3424 = vmatprep.subr.bf16.mxu0 0
      %3425 = vmatpush1.bf16.msra.mxu0 0
      %3426 = vmatprep.subr.bf16.mxu0 0
      %3427 = vmatpush1.bf16.msra.mxu0 0
      %3428 = vmatprep.subr.bf16.mxu0 0
      %3429 = vmatpush1.bf16.msra.mxu0 0
      %3430 = vmatprep.subr.bf16.mxu0 0
      %3431 = vmatpush1.bf16.msra.mxu0 0
      %3432 = vmatprep.subr.bf16.mxu0 0
      %3433 = vmatpush1.bf16.msra.mxu0 0
      %3434 = vmatprep.subr.bf16.mxu0 0
      %3435 = vmatpush1.bf16.msra.mxu0 0
      %3436 = vmatprep.subr.bf16.mxu0 0
      %3437 = vmatpush1.bf16.msra.mxu0 0
      %3438 = vmatprep.subr.bf16.mxu0 0
      %3439 = vmatpush1.bf16.msra.mxu0 0
      %3440 = vmatprep.mubr.bf16.mxu0 0
      %3441 = vmatmul.mubr.bf16.gmra.mrb[0].mxu0 %v3406
      %v3442 = vpop.f32.mrb[0].mxu0
      %v3443 = vadd.f32 0.0, %v3442
      %v3444 = vpop.f32.mrb[0].mxu0
      %v3445 = vpop.f32.mrb[0].mxu0
      %v3446 = vpop.f32.mrb[0].mxu0
      %3447 = vdwg.mxu0
      %v3449 = vsel %vm3060, %v3053, 0
      %3451 = vmatprep.subr.bf16.mxu0 0
      %3452 = vmatpush1.bf16.msra.mxu0 %v2040
      %3453 = vmatprep.subr.bf16.mxu0 0
      %3454 = vmatpush1.bf16.msra.mxu0 %v2041
      %3455 = vmatprep.subr.bf16.mxu0 0
      %3456 = vmatpush1.bf16.msra.mxu0 %v2042
      %3457 = vmatprep.subr.bf16.mxu0 0
      %3458 = vmatpush1.bf16.msra.mxu0 %v2043
      %3459 = vmatprep.subr.bf16.mxu0 0
      %3460 = vmatpush1.bf16.msra.mxu0 %v2044
      %3461 = vmatprep.subr.bf16.mxu0 0
      %3462 = vmatpush1.bf16.msra.mxu0 %v2045
      %3463 = vmatprep.subr.bf16.mxu0 0
      %3464 = vmatpush1.bf16.msra.mxu0 0
      %3465 = vmatprep.subr.bf16.mxu0 0
      %3466 = vmatpush1.bf16.msra.mxu0 0
      %3467 = vmatprep.subr.bf16.mxu0 0
      %3468 = vmatpush1.bf16.msra.mxu0 0
      %3469 = vmatprep.subr.bf16.mxu0 0
      %3470 = vmatpush1.bf16.msra.mxu0 0
      %3471 = vmatprep.subr.bf16.mxu0 0
      %3472 = vmatpush1.bf16.msra.mxu0 0
      %3473 = vmatprep.subr.bf16.mxu0 0
      %3474 = vmatpush1.bf16.msra.mxu0 0
      %3475 = vmatprep.subr.bf16.mxu0 0
      %3476 = vmatpush1.bf16.msra.mxu0 0
      %3477 = vmatprep.subr.bf16.mxu0 0
      %3478 = vmatpush1.bf16.msra.mxu0 0
      %3479 = vmatprep.subr.bf16.mxu0 0
      %3480 = vmatpush1.bf16.msra.mxu0 0
      %3481 = vmatprep.subr.bf16.mxu0 0
      %3482 = vmatpush1.bf16.msra.mxu0 0
      %3483 = vmatprep.mubr.bf16.mxu0 0
      %3484 = vmatmul.mubr.bf16.gmra.mrb[0].mxu0 %v3449
      %v3485 = vpop.f32.mrb[0].mxu0
      %v3486 = vadd.f32 0.0, %v3485
      %v3487 = vpop.f32.mrb[0].mxu0
      %v3488 = vpop.f32.mrb[0].mxu0
      %v3489 = vpop.f32.mrb[0].mxu0
      %3490 = vdwg.mxu0
      %v3492 = vsel %vm3060, %v3054, 0
      %3494 = vmatprep.subr.bf16.mxu0 0
      %3495 = vmatpush1.bf16.msra.mxu0 %v2046
      %3496 = vmatprep.subr.bf16.mxu0 0
      %3497 = vmatpush1.bf16.msra.mxu0 %v2047
      %3498 = vmatprep.subr.bf16.mxu0 0
      %3499 = vmatpush1.bf16.msra.mxu0 %v2048
      %3500 = vmatprep.subr.bf16.mxu0 0
      %3501 = vmatpush1.bf16.msra.mxu0 %v2049
      %3502 = vmatprep.subr.bf16.mxu0 0
      %3503 = vmatpush1.bf16.msra.mxu0 %v2050
      %3504 = vmatprep.subr.bf16.mxu0 0
      %3505 = vmatpush1.bf16.msra.mxu0 %v2051
      %3506 = vmatprep.subr.bf16.mxu0 0
      %3507 = vmatpush1.bf16.msra.mxu0 0
      %3508 = vmatprep.subr.bf16.mxu0 0
      %3509 = vmatpush1.bf16.msra.mxu0 0
      %3510 = vmatprep.subr.bf16.mxu0 0
      %3511 = vmatpush1.bf16.msra.mxu0 0
      %3512 = vmatprep.subr.bf16.mxu0 0
      %3513 = vmatpush1.bf16.msra.mxu0 0
      %3514 = vmatprep.subr.bf16.mxu0 0
      %3515 = vmatpush1.bf16.msra.mxu0 0
      %3516 = vmatprep.subr.bf16.mxu0 0
      %3517 = vmatpush1.bf16.msra.mxu0 0
      %3518 = vmatprep.subr.bf16.mxu0 0
      %3519 = vmatpush1.bf16.msra.mxu0 0
      %3520 = vmatprep.subr.bf16.mxu0 0
      %3521 = vmatpush1.bf16.msra.mxu0 0
      %3522 = vmatprep.subr.bf16.mxu0 0
      %3523 = vmatpush1.bf16.msra.mxu0 0
      %3524 = vmatprep.subr.bf16.mxu0 0
      %3525 = vmatpush1.bf16.msra.mxu0 0
      %3526 = vmatprep.mubr.bf16.mxu0 0
      %3527 = vmatmul.mubr.bf16.gmra.mrb[0].mxu0 %v3492
      %v3528 = vpop.f32.mrb[0].mxu0
      %v3529 = vadd.f32 0.0, %v3528
      %v3530 = vpop.f32.mrb[0].mxu0
      %v3531 = vpop.f32.mrb[0].mxu0
      %v3532 = vpop.f32.mrb[0].mxu0
      %3533 = vdwg.mxu0
      %v3535 = vsel %vm3060, %v3055, 0
      %3537 = vmatprep.subr.bf16.mxu0 0
      %3538 = vmatpush1.bf16.msra.mxu0 %v2052
      %3539 = vmatprep.subr.bf16.mxu0 0
      %3540 = vmatpush1.bf16.msra.mxu0 %v2053
      %3541 = vmatprep.subr.bf16.mxu0 0
      %3542 = vmatpush1.bf16.msra.mxu0 %v2054
      %3543 = vmatprep.subr.bf16.mxu0 0
      %3544 = vmatpush1.bf16.msra.mxu0 %v2055
      %3545 = vmatprep.subr.bf16.mxu0 0
      %3546 = vmatpush1.bf16.msra.mxu0 %v2056
      %3547 = vmatprep.subr.bf16.mxu0 0
      %3548 = vmatpush1.bf16.msra.mxu0 %v2057
      %3549 = vmatprep.subr.bf16.mxu0 0
      %3550 = vmatpush1.bf16.msra.mxu0 0
      %3551 = vmatprep.subr.bf16.mxu0 0
      %3552 = vmatpush1.bf16.msra.mxu0 0
      %3553 = vmatprep.subr.bf16.mxu0 0
      %3554 = vmatpush1.bf16.msra.mxu0 0
      %3555 = vmatprep.subr.bf16.mxu0 0
      %3556 = vmatpush1.bf16.msra.mxu0 0
      %3557 = vmatprep.subr.bf16.mxu0 0
      %3558 = vmatpush1.bf16.msra.mxu0 0
      %3559 = vmatprep.subr.bf16.mxu0 0
      %3560 = vmatpush1.bf16.msra.mxu0 0
      %3561 = vmatprep.subr.bf16.mxu0 0
      %3562 = vmatpush1.bf16.msra.mxu0 0
      %3563 = vmatprep.subr.bf16.mxu0 0
      %3564 = vmatpush1.bf16.msra.mxu0 0
      %3565 = vmatprep.subr.bf16.mxu0 0
      %3566 = vmatpush1.bf16.msra.mxu0 0
      %3567 = vmatprep.subr.bf16.mxu0 0
      %3568 = vmatpush1.bf16.msra.mxu0 0
      %3569 = vmatprep.mubr.bf16.mxu0 0
      %3570 = vmatmul.mubr.bf16.gmra.mrb[0].mxu0 %v3535
      %v3571 = vpop.f32.mrb[0].mxu0
      %v3572 = vadd.f32 0.0, %v3571
      %v3573 = vpop.f32.mrb[0].mxu0
      %v3574 = vpop.f32.mrb[0].mxu0
      %v3575 = vpop.f32.mrb[0].mxu0
      %3576 = vdwg.mxu0
      %v3578 = vsel %vm3060, %v3056, 0
      %3580 = vmatprep.subr.bf16.mxu0 0
      %3581 = vmatpush1.bf16.msra.mxu0 %v2058
      %3582 = vmatprep.subr.bf16.mxu0 0
      %3583 = vmatpush1.bf16.msra.mxu0 %v2059
      %3584 = vmatprep.subr.bf16.mxu0 0
      %3585 = vmatpush1.bf16.msra.mxu0 %v2060
      %3586 = vmatprep.subr.bf16.mxu0 0
      %3587 = vmatpush1.bf16.msra.mxu0 %v2061
      %3588 = vmatprep.subr.bf16.mxu0 0
      %3589 = vmatpush1.bf16.msra.mxu0 %v2062
      %3590 = vmatprep.subr.bf16.mxu0 0
      %3591 = vmatpush1.bf16.msra.mxu0 %v2063
      %3592 = vmatprep.subr.bf16.mxu0 0
      %3593 = vmatpush1.bf16.msra.mxu0 0
      %3594 = vmatprep.subr.bf16.mxu0 0
      %3595 = vmatpush1.bf16.msra.mxu0 0
      %3596 = vmatprep.subr.bf16.mxu0 0
      %3597 = vmatpush1.bf16.msra.mxu0 0
      %3598 = vmatprep.subr.bf16.mxu0 0
      %3599 = vmatpush1.bf16.msra.mxu0 0
      %3600 = vmatprep.subr.bf16.mxu0 0
      %3601 = vmatpush1.bf16.msra.mxu0 0
      %3602 = vmatprep.subr.bf16.mxu0 0
      %3603 = vmatpush1.bf16.msra.mxu0 0
      %3604 = vmatprep.subr.bf16.mxu0 0
      %3605 = vmatpush1.bf16.msra.mxu0 0
      %3606 = vmatprep.subr.bf16.mxu0 0
      %3607 = vmatpush1.bf16.msra.mxu0 0
      %3608 = vmatprep.subr.bf16.mxu0 0
      %3609 = vmatpush1.bf16.msra.mxu0 0
      %3610 = vmatprep.subr.bf16.mxu0 0
      %3611 = vmatpush1.bf16.msra.mxu0 0
      %3612 = vmatprep.mubr.bf16.mxu0 0
      %3613 = vmatmul.mubr.bf16.gmra.mrb[0].mxu0 %v3578
      %v3614 = vpop.f32.mrb[0].mxu0
      %v3615 = vadd.f32 0.0, %v3614
      %v3616 = vpop.f32.mrb[0].mxu0
      %v3617 = vpop.f32.mrb[0].mxu0
      %v3618 = vpop.f32.mrb[0].mxu0
      %3619 = vdwg.mxu0
      %v3621 = vsel %vm3060, %v3057, 0
      %3623 = vmatprep.subr.bf16.mxu0 0
      %3624 = vmatpush1.bf16.msra.mxu0 %v2064
      %3625 = vmatprep.subr.bf16.mxu0 0
      %3626 = vmatpush1.bf16.msra.mxu0 %v2065
      %3627 = vmatprep.subr.bf16.mxu0 0
      %3628 = vmatpush1.bf16.msra.mxu0 %v2066
      %3629 = vmatprep.subr.bf16.mxu0 0
      %3630 = vmatpush1.bf16.msra.mxu0 %v2067
      %3631 = vmatprep.subr.bf16.mxu0 0
      %3632 = vmatpush1.bf16.msra.mxu0 %v2068
      %3633 = vmatprep.subr.bf16.mxu0 0
      %3634 = vmatpush1.bf16.msra.mxu0 %v2069
      %3635 = vmatprep.subr.bf16.mxu0 0
      %3636 = vmatpush1.bf16.msra.mxu0 0
      %3637 = vmatprep.subr.bf16.mxu0 0
      %3638 = vmatpush1.bf16.msra.mxu0 0
      %3639 = vmatprep.subr.bf16.mxu0 0
      %3640 = vmatpush1.bf16.msra.mxu0 0
      %3641 = vmatprep.subr.bf16.mxu0 0
      %3642 = vmatpush1.bf16.msra.mxu0 0
      %3643 = vmatprep.subr.bf16.mxu0 0
      %3644 = vmatpush1.bf16.msra.mxu0 0
      %3645 = vmatprep.subr.bf16.mxu0 0
      %3646 = vmatpush1.bf16.msra.mxu0 0
      %3647 = vmatprep.subr.bf16.mxu0 0
      %3648 = vmatpush1.bf16.msra.mxu0 0
      %3649 = vmatprep.subr.bf16.mxu0 0
      %3650 = vmatpush1.bf16.msra.mxu0 0
      %3651 = vmatprep.subr.bf16.mxu0 0
      %3652 = vmatpush1.bf16.msra.mxu0 0
      %3653 = vmatprep.subr.bf16.mxu0 0
      %3654 = vmatpush1.bf16.msra.mxu0 0
      %3655 = vmatprep.mubr.bf16.mxu0 0
      %3656 = vmatmul.mubr.bf16.gmra.mrb[0].mxu0 %v3621
      %v3657 = vpop.f32.mrb[0].mxu0
      %v3658 = vadd.f32 0.0, %v3657
      %v3659 = vpop.f32.mrb[0].mxu0
      %v3660 = vpop.f32.mrb[0].mxu0
      %v3661 = vpop.f32.mrb[0].mxu0
      %3662 = vdwg.mxu0
      %v3664 = vsel %vm3060, %v3058, 0
      %3666 = vmatprep.subr.bf16.mxu0 0
      %3667 = vmatpush1.bf16.msra.mxu0 %v2070
      %3668 = vmatprep.subr.bf16.mxu0 0
      %3669 = vmatpush1.bf16.msra.mxu0 %v2071
      %3670 = vmatprep.subr.bf16.mxu0 0
      %3671 = vmatpush1.bf16.msra.mxu0 %v2072
      %3672 = vmatprep.subr.bf16.mxu0 0
      %3673 = vmatpush1.bf16.msra.mxu0 %v2073
      %3674 = vmatprep.subr.bf16.mxu0 0
      %3675 = vmatpush1.bf16.msra.mxu0 %v2074
      %3676 = vmatprep.subr.bf16.mxu0 0
      %3677 = vmatpush1.bf16.msra.mxu0 %v2075
      %3678 = vmatprep.subr.bf16.mxu0 0
      %3679 = vmatpush1.bf16.msra.mxu0 0
      %3680 = vmatprep.subr.bf16.mxu0 0
      %3681 = vmatpush1.bf16.msra.mxu0 0
      %3682 = vmatprep.subr.bf16.mxu0 0
      %3683 = vmatpush1.bf16.msra.mxu0 0
      %3684 = vmatprep.subr.bf16.mxu0 0
      %3685 = vmatpush1.bf16.msra.mxu0 0
      %3686 = vmatprep.subr.bf16.mxu0 0
      %3687 = vmatpush1.bf16.msra.mxu0 0
      %3688 = vmatprep.subr.bf16.mxu0 0
      %3689 = vmatpush1.bf16.msra.mxu0 0
      %3690 = vmatprep.subr.bf16.mxu0 0
      %3691 = vmatpush1.bf16.msra.mxu0 0
      %3692 = vmatprep.subr.bf16.mxu0 0
      %3693 = vmatpush1.bf16.msra.mxu0 0
      %3694 = vmatprep.subr.bf16.mxu0 0
      %3695 = vmatpush1.bf16.msra.mxu0 0
      %3696 = vmatprep.subr.bf16.mxu0 0
      %3697 = vmatpush1.bf16.msra.mxu0 0
      %3698 = vmatprep.mubr.bf16.mxu0 0
      %3699 = vmatmul.mubr.bf16.gmra.mrb[0].mxu0 %v3664
      %v3700 = vpop.f32.mrb[0].mxu0
      %v3701 = vadd.f32 0.0, %v3700
      %v3702 = vpop.f32.mrb[0].mxu0
      %v3703 = vpop.f32.mrb[0].mxu0
      %v3704 = vpop.f32.mrb[0].mxu0
      %3705 = vdwg.mxu0
      %v3707 = vsel %vm3060, %v3059, 0
      %3709 = vmatprep.subr.bf16.mxu0 0
      %3710 = vmatpush1.bf16.msra.mxu0 %v2076
      %3711 = vmatprep.subr.bf16.mxu0 0
      %3712 = vmatpush1.bf16.msra.mxu0 %v2077
      %3713 = vmatprep.subr.bf16.mxu0 0
      %3714 = vmatpush1.bf16.msra.mxu0 %v2078
      %3715 = vmatprep.subr.bf16.mxu0 0
      %3716 = vmatpush1.bf16.msra.mxu0 %v2079
      %3717 = vmatprep.subr.bf16.mxu0 0
      %3718 = vmatpush1.bf16.msra.mxu0 %v2080
      %3719 = vmatprep.subr.bf16.mxu0 0
      %3720 = vmatpush1.bf16.msra.mxu0 %v2081
      %3721 = vmatprep.subr.bf16.mxu0 0
      %3722 = vmatpush1.bf16.msra.mxu0 0
      %3723 = vmatprep.subr.bf16.mxu0 0
      %3724 = vmatpush1.bf16.msra.mxu0 0
      %3725 = vmatprep.subr.bf16.mxu0 0
      %3726 = vmatpush1.bf16.msra.mxu0 0
      %3727 = vmatprep.subr.bf16.mxu0 0
      %3728 = vmatpush1.bf16.msra.mxu0 0
      %3729 = vmatprep.subr.bf16.mxu0 0
      %3730 = vmatpush1.bf16.msra.mxu0 0
      %3731 = vmatprep.subr.bf16.mxu0 0
      %3732 = vmatpush1.bf16.msra.mxu0 0
      %3733 = vmatprep.subr.bf16.mxu0 0
      %3734 = vmatpush1.bf16.msra.mxu0 0
      %3735 = vmatprep.subr.bf16.mxu0 0
      %3736 = vmatpush1.bf16.msra.mxu0 0
      %3737 = vmatprep.subr.bf16.mxu0 0
      %3738 = vmatpush1.bf16.msra.mxu0 0
      %3739 = vmatprep.subr.bf16.mxu0 0
      %3740 = vmatpush1.bf16.msra.mxu0 0
      %3741 = vmatprep.mubr.bf16.mxu0 0
      %3742 = vmatmul.mubr.bf16.gmra.mrb[0].mxu0 %v3707
      %v3743 = vpop.f32.mrb[0].mxu0
      %v3744 = vadd.f32 0.0, %v3743
      %v3745 = vpop.f32.mrb[0].mxu0
      %v3746 = vpop.f32.mrb[0].mxu0
      %v3747 = vpop.f32.mrb[0].mxu0
      %3748 = vdwg.mxu0
      %v3749 = vld [vmem:[%s331] sm:$0xf]
      %v3750 = vld [vmem:[%s331 + $0x4] sm:$0xf]
      %v3751 = vld [vmem:[%s331 + $0x8] sm:$0xf]
      %v3752 = vld [vmem:[%s331 + $0xc] sm:$0xf]
      %v3753 = vld [vmem:[%s331 + $0x10] sm:$0xf]
      %v3754 = vld [vmem:[%s331 + $0x14] sm:$0xf]
      %v3755 = vld [vmem:[%s331 + $0x18] sm:$0xf]
      %v3756 = vld [vmem:[%s331 + $0x1c] sm:$0xf]
      %v3757 = vld [vmem:[%s331 + $0x20] sm:$0xf]
      %v3758 = vld [vmem:[%s331 + $0x24] sm:$0xf]
      %v3759 = vld [vmem:[%s331 + $0x28] sm:$0xf]
      %v3760 = vld [vmem:[%s331 + $0x2c] sm:$0xf]
      %v3761 = vld [vmem:[%s331 + $0x30] sm:$0xf]
      %v3762 = vld [vmem:[%s331 + $0x34] sm:$0xf]
      %v3763 = vld [vmem:[%s331 + $0x38] sm:$0xf]
      %v3764 = vld [vmem:[%s331 + $0x3c] sm:$0xf]
      %3765 = vmatprep.subr.mxu0 0.0
      %3766 = vmatpush1.xpose.msra.mxu0 %v3099
      %3767 = vmatprep.subr.mxu0 0.0
      %3768 = vmatpush1.xpose.msra.mxu0 0.0
      %3769 = vmatprep.subr.mxu0 0.0
      %3770 = vmatpush1.xpose.msra.mxu0 0.0
      %3771 = vmatprep.subr.mxu0 0.0
      %3772 = vmatpush1.xpose.msra.mxu0 0.0
      %3773 = vmatprep.subr.mxu0 0.0
      %3774 = vmatpush1.xpose.msra.mxu0 0.0
      %3775 = vmatprep.subr.mxu0 0.0
      %3776 = vmatpush1.xpose.msra.mxu0 0.0
      %3777 = vmatprep.subr.mxu0 0.0
      %3778 = vmatpush1.xpose.msra.mxu0 0.0
      %3779 = vmatprep.subr.mxu0 0.0
      %3780 = vmatpush1.xpose.msra.mxu0 0.0
      %3781 = vmatprep.subr.mxu0 0.0
      %3782 = vmatpush1.xpose.msra.mxu0 0.0
      %3783 = vmatprep.subr.mxu0 0.0
      %3784 = vmatpush1.xpose.msra.mxu0 0.0
      %3785 = vmatprep.subr.mxu0 0.0
      %3786 = vmatpush1.xpose.msra.mxu0 0.0
      %3787 = vmatprep.subr.mxu0 0.0
      %3788 = vmatpush1.xpose.msra.mxu0 0.0
      %3789 = vmatprep.subr.mxu0 0.0
      %3790 = vmatpush1.xpose.msra.mxu0 0.0
      %3791 = vmatprep.subr.mxu0 0.0
      %3792 = vmatpush1.xpose.msra.mxu0 0.0
      %3793 = vmatprep.subr.mxu0 0.0
      %3794 = vmatpush1.xpose.msra.mxu0 0.0
      %3795 = vmatprep.subr.mxu0 0.0
      %3796 = vmatpush1.xpose.msra.mxu0 0.0
      %3797 = vmatprep.subr.mxu0 0.0
      %3798 = vmatpush1.xpose.msra.mxu0 0.0
      %3799 = vmatprep.subr.mxu0 0.0
      %3800 = vmatpush1.xpose.msra.mxu0 0.0
      %3801 = vmatprep.subr.mxu0 0.0
      %3802 = vmatpush1.xpose.msra.mxu0 0.0
      %3803 = vmatprep.subr.mxu0 0.0
      %3804 = vmatpush1.xpose.msra.mxu0 0.0
      %3805 = vmatprep.subr.mxu0 0.0
      %3806 = vmatpush1.xpose.msra.mxu0 0.0
      %3807 = vmatprep.subr.mxu0 0.0
      %3808 = vmatpush1.xpose.msra.mxu0 0.0
      %3809 = vmatprep.subr.mxu0 0.0
      %3810 = vmatpush1.xpose.msra.mxu0 0.0
      %3811 = vmatprep.subr.mxu0 0.0
      %3812 = vmatpush1.xpose.msra.mxu0 0.0
      %3813 = vmatprep.subr.mxu0 0.0
      %3814 = vmatpush1.xpose.msra.mxu0 0.0
      %3815 = vmatprep.subr.mxu0 0.0
      %3816 = vmatpush1.xpose.msra.mxu0 0.0
      %3817 = vmatprep.subr.mxu0 0.0
      %3818 = vmatpush1.xpose.msra.mxu0 0.0
      %3819 = vmatprep.subr.mxu0 0.0
      %3820 = vmatpush1.xpose.msra.mxu0 0.0
      %3821 = vmatprep.subr.mxu0 0.0
      %3822 = vmatpush1.xpose.msra.mxu0 0.0
      %3823 = vmatprep.subr.mxu0 0.0
      %3824 = vmatpush1.xpose.msra.mxu0 0.0
      %3825 = vmatprep.subr.mxu0 0.0
      %3826 = vmatpush1.xpose.msra.mxu0 0.0
      %3827 = vmatprep.subr.mxu0 0.0
      %3828 = vmatpush1.xpose.msra.mxu0 0.0
      %3829 = vmatprep.mubr.f32.mxu0 0.0
      %3830 = vmatmul.mubr.f32.gmra.mrb[0].mxu0 %v3749
      %v3831 = vpop.f32.mrb[0].mxu0
      %v3832 = vadd.f32 0.0, %v3831
      %v3833 = vpop.f32.mrb[0].mxu0
      %3834 = vdwg.mxu0
      %3835 = vmatprep.subr.mxu0 0.0
      %3836 = vmatpush1.xpose.msra.mxu0 %v3142
      %3837 = vmatprep.subr.mxu0 0.0
      %3838 = vmatpush1.xpose.msra.mxu0 0.0
      %3839 = vmatprep.subr.mxu0 0.0
      %3840 = vmatpush1.xpose.msra.mxu0 0.0
      %3841 = vmatprep.subr.mxu0 0.0
      %3842 = vmatpush1.xpose.msra.mxu0 0.0
      %3843 = vmatprep.subr.mxu0 0.0
      %3844 = vmatpush1.xpose.msra.mxu0 0.0
      %3845 = vmatprep.subr.mxu0 0.0
      %3846 = vmatpush1.xpose.msra.mxu0 0.0
      %3847 = vmatprep.subr.mxu0 0.0
      %3848 = vmatpush1.xpose.msra.mxu0 0.0
      %3849 = vmatprep.subr.mxu0 0.0
      %3850 = vmatpush1.xpose.msra.mxu0 0.0
      %3851 = vmatprep.subr.mxu0 0.0
      %3852 = vmatpush1.xpose.msra.mxu0 0.0
      %3853 = vmatprep.subr.mxu0 0.0
      %3854 = vmatpush1.xpose.msra.mxu0 0.0
      %3855 = vmatprep.subr.mxu0 0.0
      %3856 = vmatpush1.xpose.msra.mxu0 0.0
      %3857 = vmatprep.subr.mxu0 0.0
      %3858 = vmatpush1.xpose.msra.mxu0 0.0
      %3859 = vmatprep.subr.mxu0 0.0
      %3860 = vmatpush1.xpose.msra.mxu0 0.0
      %3861 = vmatprep.subr.mxu0 0.0
      %3862 = vmatpush1.xpose.msra.mxu0 0.0
      %3863 = vmatprep.subr.mxu0 0.0
      %3864 = vmatpush1.xpose.msra.mxu0 0.0
      %3865 = vmatprep.subr.mxu0 0.0
      %3866 = vmatpush1.xpose.msra.mxu0 0.0
      %3867 = vmatprep.subr.mxu0 0.0
      %3868 = vmatpush1.xpose.msra.mxu0 0.0
      %3869 = vmatprep.subr.mxu0 0.0
      %3870 = vmatpush1.xpose.msra.mxu0 0.0
      %3871 = vmatprep.subr.mxu0 0.0
      %3872 = vmatpush1.xpose.msra.mxu0 0.0
      %3873 = vmatprep.subr.mxu0 0.0
      %3874 = vmatpush1.xpose.msra.mxu0 0.0
      %3875 = vmatprep.subr.mxu0 0.0
      %3876 = vmatpush1.xpose.msra.mxu0 0.0
      %3877 = vmatprep.subr.mxu0 0.0
      %3878 = vmatpush1.xpose.msra.mxu0 0.0
      %3879 = vmatprep.subr.mxu0 0.0
      %3880 = vmatpush1.xpose.msra.mxu0 0.0
      %3881 = vmatprep.subr.mxu0 0.0
      %3882 = vmatpush1.xpose.msra.mxu0 0.0
      %3883 = vmatprep.subr.mxu0 0.0
      %3884 = vmatpush1.xpose.msra.mxu0 0.0
      %3885 = vmatprep.subr.mxu0 0.0
      %3886 = vmatpush1.xpose.msra.mxu0 0.0
      %3887 = vmatprep.subr.mxu0 0.0
      %3888 = vmatpush1.xpose.msra.mxu0 0.0
      %3889 = vmatprep.subr.mxu0 0.0
      %3890 = vmatpush1.xpose.msra.mxu0 0.0
      %3891 = vmatprep.subr.mxu0 0.0
      %3892 = vmatpush1.xpose.msra.mxu0 0.0
      %3893 = vmatprep.subr.mxu0 0.0
      %3894 = vmatpush1.xpose.msra.mxu0 0.0
      %3895 = vmatprep.subr.mxu0 0.0
      %3896 = vmatpush1.xpose.msra.mxu0 0.0
      %3897 = vmatprep.subr.mxu0 0.0
      %3898 = vmatpush1.xpose.msra.mxu0 0.0
      %3899 = vmatprep.mubr.f32.mxu0 0.0
      %3900 = vmatmul.mubr.f32.gmra.mrb[0].mxu0 %v3750
      %v3901 = vpop.f32.mrb[0].mxu0
      %v3902 = vadd.f32 0.0, %v3901
      %v3903 = vpop.f32.mrb[0].mxu0
      %3904 = vdwg.mxu0
      %3905 = vmatprep.subr.mxu0 0.0
      %3906 = vmatpush1.xpose.msra.mxu0 %v3185
      %3907 = vmatprep.subr.mxu0 0.0
      %3908 = vmatpush1.xpose.msra.mxu0 0.0
      %3909 = vmatprep.subr.mxu0 0.0
      %3910 = vmatpush1.xpose.msra.mxu0 0.0
      %3911 = vmatprep.subr.mxu0 0.0
      %3912 = vmatpush1.xpose.msra.mxu0 0.0
      %3913 = vmatprep.subr.mxu0 0.0
      %3914 = vmatpush1.xpose.msra.mxu0 0.0
      %3915 = vmatprep.subr.mxu0 0.0
      %3916 = vmatpush1.xpose.msra.mxu0 0.0
      %3917 = vmatprep.subr.mxu0 0.0
      %3918 = vmatpush1.xpose.msra.mxu0 0.0
      %3919 = vmatprep.subr.mxu0 0.0
      %3920 = vmatpush1.xpose.msra.mxu0 0.0
      %3921 = vmatprep.subr.mxu0 0.0
      %3922 = vmatpush1.xpose.msra.mxu0 0.0
      %3923 = vmatprep.subr.mxu0 0.0
      %3924 = vmatpush1.xpose.msra.mxu0 0.0
      %3925 = vmatprep.subr.mxu0 0.0
      %3926 = vmatpush1.xpose.msra.mxu0 0.0
      %3927 = vmatprep.subr.mxu0 0.0
      %3928 = vmatpush1.xpose.msra.mxu0 0.0
      %3929 = vmatprep.subr.mxu0 0.0
      %3930 = vmatpush1.xpose.msra.mxu0 0.0
      %3931 = vmatprep.subr.mxu0 0.0
      %3932 = vmatpush1.xpose.msra.mxu0 0.0
      %3933 = vmatprep.subr.mxu0 0.0
      %3934 = vmatpush1.xpose.msra.mxu0 0.0
      %3935 = vmatprep.subr.mxu0 0.0
      %3936 = vmatpush1.xpose.msra.mxu0 0.0
      %3937 = vmatprep.subr.mxu0 0.0
      %3938 = vmatpush1.xpose.msra.mxu0 0.0
      %3939 = vmatprep.subr.mxu0 0.0
      %3940 = vmatpush1.xpose.msra.mxu0 0.0
      %3941 = vmatprep.subr.mxu0 0.0
      %3942 = vmatpush1.xpose.msra.mxu0 0.0
      %3943 = vmatprep.subr.mxu0 0.0
      %3944 = vmatpush1.xpose.msra.mxu0 0.0
      %3945 = vmatprep.subr.mxu0 0.0
      %3946 = vmatpush1.xpose.msra.mxu0 0.0
      %3947 = vmatprep.subr.mxu0 0.0
      %3948 = vmatpush1.xpose.msra.mxu0 0.0
      %3949 = vmatprep.subr.mxu0 0.0
      %3950 = vmatpush1.xpose.msra.mxu0 0.0
      %3951 = vmatprep.subr.mxu0 0.0
      %3952 = vmatpush1.xpose.msra.mxu0 0.0
      %3953 = vmatprep.subr.mxu0 0.0
      %3954 = vmatpush1.xpose.msra.mxu0 0.0
      %3955 = vmatprep.subr.mxu0 0.0
      %3956 = vmatpush1.xpose.msra.mxu0 0.0
      %3957 = vmatprep.subr.mxu0 0.0
      %3958 = vmatpush1.xpose.msra.mxu0 0.0
      %3959 = vmatprep.subr.mxu0 0.0
      %3960 = vmatpush1.xpose.msra.mxu0 0.0
      %3961 = vmatprep.subr.mxu0 0.0
      %3962 = vmatpush1.xpose.msra.mxu0 0.0
      %3963 = vmatprep.subr.mxu0 0.0
      %3964 = vmatpush1.xpose.msra.mxu0 0.0
      %3965 = vmatprep.subr.mxu0 0.0
      %3966 = vmatpush1.xpose.msra.mxu0 0.0
      %3967 = vmatprep.subr.mxu0 0.0
      %3968 = vmatpush1.xpose.msra.mxu0 0.0
      %3969 = vmatprep.mubr.f32.mxu0 0.0
      %3970 = vmatmul.mubr.f32.gmra.mrb[0].mxu0 %v3751
      %v3971 = vpop.f32.mrb[0].mxu0
      %v3972 = vadd.f32 0.0, %v3971
      %v3973 = vpop.f32.mrb[0].mxu0
      %3974 = vdwg.mxu0
      %3975 = vmatprep.subr.mxu0 0.0
      %3976 = vmatpush1.xpose.msra.mxu0 %v3228
      %3977 = vmatprep.subr.mxu0 0.0
      %3978 = vmatpush1.xpose.msra.mxu0 0.0
      %3979 = vmatprep.subr.mxu0 0.0
      %3980 = vmatpush1.xpose.msra.mxu0 0.0
      %3981 = vmatprep.subr.mxu0 0.0
      %3982 = vmatpush1.xpose.msra.mxu0 0.0
      %3983 = vmatprep.subr.mxu0 0.0
      %3984 = vmatpush1.xpose.msra.mxu0 0.0
      %3985 = vmatprep.subr.mxu0 0.0
      %3986 = vmatpush1.xpose.msra.mxu0 0.0
      %3987 = vmatprep.subr.mxu0 0.0
      %3988 = vmatpush1.xpose.msra.mxu0 0.0
      %3989 = vmatprep.subr.mxu0 0.0
      %3990 = vmatpush1.xpose.msra.mxu0 0.0
      %3991 = vmatprep.subr.mxu0 0.0
      %3992 = vmatpush1.xpose.msra.mxu0 0.0
      %3993 = vmatprep.subr.mxu0 0.0
      %3994 = vmatpush1.xpose.msra.mxu0 0.0
      %3995 = vmatprep.subr.mxu0 0.0
      %3996 = vmatpush1.xpose.msra.mxu0 0.0
      %3997 = vmatprep.subr.mxu0 0.0
      %3998 = vmatpush1.xpose.msra.mxu0 0.0
      %3999 = vmatprep.subr.mxu0 0.0
      %4000 = vmatpush1.xpose.msra.mxu0 0.0
      %4001 = vmatprep.subr.mxu0 0.0
      %4002 = vmatpush1.xpose.msra.mxu0 0.0
      %4003 = vmatprep.subr.mxu0 0.0
      %4004 = vmatpush1.xpose.msra.mxu0 0.0
      %4005 = vmatprep.subr.mxu0 0.0
      %4006 = vmatpush1.xpose.msra.mxu0 0.0
      %4007 = vmatprep.subr.mxu0 0.0
      %4008 = vmatpush1.xpose.msra.mxu0 0.0
      %4009 = vmatprep.subr.mxu0 0.0
      %4010 = vmatpush1.xpose.msra.mxu0 0.0
      %4011 = vmatprep.subr.mxu0 0.0
      %4012 = vmatpush1.xpose.msra.mxu0 0.0
      %4013 = vmatprep.subr.mxu0 0.0
      %4014 = vmatpush1.xpose.msra.mxu0 0.0
      %4015 = vmatprep.subr.mxu0 0.0
      %4016 = vmatpush1.xpose.msra.mxu0 0.0
      %4017 = vmatprep.subr.mxu0 0.0
      %4018 = vmatpush1.xpose.msra.mxu0 0.0
      %4019 = vmatprep.subr.mxu0 0.0
      %4020 = vmatpush1.xpose.msra.mxu0 0.0
      %4021 = vmatprep.subr.mxu0 0.0
      %4022 = vmatpush1.xpose.msra.mxu0 0.0
      %4023 = vmatprep.subr.mxu0 0.0
      %4024 = vmatpush1.xpose.msra.mxu0 0.0
      %4025 = vmatprep.subr.mxu0 0.0
      %4026 = vmatpush1.xpose.msra.mxu0 0.0
      %4027 = vmatprep.subr.mxu0 0.0
      %4028 = vmatpush1.xpose.msra.mxu0 0.0
      %4029 = vmatprep.subr.mxu0 0.0
      %4030 = vmatpush1.xpose.msra.mxu0 0.0
      %4031 = vmatprep.subr.mxu0 0.0
      %4032 = vmatpush1.xpose.msra.mxu0 0.0
      %4033 = vmatprep.subr.mxu0 0.0
      %4034 = vmatpush1.xpose.msra.mxu0 0.0
      %4035 = vmatprep.subr.mxu0 0.0
      %4036 = vmatpush1.xpose.msra.mxu0 0.0
      %4037 = vmatprep.subr.mxu0 0.0
      %4038 = vmatpush1.xpose.msra.mxu0 0.0
      %4039 = vmatprep.mubr.f32.mxu0 0.0
      %4040 = vmatmul.mubr.f32.gmra.mrb[0].mxu0 %v3752
      %v4041 = vpop.f32.mrb[0].mxu0
      %v4042 = vadd.f32 0.0, %v4041
      %v4043 = vpop.f32.mrb[0].mxu0
      %4044 = vdwg.mxu0
      %4045 = vmatprep.subr.mxu0 0.0
      %4046 = vmatpush1.xpose.msra.mxu0 %v3271
      %4047 = vmatprep.subr.mxu0 0.0
      %4048 = vmatpush1.xpose.msra.mxu0 0.0
      %4049 = vmatprep.subr.mxu0 0.0
      %4050 = vmatpush1.xpose.msra.mxu0 0.0
      %4051 = vmatprep.subr.mxu0 0.0
      %4052 = vmatpush1.xpose.msra.mxu0 0.0
      %4053 = vmatprep.subr.mxu0 0.0
      %4054 = vmatpush1.xpose.msra.mxu0 0.0
      %4055 = vmatprep.subr.mxu0 0.0
      %4056 = vmatpush1.xpose.msra.mxu0 0.0
      %4057 = vmatprep.subr.mxu0 0.0
      %4058 = vmatpush1.xpose.msra.mxu0 0.0
      %4059 = vmatprep.subr.mxu0 0.0
      %4060 = vmatpush1.xpose.msra.mxu0 0.0
      %4061 = vmatprep.subr.mxu0 0.0
      %4062 = vmatpush1.xpose.msra.mxu0 0.0
      %4063 = vmatprep.subr.mxu0 0.0
      %4064 = vmatpush1.xpose.msra.mxu0 0.0
      %4065 = vmatprep.subr.mxu0 0.0
      %4066 = vmatpush1.xpose.msra.mxu0 0.0
      %4067 = vmatprep.subr.mxu0 0.0
      %4068 = vmatpush1.xpose.msra.mxu0 0.0
      %4069 = vmatprep.subr.mxu0 0.0
      %4070 = vmatpush1.xpose.msra.mxu0 0.0
      %4071 = vmatprep.subr.mxu0 0.0
      %4072 = vmatpush1.xpose.msra.mxu0 0.0
      %4073 = vmatprep.subr.mxu0 0.0
      %4074 = vmatpush1.xpose.msra.mxu0 0.0
      %4075 = vmatprep.subr.mxu0 0.0
      %4076 = vmatpush1.xpose.msra.mxu0 0.0
      %4077 = vmatprep.subr.mxu0 0.0
      %4078 = vmatpush1.xpose.msra.mxu0 0.0
      %4079 = vmatprep.subr.mxu0 0.0
      %4080 = vmatpush1.xpose.msra.mxu0 0.0
      %4081 = vmatprep.subr.mxu0 0.0
      %4082 = vmatpush1.xpose.msra.mxu0 0.0
      %4083 = vmatprep.subr.mxu0 0.0
      %4084 = vmatpush1.xpose.msra.mxu0 0.0
      %4085 = vmatprep.subr.mxu0 0.0
      %4086 = vmatpush1.xpose.msra.mxu0 0.0
      %4087 = vmatprep.subr.mxu0 0.0
      %4088 = vmatpush1.xpose.msra.mxu0 0.0
      %4089 = vmatprep.subr.mxu0 0.0
      %4090 = vmatpush1.xpose.msra.mxu0 0.0
      %4091 = vmatprep.subr.mxu0 0.0
      %4092 = vmatpush1.xpose.msra.mxu0 0.0
      %4093 = vmatprep.subr.mxu0 0.0
      %4094 = vmatpush1.xpose.msra.mxu0 0.0
      %4095 = vmatprep.subr.mxu0 0.0
      %4096 = vmatpush1.xpose.msra.mxu0 0.0
      %4097 = vmatprep.subr.mxu0 0.0
      %4098 = vmatpush1.xpose.msra.mxu0 0.0
      %4099 = vmatprep.subr.mxu0 0.0
      %4100 = vmatpush1.xpose.msra.mxu0 0.0
      %4101 = vmatprep.subr.mxu0 0.0
      %4102 = vmatpush1.xpose.msra.mxu0 0.0
      %4103 = vmatprep.subr.mxu0 0.0
      %4104 = vmatpush1.xpose.msra.mxu0 0.0
      %4105 = vmatprep.subr.mxu0 0.0
      %4106 = vmatpush1.xpose.msra.mxu0 0.0
      %4107 = vmatprep.subr.mxu0 0.0
      %4108 = vmatpush1.xpose.msra.mxu0 0.0
      %4109 = vmatprep.mubr.f32.mxu0 0.0
      %4110 = vmatmul.mubr.f32.gmra.mrb[0].mxu0 %v3753
      %v4111 = vpop.f32.mrb[0].mxu0
      %v4112 = vadd.f32 0.0, %v4111
      %v4113 = vpop.f32.mrb[0].mxu0
      %4114 = vdwg.mxu0
      %4115 = vmatprep.subr.mxu0 0.0
      %4116 = vmatpush1.xpose.msra.mxu0 %v3314
      %4117 = vmatprep.subr.mxu0 0.0
      %4118 = vmatpush1.xpose.msra.mxu0 0.0
      %4119 = vmatprep.subr.mxu0 0.0
      %4120 = vmatpush1.xpose.msra.mxu0 0.0
      %4121 = vmatprep.subr.mxu0 0.0
      %4122 = vmatpush1.xpose.msra.mxu0 0.0
      %4123 = vmatprep.subr.mxu0 0.0
      %4124 = vmatpush1.xpose.msra.mxu0 0.0
      %4125 = vmatprep.subr.mxu0 0.0
      %4126 = vmatpush1.xpose.msra.mxu0 0.0
      %4127 = vmatprep.subr.mxu0 0.0
      %4128 = vmatpush1.xpose.msra.mxu0 0.0
      %4129 = vmatprep.subr.mxu0 0.0
      %4130 = vmatpush1.xpose.msra.mxu0 0.0
      %4131 = vmatprep.subr.mxu0 0.0
      %4132 = vmatpush1.xpose.msra.mxu0 0.0
      %4133 = vmatprep.subr.mxu0 0.0
      %4134 = vmatpush1.xpose.msra.mxu0 0.0
      %4135 = vmatprep.subr.mxu0 0.0
      %4136 = vmatpush1.xpose.msra.mxu0 0.0
      %4137 = vmatprep.subr.mxu0 0.0
      %4138 = vmatpush1.xpose.msra.mxu0 0.0
      %4139 = vmatprep.subr.mxu0 0.0
      %4140 = vmatpush1.xpose.msra.mxu0 0.0
      %4141 = vmatprep.subr.mxu0 0.0
      %4142 = vmatpush1.xpose.msra.mxu0 0.0
      %4143 = vmatprep.subr.mxu0 0.0
      %4144 = vmatpush1.xpose.msra.mxu0 0.0
      %4145 = vmatprep.subr.mxu0 0.0
      %4146 = vmatpush1.xpose.msra.mxu0 0.0
      %4147 = vmatprep.subr.mxu0 0.0
      %4148 = vmatpush1.xpose.msra.mxu0 0.0
      %4149 = vmatprep.subr.mxu0 0.0
      %4150 = vmatpush1.xpose.msra.mxu0 0.0
      %4151 = vmatprep.subr.mxu0 0.0
      %4152 = vmatpush1.xpose.msra.mxu0 0.0
      %4153 = vmatprep.subr.mxu0 0.0
      %4154 = vmatpush1.xpose.msra.mxu0 0.0
      %4155 = vmatprep.subr.mxu0 0.0
      %4156 = vmatpush1.xpose.msra.mxu0 0.0
      %4157 = vmatprep.subr.mxu0 0.0
      %4158 = vmatpush1.xpose.msra.mxu0 0.0
      %4159 = vmatprep.subr.mxu0 0.0
      %4160 = vmatpush1.xpose.msra.mxu0 0.0
      %4161 = vmatprep.subr.mxu0 0.0
      %4162 = vmatpush1.xpose.msra.mxu0 0.0
      %4163 = vmatprep.subr.mxu0 0.0
      %4164 = vmatpush1.xpose.msra.mxu0 0.0
      %4165 = vmatprep.subr.mxu0 0.0
      %4166 = vmatpush1.xpose.msra.mxu0 0.0
      %4167 = vmatprep.subr.mxu0 0.0
      %4168 = vmatpush1.xpose.msra.mxu0 0.0
      %4169 = vmatprep.subr.mxu0 0.0
      %4170 = vmatpush1.xpose.msra.mxu0 0.0
      %4171 = vmatprep.subr.mxu0 0.0
      %4172 = vmatpush1.xpose.msra.mxu0 0.0
      %4173 = vmatprep.subr.mxu0 0.0
      %4174 = vmatpush1.xpose.msra.mxu0 0.0
      %4175 = vmatprep.subr.mxu0 0.0
      %4176 = vmatpush1.xpose.msra.mxu0 0.0
      %4177 = vmatprep.subr.mxu0 0.0
      %4178 = vmatpush1.xpose.msra.mxu0 0.0
      %4179 = vmatprep.mubr.f32.mxu0 0.0
      %4180 = vmatmul.mubr.f32.gmra.mrb[0].mxu0 %v3754
      %v4181 = vpop.f32.mrb[0].mxu0
      %v4182 = vadd.f32 0.0, %v4181
      %v4183 = vpop.f32.mrb[0].mxu0
      %4184 = vdwg.mxu0
      %4185 = vmatprep.subr.mxu0 0.0
      %4186 = vmatpush1.xpose.msra.mxu0 %v3357
      %4187 = vmatprep.subr.mxu0 0.0
      %4188 = vmatpush1.xpose.msra.mxu0 0.0
      %4189 = vmatprep.subr.mxu0 0.0
      %4190 = vmatpush1.xpose.msra.mxu0 0.0
      %4191 = vmatprep.subr.mxu0 0.0
      %4192 = vmatpush1.xpose.msra.mxu0 0.0
      %4193 = vmatprep.subr.mxu0 0.0
      %4194 = vmatpush1.xpose.msra.mxu0 0.0
      %4195 = vmatprep.subr.mxu0 0.0
      %4196 = vmatpush1.xpose.msra.mxu0 0.0
      %4197 = vmatprep.subr.mxu0 0.0
      %4198 = vmatpush1.xpose.msra.mxu0 0.0
      %4199 = vmatprep.subr.mxu0 0.0
      %4200 = vmatpush1.xpose.msra.mxu0 0.0
      %4201 = vmatprep.subr.mxu0 0.0
      %4202 = vmatpush1.xpose.msra.mxu0 0.0
      %4203 = vmatprep.subr.mxu0 0.0
      %4204 = vmatpush1.xpose.msra.mxu0 0.0
      %4205 = vmatprep.subr.mxu0 0.0
      %4206 = vmatpush1.xpose.msra.mxu0 0.0
      %4207 = vmatprep.subr.mxu0 0.0
      %4208 = vmatpush1.xpose.msra.mxu0 0.0
      %4209 = vmatprep.subr.mxu0 0.0
      %4210 = vmatpush1.xpose.msra.mxu0 0.0
      %4211 = vmatprep.subr.mxu0 0.0
      %4212 = vmatpush1.xpose.msra.mxu0 0.0
      %4213 = vmatprep.subr.mxu0 0.0
      %4214 = vmatpush1.xpose.msra.mxu0 0.0
      %4215 = vmatprep.subr.mxu0 0.0
      %4216 = vmatpush1.xpose.msra.mxu0 0.0
      %4217 = vmatprep.subr.mxu0 0.0
      %4218 = vmatpush1.xpose.msra.mxu0 0.0
      %4219 = vmatprep.subr.mxu0 0.0
      %4220 = vmatpush1.xpose.msra.mxu0 0.0
      %4221 = vmatprep.subr.mxu0 0.0
      %4222 = vmatpush1.xpose.msra.mxu0 0.0
      %4223 = vmatprep.subr.mxu0 0.0
      %4224 = vmatpush1.xpose.msra.mxu0 0.0
      %4225 = vmatprep.subr.mxu0 0.0
      %4226 = vmatpush1.xpose.msra.mxu0 0.0
      %4227 = vmatprep.subr.mxu0 0.0
      %4228 = vmatpush1.xpose.msra.mxu0 0.0
      %4229 = vmatprep.subr.mxu0 0.0
      %4230 = vmatpush1.xpose.msra.mxu0 0.0
      %4231 = vmatprep.subr.mxu0 0.0
      %4232 = vmatpush1.xpose.msra.mxu0 0.0
      %4233 = vmatprep.subr.mxu0 0.0
      %4234 = vmatpush1.xpose.msra.mxu0 0.0
      %4235 = vmatprep.subr.mxu0 0.0
      %4236 = vmatpush1.xpose.msra.mxu0 0.0
      %4237 = vmatprep.subr.mxu0 0.0
      %4238 = vmatpush1.xpose.msra.mxu0 0.0
      %4239 = vmatprep.subr.mxu0 0.0
      %4240 = vmatpush1.xpose.msra.mxu0 0.0
      %4241 = vmatprep.subr.mxu0 0.0
      %4242 = vmatpush1.xpose.msra.mxu0 0.0
      %4243 = vmatprep.subr.mxu0 0.0
      %4244 = vmatpush1.xpose.msra.mxu0 0.0
      %4245 = vmatprep.subr.mxu0 0.0
      %4246 = vmatpush1.xpose.msra.mxu0 0.0
      %4247 = vmatprep.subr.mxu0 0.0
      %4248 = vmatpush1.xpose.msra.mxu0 0.0
      %4249 = vmatprep.mubr.f32.mxu0 0.0
      %4250 = vmatmul.mubr.f32.gmra.mrb[0].mxu0 %v3755
      %v4251 = vpop.f32.mrb[0].mxu0
      %v4252 = vadd.f32 0.0, %v4251
      %v4253 = vpop.f32.mrb[0].mxu0
      %4254 = vdwg.mxu0
      %4255 = vmatprep.subr.mxu0 0.0
      %4256 = vmatpush1.xpose.msra.mxu0 %v3400
      %4257 = vmatprep.subr.mxu0 0.0
      %4258 = vmatpush1.xpose.msra.mxu0 0.0
      %4259 = vmatprep.subr.mxu0 0.0
      %4260 = vmatpush1.xpose.msra.mxu0 0.0
      %4261 = vmatprep.subr.mxu0 0.0
      %4262 = vmatpush1.xpose.msra.mxu0 0.0
      %4263 = vmatprep.subr.mxu0 0.0
      %4264 = vmatpush1.xpose.msra.mxu0 0.0
      %4265 = vmatprep.subr.mxu0 0.0
      %4266 = vmatpush1.xpose.msra.mxu0 0.0
      %4267 = vmatprep.subr.mxu0 0.0
      %4268 = vmatpush1.xpose.msra.mxu0 0.0
      %4269 = vmatprep.subr.mxu0 0.0
      %4270 = vmatpush1.xpose.msra.mxu0 0.0
      %4271 = vmatprep.subr.mxu0 0.0
      %4272 = vmatpush1.xpose.msra.mxu0 0.0
      %4273 = vmatprep.subr.mxu0 0.0
      %4274 = vmatpush1.xpose.msra.mxu0 0.0
      %4275 = vmatprep.subr.mxu0 0.0
      %4276 = vmatpush1.xpose.msra.mxu0 0.0
      %4277 = vmatprep.subr.mxu0 0.0
      %4278 = vmatpush1.xpose.msra.mxu0 0.0
      %4279 = vmatprep.subr.mxu0 0.0
      %4280 = vmatpush1.xpose.msra.mxu0 0.0
      %4281 = vmatprep.subr.mxu0 0.0
      %4282 = vmatpush1.xpose.msra.mxu0 0.0
      %4283 = vmatprep.subr.mxu0 0.0
      %4284 = vmatpush1.xpose.msra.mxu0 0.0
      %4285 = vmatprep.subr.mxu0 0.0
      %4286 = vmatpush1.xpose.msra.mxu0 0.0
      %4287 = vmatprep.subr.mxu0 0.0
      %4288 = vmatpush1.xpose.msra.mxu0 0.0
      %4289 = vmatprep.subr.mxu0 0.0
      %4290 = vmatpush1.xpose.msra.mxu0 0.0
      %4291 = vmatprep.subr.mxu0 0.0
      %4292 = vmatpush1.xpose.msra.mxu0 0.0
      %4293 = vmatprep.subr.mxu0 0.0
      %4294 = vmatpush1.xpose.msra.mxu0 0.0
      %4295 = vmatprep.subr.mxu0 0.0
      %4296 = vmatpush1.xpose.msra.mxu0 0.0
      %4297 = vmatprep.subr.mxu0 0.0
      %4298 = vmatpush1.xpose.msra.mxu0 0.0
      %4299 = vmatprep.subr.mxu0 0.0
      %4300 = vmatpush1.xpose.msra.mxu0 0.0
      %4301 = vmatprep.subr.mxu0 0.0
      %4302 = vmatpush1.xpose.msra.mxu0 0.0
      %4303 = vmatprep.subr.mxu0 0.0
      %4304 = vmatpush1.xpose.msra.mxu0 0.0
      %4305 = vmatprep.subr.mxu0 0.0
      %4306 = vmatpush1.xpose.msra.mxu0 0.0
      %4307 = vmatprep.subr.mxu0 0.0
      %4308 = vmatpush1.xpose.msra.mxu0 0.0
      %4309 = vmatprep.subr.mxu0 0.0
      %4310 = vmatpush1.xpose.msra.mxu0 0.0
      %4311 = vmatprep.subr.mxu0 0.0
      %4312 = vmatpush1.xpose.msra.mxu0 0.0
      %4313 = vmatprep.subr.mxu0 0.0
      %4314 = vmatpush1.xpose.msra.mxu0 0.0
      %4315 = vmatprep.subr.mxu0 0.0
      %4316 = vmatpush1.xpose.msra.mxu0 0.0
      %4317 = vmatprep.subr.mxu0 0.0
      %4318 = vmatpush1.xpose.msra.mxu0 0.0
      %4319 = vmatprep.mubr.f32.mxu0 0.0
      %4320 = vmatmul.mubr.f32.gmra.mrb[0].mxu0 %v3756
      %v4321 = vpop.f32.mrb[0].mxu0
      %v4322 = vadd.f32 0.0, %v4321
      %v4323 = vpop.f32.mrb[0].mxu0
      %4324 = vdwg.mxu0
      %4325 = vmatprep.subr.mxu0 0.0
      %4326 = vmatpush1.xpose.msra.mxu0 %v3443
      %4327 = vmatprep.subr.mxu0 0.0
      %4328 = vmatpush1.xpose.msra.mxu0 0.0
      %4329 = vmatprep.subr.mxu0 0.0
      %4330 = vmatpush1.xpose.msra.mxu0 0.0
      %4331 = vmatprep.subr.mxu0 0.0
      %4332 = vmatpush1.xpose.msra.mxu0 0.0
      %4333 = vmatprep.subr.mxu0 0.0
      %4334 = vmatpush1.xpose.msra.mxu0 0.0
      %4335 = vmatprep.subr.mxu0 0.0
      %4336 = vmatpush1.xpose.msra.mxu0 0.0
      %4337 = vmatprep.subr.mxu0 0.0
      %4338 = vmatpush1.xpose.msra.mxu0 0.0
      %4339 = vmatprep.subr.mxu0 0.0
      %4340 = vmatpush1.xpose.msra.mxu0 0.0
      %4341 = vmatprep.subr.mxu0 0.0
      %4342 = vmatpush1.xpose.msra.mxu0 0.0
      %4343 = vmatprep.subr.mxu0 0.0
      %4344 = vmatpush1.xpose.msra.mxu0 0.0
      %4345 = vmatprep.subr.mxu0 0.0
      %4346 = vmatpush1.xpose.msra.mxu0 0.0
      %4347 = vmatprep.subr.mxu0 0.0
      %4348 = vmatpush1.xpose.msra.mxu0 0.0
      %4349 = vmatprep.subr.mxu0 0.0
      %4350 = vmatpush1.xpose.msra.mxu0 0.0
      %4351 = vmatprep.subr.mxu0 0.0
      %4352 = vmatpush1.xpose.msra.mxu0 0.0
      %4353 = vmatprep.subr.mxu0 0.0
      %4354 = vmatpush1.xpose.msra.mxu0 0.0
      %4355 = vmatprep.subr.mxu0 0.0
      %4356 = vmatpush1.xpose.msra.mxu0 0.0
      %4357 = vmatprep.subr.mxu0 0.0
      %4358 = vmatpush1.xpose.msra.mxu0 0.0
      %4359 = vmatprep.subr.mxu0 0.0
      %4360 = vmatpush1.xpose.msra.mxu0 0.0
      %4361 = vmatprep.subr.mxu0 0.0
      %4362 = vmatpush1.xpose.msra.mxu0 0.0
      %4363 = vmatprep.subr.mxu0 0.0
      %4364 = vmatpush1.xpose.msra.mxu0 0.0
      %4365 = vmatprep.subr.mxu0 0.0
      %4366 = vmatpush1.xpose.msra.mxu0 0.0
      %4367 = vmatprep.subr.mxu0 0.0
      %4368 = vmatpush1.xpose.msra.mxu0 0.0
      %4369 = vmatprep.subr.mxu0 0.0
      %4370 = vmatpush1.xpose.msra.mxu0 0.0
      %4371 = vmatprep.subr.mxu0 0.0
      %4372 = vmatpush1.xpose.msra.mxu0 0.0
      %4373 = vmatprep.subr.mxu0 0.0
      %4374 = vmatpush1.xpose.msra.mxu0 0.0
      %4375 = vmatprep.subr.mxu0 0.0
      %4376 = vmatpush1.xpose.msra.mxu0 0.0
      %4377 = vmatprep.subr.mxu0 0.0
      %4378 = vmatpush1.xpose.msra.mxu0 0.0
      %4379 = vmatprep.subr.mxu0 0.0
      %4380 = vmatpush1.xpose.msra.mxu0 0.0
      %4381 = vmatprep.subr.mxu0 0.0
      %4382 = vmatpush1.xpose.msra.mxu0 0.0
      %4383 = vmatprep.subr.mxu0 0.0
      %4384 = vmatpush1.xpose.msra.mxu0 0.0
      %4385 = vmatprep.subr.mxu0 0.0
      %4386 = vmatpush1.xpose.msra.mxu0 0.0
      %4387 = vmatprep.subr.mxu0 0.0
      %4388 = vmatpush1.xpose.msra.mxu0 0.0
      %4389 = vmatprep.mubr.f32.mxu0 0.0
      %4390 = vmatmul.mubr.f32.gmra.mrb[0].mxu0 %v3757
      %v4391 = vpop.f32.mrb[0].mxu0
      %v4392 = vadd.f32 0.0, %v4391
      %v4393 = vpop.f32.mrb[0].mxu0
      %4394 = vdwg.mxu0
      %4395 = vmatprep.subr.mxu0 0.0
      %4396 = vmatpush1.xpose.msra.mxu0 %v3486
      %4397 = vmatprep.subr.mxu0 0.0
      %4398 = vmatpush1.xpose.msra.mxu0 0.0
      %4399 = vmatprep.subr.mxu0 0.0
      %4400 = vmatpush1.xpose.msra.mxu0 0.0
      %4401 = vmatprep.subr.mxu0 0.0
      %4402 = vmatpush1.xpose.msra.mxu0 0.0
      %4403 = vmatprep.subr.mxu0 0.0
      %4404 = vmatpush1.xpose.msra.mxu0 0.0
      %4405 = vmatprep.subr.mxu0 0.0
      %4406 = vmatpush1.xpose.msra.mxu0 0.0
      %4407 = vmatprep.subr.mxu0 0.0
      %4408 = vmatpush1.xpose.msra.mxu0 0.0
      %4409 = vmatprep.subr.mxu0 0.0
      %4410 = vmatpush1.xpose.msra.mxu0 0.0
      %4411 = vmatprep.subr.mxu0 0.0
      %4412 = vmatpush1.xpose.msra.mxu0 0.0
      %4413 = vmatprep.subr.mxu0 0.0
      %4414 = vmatpush1.xpose.msra.mxu0 0.0
      %4415 = vmatprep.subr.mxu0 0.0
      %4416 = vmatpush1.xpose.msra.mxu0 0.0
      %4417 = vmatprep.subr.mxu0 0.0
      %4418 = vmatpush1.xpose.msra.mxu0 0.0
      %4419 = vmatprep.subr.mxu0 0.0
      %4420 = vmatpush1.xpose.msra.mxu0 0.0
      %4421 = vmatprep.subr.mxu0 0.0
      %4422 = vmatpush1.xpose.msra.mxu0 0.0
      %4423 = vmatprep.subr.mxu0 0.0
      %4424 = vmatpush1.xpose.msra.mxu0 0.0
      %4425 = vmatprep.subr.mxu0 0.0
      %4426 = vmatpush1.xpose.msra.mxu0 0.0
      %4427 = vmatprep.subr.mxu0 0.0
      %4428 = vmatpush1.xpose.msra.mxu0 0.0
      %4429 = vmatprep.subr.mxu0 0.0
      %4430 = vmatpush1.xpose.msra.mxu0 0.0
      %4431 = vmatprep.subr.mxu0 0.0
      %4432 = vmatpush1.xpose.msra.mxu0 0.0
      %4433 = vmatprep.subr.mxu0 0.0
      %4434 = vmatpush1.xpose.msra.mxu0 0.0
      %4435 = vmatprep.subr.mxu0 0.0
      %4436 = vmatpush1.xpose.msra.mxu0 0.0
      %4437 = vmatprep.subr.mxu0 0.0
      %4438 = vmatpush1.xpose.msra.mxu0 0.0
      %4439 = vmatprep.subr.mxu0 0.0
      %4440 = vmatpush1.xpose.msra.mxu0 0.0
      %4441 = vmatprep.subr.mxu0 0.0
      %4442 = vmatpush1.xpose.msra.mxu0 0.0
      %4443 = vmatprep.subr.mxu0 0.0
      %4444 = vmatpush1.xpose.msra.mxu0 0.0
      %4445 = vmatprep.subr.mxu0 0.0
      %4446 = vmatpush1.xpose.msra.mxu0 0.0
      %4447 = vmatprep.subr.mxu0 0.0
      %4448 = vmatpush1.xpose.msra.mxu0 0.0
      %4449 = vmatprep.subr.mxu0 0.0
      %4450 = vmatpush1.xpose.msra.mxu0 0.0
      %4451 = vmatprep.subr.mxu0 0.0
      %4452 = vmatpush1.xpose.msra.mxu0 0.0
      %4453 = vmatprep.subr.mxu0 0.0
      %4454 = vmatpush1.xpose.msra.mxu0 0.0
      %4455 = vmatprep.subr.mxu0 0.0
      %4456 = vmatpush1.xpose.msra.mxu0 0.0
      %4457 = vmatprep.subr.mxu0 0.0
      %4458 = vmatpush1.xpose.msra.mxu0 0.0
      %4459 = vmatprep.mubr.f32.mxu0 0.0
      %4460 = vmatmul.mubr.f32.gmra.mrb[0].mxu0 %v3758
      %v4461 = vpop.f32.mrb[0].mxu0
      %v4462 = vadd.f32 0.0, %v4461
      %v4463 = vpop.f32.mrb[0].mxu0
      %4464 = vdwg.mxu0
      %4465 = vmatprep.subr.mxu0 0.0
      %4466 = vmatpush1.xpose.msra.mxu0 %v3529
      %4467 = vmatprep.subr.mxu0 0.0
      %4468 = vmatpush1.xpose.msra.mxu0 0.0
      %4469 = vmatprep.subr.mxu0 0.0
      %4470 = vmatpush1.xpose.msra.mxu0 0.0
      %4471 = vmatprep.subr.mxu0 0.0
      %4472 = vmatpush1.xpose.msra.mxu0 0.0
      %4473 = vmatprep.subr.mxu0 0.0
      %4474 = vmatpush1.xpose.msra.mxu0 0.0
      %4475 = vmatprep.subr.mxu0 0.0
      %4476 = vmatpush1.xpose.msra.mxu0 0.0
      %4477 = vmatprep.subr.mxu0 0.0
      %4478 = vmatpush1.xpose.msra.mxu0 0.0
      %4479 = vmatprep.subr.mxu0 0.0
      %4480 = vmatpush1.xpose.msra.mxu0 0.0
      %4481 = vmatprep.subr.mxu0 0.0
      %4482 = vmatpush1.xpose.msra.mxu0 0.0
      %4483 = vmatprep.subr.mxu0 0.0
      %4484 = vmatpush1.xpose.msra.mxu0 0.0
      %4485 = vmatprep.subr.mxu0 0.0
      %4486 = vmatpush1.xpose.msra.mxu0 0.0
      %4487 = vmatprep.subr.mxu0 0.0
      %4488 = vmatpush1.xpose.msra.mxu0 0.0
      %4489 = vmatprep.subr.mxu0 0.0
      %4490 = vmatpush1.xpose.msra.mxu0 0.0
      %4491 = vmatprep.subr.mxu0 0.0
      %4492 = vmatpush1.xpose.msra.mxu0 0.0
      %4493 = vmatprep.subr.mxu0 0.0
      %4494 = vmatpush1.xpose.msra.mxu0 0.0
      %4495 = vmatprep.subr.mxu0 0.0
      %4496 = vmatpush1.xpose.msra.mxu0 0.0
      %4497 = vmatprep.subr.mxu0 0.0
      %4498 = vmatpush1.xpose.msra.mxu0 0.0
      %4499 = vmatprep.subr.mxu0 0.0
      %4500 = vmatpush1.xpose.msra.mxu0 0.0
      %4501 = vmatprep.subr.mxu0 0.0
      %4502 = vmatpush1.xpose.msra.mxu0 0.0
      %4503 = vmatprep.subr.mxu0 0.0
      %4504 = vmatpush1.xpose.msra.mxu0 0.0
      %4505 = vmatprep.subr.mxu0 0.0
      %4506 = vmatpush1.xpose.msra.mxu0 0.0
      %4507 = vmatprep.subr.mxu0 0.0
      %4508 = vmatpush1.xpose.msra.mxu0 0.0
      %4509 = vmatprep.subr.mxu0 0.0
      %4510 = vmatpush1.xpose.msra.mxu0 0.0
      %4511 = vmatprep.subr.mxu0 0.0
      %4512 = vmatpush1.xpose.msra.mxu0 0.0
      %4513 = vmatprep.subr.mxu0 0.0
      %4514 = vmatpush1.xpose.msra.mxu0 0.0
      %4515 = vmatprep.subr.mxu0 0.0
      %4516 = vmatpush1.xpose.msra.mxu0 0.0
      %4517 = vmatprep.subr.mxu0 0.0
      %4518 = vmatpush1.xpose.msra.mxu0 0.0
      %4519 = vmatprep.subr.mxu0 0.0
      %4520 = vmatpush1.xpose.msra.mxu0 0.0
      %4521 = vmatprep.subr.mxu0 0.0
      %4522 = vmatpush1.xpose.msra.mxu0 0.0
      %4523 = vmatprep.subr.mxu0 0.0
      %4524 = vmatpush1.xpose.msra.mxu0 0.0
      %4525 = vmatprep.subr.mxu0 0.0
      %4526 = vmatpush1.xpose.msra.mxu0 0.0
      %4527 = vmatprep.subr.mxu0 0.0
      %4528 = vmatpush1.xpose.msra.mxu0 0.0
      %4529 = vmatprep.mubr.f32.mxu0 0.0
      %4530 = vmatmul.mubr.f32.gmra.mrb[0].mxu0 %v3759
      %v4531 = vpop.f32.mrb[0].mxu0
      %v4532 = vadd.f32 0.0, %v4531
      %v4533 = vpop.f32.mrb[0].mxu0
      %4534 = vdwg.mxu0
      %4535 = vmatprep.subr.mxu0 0.0
      %4536 = vmatpush1.xpose.msra.mxu0 %v3572
      %4537 = vmatprep.subr.mxu0 0.0
      %4538 = vmatpush1.xpose.msra.mxu0 0.0
      %4539 = vmatprep.subr.mxu0 0.0
      %4540 = vmatpush1.xpose.msra.mxu0 0.0
      %4541 = vmatprep.subr.mxu0 0.0
      %4542 = vmatpush1.xpose.msra.mxu0 0.0
      %4543 = vmatprep.subr.mxu0 0.0
      %4544 = vmatpush1.xpose.msra.mxu0 0.0
      %4545 = vmatprep.subr.mxu0 0.0
      %4546 = vmatpush1.xpose.msra.mxu0 0.0
      %4547 = vmatprep.subr.mxu0 0.0
      %4548 = vmatpush1.xpose.msra.mxu0 0.0
      %4549 = vmatprep.subr.mxu0 0.0
      %4550 = vmatpush1.xpose.msra.mxu0 0.0
      %4551 = vmatprep.subr.mxu0 0.0
      %4552 = vmatpush1.xpose.msra.mxu0 0.0
      %4553 = vmatprep.subr.mxu0 0.0
      %4554 = vmatpush1.xpose.msra.mxu0 0.0
      %4555 = vmatprep.subr.mxu0 0.0
      %4556 = vmatpush1.xpose.msra.mxu0 0.0
      %4557 = vmatprep.subr.mxu0 0.0
      %4558 = vmatpush1.xpose.msra.mxu0 0.0
      %4559 = vmatprep.subr.mxu0 0.0
      %4560 = vmatpush1.xpose.msra.mxu0 0.0
      %4561 = vmatprep.subr.mxu0 0.0
      %4562 = vmatpush1.xpose.msra.mxu0 0.0
      %4563 = vmatprep.subr.mxu0 0.0
      %4564 = vmatpush1.xpose.msra.mxu0 0.0
      %4565 = vmatprep.subr.mxu0 0.0
      %4566 = vmatpush1.xpose.msra.mxu0 0.0
      %4567 = vmatprep.subr.mxu0 0.0
      %4568 = vmatpush1.xpose.msra.mxu0 0.0
      %4569 = vmatprep.subr.mxu0 0.0
      %4570 = vmatpush1.xpose.msra.mxu0 0.0
      %4571 = vmatprep.subr.mxu0 0.0
      %4572 = vmatpush1.xpose.msra.mxu0 0.0
      %4573 = vmatprep.subr.mxu0 0.0
      %4574 = vmatpush1.xpose.msra.mxu0 0.0
      %4575 = vmatprep.subr.mxu0 0.0
      %4576 = vmatpush1.xpose.msra.mxu0 0.0
      %4577 = vmatprep.subr.mxu0 0.0
      %4578 = vmatpush1.xpose.msra.mxu0 0.0
      %4579 = vmatprep.subr.mxu0 0.0
      %4580 = vmatpush1.xpose.msra.mxu0 0.0
      %4581 = vmatprep.subr.mxu0 0.0
      %4582 = vmatpush1.xpose.msra.mxu0 0.0
      %4583 = vmatprep.subr.mxu0 0.0
      %4584 = vmatpush1.xpose.msra.mxu0 0.0
      %4585 = vmatprep.subr.mxu0 0.0
      %4586 = vmatpush1.xpose.msra.mxu0 0.0
      %4587 = vmatprep.subr.mxu0 0.0
      %4588 = vmatpush1.xpose.msra.mxu0 0.0
      %4589 = vmatprep.subr.mxu0 0.0
      %4590 = vmatpush1.xpose.msra.mxu0 0.0
      %4591 = vmatprep.subr.mxu0 0.0
      %4592 = vmatpush1.xpose.msra.mxu0 0.0
      %4593 = vmatprep.subr.mxu0 0.0
      %4594 = vmatpush1.xpose.msra.mxu0 0.0
      %4595 = vmatprep.subr.mxu0 0.0
      %4596 = vmatpush1.xpose.msra.mxu0 0.0
      %4597 = vmatprep.subr.mxu0 0.0
      %4598 = vmatpush1.xpose.msra.mxu0 0.0
      %4599 = vmatprep.mubr.f32.mxu0 0.0
      %4600 = vmatmul.mubr.f32.gmra.mrb[0].mxu0 %v3760
      %v4601 = vpop.f32.mrb[0].mxu0
      %v4602 = vadd.f32 0.0, %v4601
      %v4603 = vpop.f32.mrb[0].mxu0
      %4604 = vdwg.mxu0
      %4605 = vmatprep.subr.mxu0 0.0
      %4606 = vmatpush1.xpose.msra.mxu0 %v3615
      %4607 = vmatprep.subr.mxu0 0.0
      %4608 = vmatpush1.xpose.msra.mxu0 0.0
      %4609 = vmatprep.subr.mxu0 0.0
      %4610 = vmatpush1.xpose.msra.mxu0 0.0
      %4611 = vmatprep.subr.mxu0 0.0
      %4612 = vmatpush1.xpose.msra.mxu0 0.0
      %4613 = vmatprep.subr.mxu0 0.0
      %4614 = vmatpush1.xpose.msra.mxu0 0.0
      %4615 = vmatprep.subr.mxu0 0.0
      %4616 = vmatpush1.xpose.msra.mxu0 0.0
      %4617 = vmatprep.subr.mxu0 0.0
      %4618 = vmatpush1.xpose.msra.mxu0 0.0
      %4619 = vmatprep.subr.mxu0 0.0
      %4620 = vmatpush1.xpose.msra.mxu0 0.0
      %4621 = vmatprep.subr.mxu0 0.0
      %4622 = vmatpush1.xpose.msra.mxu0 0.0
      %4623 = vmatprep.subr.mxu0 0.0
      %4624 = vmatpush1.xpose.msra.mxu0 0.0
      %4625 = vmatprep.subr.mxu0 0.0
      %4626 = vmatpush1.xpose.msra.mxu0 0.0
      %4627 = vmatprep.subr.mxu0 0.0
      %4628 = vmatpush1.xpose.msra.mxu0 0.0
      %4629 = vmatprep.subr.mxu0 0.0
      %4630 = vmatpush1.xpose.msra.mxu0 0.0
      %4631 = vmatprep.subr.mxu0 0.0
      %4632 = vmatpush1.xpose.msra.mxu0 0.0
      %4633 = vmatprep.subr.mxu0 0.0
      %4634 = vmatpush1.xpose.msra.mxu0 0.0
      %4635 = vmatprep.subr.mxu0 0.0
      %4636 = vmatpush1.xpose.msra.mxu0 0.0
      %4637 = vmatprep.subr.mxu0 0.0
      %4638 = vmatpush1.xpose.msra.mxu0 0.0
      %4639 = vmatprep.subr.mxu0 0.0
      %4640 = vmatpush1.xpose.msra.mxu0 0.0
      %4641 = vmatprep.subr.mxu0 0.0
      %4642 = vmatpush1.xpose.msra.mxu0 0.0
      %4643 = vmatprep.subr.mxu0 0.0
      %4644 = vmatpush1.xpose.msra.mxu0 0.0
      %4645 = vmatprep.subr.mxu0 0.0
      %4646 = vmatpush1.xpose.msra.mxu0 0.0
      %4647 = vmatprep.subr.mxu0 0.0
      %4648 = vmatpush1.xpose.msra.mxu0 0.0
      %4649 = vmatprep.subr.mxu0 0.0
      %4650 = vmatpush1.xpose.msra.mxu0 0.0
      %4651 = vmatprep.subr.mxu0 0.0
      %4652 = vmatpush1.xpose.msra.mxu0 0.0
      %4653 = vmatprep.subr.mxu0 0.0
      %4654 = vmatpush1.xpose.msra.mxu0 0.0
      %4655 = vmatprep.subr.mxu0 0.0
      %4656 = vmatpush1.xpose.msra.mxu0 0.0
      %4657 = vmatprep.subr.mxu0 0.0
      %4658 = vmatpush1.xpose.msra.mxu0 0.0
      %4659 = vmatprep.subr.mxu0 0.0
      %4660 = vmatpush1.xpose.msra.mxu0 0.0
      %4661 = vmatprep.subr.mxu0 0.0
      %4662 = vmatpush1.xpose.msra.mxu0 0.0
      %4663 = vmatprep.subr.mxu0 0.0
      %4664 = vmatpush1.xpose.msra.mxu0 0.0
      %4665 = vmatprep.subr.mxu0 0.0
      %4666 = vmatpush1.xpose.msra.mxu0 0.0
      %4667 = vmatprep.subr.mxu0 0.0
      %4668 = vmatpush1.xpose.msra.mxu0 0.0
      %4669 = vmatprep.mubr.f32.mxu0 0.0
      %4670 = vmatmul.mubr.f32.gmra.mrb[0].mxu0 %v3761
      %v4671 = vpop.f32.mrb[0].mxu0
      %v4672 = vadd.f32 0.0, %v4671
      %v4673 = vpop.f32.mrb[0].mxu0
      %4674 = vdwg.mxu0
      %4675 = vmatprep.subr.mxu0 0.0
      %4676 = vmatpush1.xpose.msra.mxu0 %v3658
      %4677 = vmatprep.subr.mxu0 0.0
      %4678 = vmatpush1.xpose.msra.mxu0 0.0
      %4679 = vmatprep.subr.mxu0 0.0
      %4680 = vmatpush1.xpose.msra.mxu0 0.0
      %4681 = vmatprep.subr.mxu0 0.0
      %4682 = vmatpush1.xpose.msra.mxu0 0.0
      %4683 = vmatprep.subr.mxu0 0.0
      %4684 = vmatpush1.xpose.msra.mxu0 0.0
      %4685 = vmatprep.subr.mxu0 0.0
      %4686 = vmatpush1.xpose.msra.mxu0 0.0
      %4687 = vmatprep.subr.mxu0 0.0
      %4688 = vmatpush1.xpose.msra.mxu0 0.0
      %4689 = vmatprep.subr.mxu0 0.0
      %4690 = vmatpush1.xpose.msra.mxu0 0.0
      %4691 = vmatprep.subr.mxu0 0.0
      %4692 = vmatpush1.xpose.msra.mxu0 0.0
      %4693 = vmatprep.subr.mxu0 0.0
      %4694 = vmatpush1.xpose.msra.mxu0 0.0
      %4695 = vmatprep.subr.mxu0 0.0
      %4696 = vmatpush1.xpose.msra.mxu0 0.0
      %4697 = vmatprep.subr.mxu0 0.0
      %4698 = vmatpush1.xpose.msra.mxu0 0.0
      %4699 = vmatprep.subr.mxu0 0.0
      %4700 = vmatpush1.xpose.msra.mxu0 0.0
      %4701 = vmatprep.subr.mxu0 0.0
      %4702 = vmatpush1.xpose.msra.mxu0 0.0
      %4703 = vmatprep.subr.mxu0 0.0
      %4704 = vmatpush1.xpose.msra.mxu0 0.0
      %4705 = vmatprep.subr.mxu0 0.0
      %4706 = vmatpush1.xpose.msra.mxu0 0.0
      %4707 = vmatprep.subr.mxu0 0.0
      %4708 = vmatpush1.xpose.msra.mxu0 0.0
      %4709 = vmatprep.subr.mxu0 0.0
      %4710 = vmatpush1.xpose.msra.mxu0 0.0
      %4711 = vmatprep.subr.mxu0 0.0
      %4712 = vmatpush1.xpose.msra.mxu0 0.0
      %4713 = vmatprep.subr.mxu0 0.0
      %4714 = vmatpush1.xpose.msra.mxu0 0.0
      %4715 = vmatprep.subr.mxu0 0.0
      %4716 = vmatpush1.xpose.msra.mxu0 0.0
      %4717 = vmatprep.subr.mxu0 0.0
      %4718 = vmatpush1.xpose.msra.mxu0 0.0
      %4719 = vmatprep.subr.mxu0 0.0
      %4720 = vmatpush1.xpose.msra.mxu0 0.0
      %4721 = vmatprep.subr.mxu0 0.0
      %4722 = vmatpush1.xpose.msra.mxu0 0.0
      %4723 = vmatprep.subr.mxu0 0.0
      %4724 = vmatpush1.xpose.msra.mxu0 0.0
      %4725 = vmatprep.subr.mxu0 0.0
      %4726 = vmatpush1.xpose.msra.mxu0 0.0
      %4727 = vmatprep.subr.mxu0 0.0
      %4728 = vmatpush1.xpose.msra.mxu0 0.0
      %4729 = vmatprep.subr.mxu0 0.0
      %4730 = vmatpush1.xpose.msra.mxu0 0.0
      %4731 = vmatprep.subr.mxu0 0.0
      %4732 = vmatpush1.xpose.msra.mxu0 0.0
      %4733 = vmatprep.subr.mxu0 0.0
      %4734 = vmatpush1.xpose.msra.mxu0 0.0
      %4735 = vmatprep.subr.mxu0 0.0
      %4736 = vmatpush1.xpose.msra.mxu0 0.0
      %4737 = vmatprep.subr.mxu0 0.0
      %4738 = vmatpush1.xpose.msra.mxu0 0.0
      %4739 = vmatprep.mubr.f32.mxu0 0.0
      %4740 = vmatmul.mubr.f32.gmra.mrb[0].mxu0 %v3762
      %v4741 = vpop.f32.mrb[0].mxu0
      %v4742 = vadd.f32 0.0, %v4741
      %v4743 = vpop.f32.mrb[0].mxu0
      %4744 = vdwg.mxu0
      %4745 = vmatprep.subr.mxu0 0.0
      %4746 = vmatpush1.xpose.msra.mxu0 %v3701
      %4747 = vmatprep.subr.mxu0 0.0
      %4748 = vmatpush1.xpose.msra.mxu0 0.0
      %4749 = vmatprep.subr.mxu0 0.0
      %4750 = vmatpush1.xpose.msra.mxu0 0.0
      %4751 = vmatprep.subr.mxu0 0.0
      %4752 = vmatpush1.xpose.msra.mxu0 0.0
      %4753 = vmatprep.subr.mxu0 0.0
      %4754 = vmatpush1.xpose.msra.mxu0 0.0
      %4755 = vmatprep.subr.mxu0 0.0
      %4756 = vmatpush1.xpose.msra.mxu0 0.0
      %4757 = vmatprep.subr.mxu0 0.0
      %4758 = vmatpush1.xpose.msra.mxu0 0.0
      %4759 = vmatprep.subr.mxu0 0.0
      %4760 = vmatpush1.xpose.msra.mxu0 0.0
      %4761 = vmatprep.subr.mxu0 0.0
      %4762 = vmatpush1.xpose.msra.mxu0 0.0
      %4763 = vmatprep.subr.mxu0 0.0
      %4764 = vmatpush1.xpose.msra.mxu0 0.0
      %4765 = vmatprep.subr.mxu0 0.0
      %4766 = vmatpush1.xpose.msra.mxu0 0.0
      %4767 = vmatprep.subr.mxu0 0.0
      %4768 = vmatpush1.xpose.msra.mxu0 0.0
      %4769 = vmatprep.subr.mxu0 0.0
      %4770 = vmatpush1.xpose.msra.mxu0 0.0
      %4771 = vmatprep.subr.mxu0 0.0
      %4772 = vmatpush1.xpose.msra.mxu0 0.0
      %4773 = vmatprep.subr.mxu0 0.0
      %4774 = vmatpush1.xpose.msra.mxu0 0.0
      %4775 = vmatprep.subr.mxu0 0.0
      %4776 = vmatpush1.xpose.msra.mxu0 0.0
      %4777 = vmatprep.subr.mxu0 0.0
      %4778 = vmatpush1.xpose.msra.mxu0 0.0
      %4779 = vmatprep.subr.mxu0 0.0
      %4780 = vmatpush1.xpose.msra.mxu0 0.0
      %4781 = vmatprep.subr.mxu0 0.0
      %4782 = vmatpush1.xpose.msra.mxu0 0.0
      %4783 = vmatprep.subr.mxu0 0.0
      %4784 = vmatpush1.xpose.msra.mxu0 0.0
      %4785 = vmatprep.subr.mxu0 0.0
      %4786 = vmatpush1.xpose.msra.mxu0 0.0
      %4787 = vmatprep.subr.mxu0 0.0
      %4788 = vmatpush1.xpose.msra.mxu0 0.0
      %4789 = vmatprep.subr.mxu0 0.0
      %4790 = vmatpush1.xpose.msra.mxu0 0.0
      %4791 = vmatprep.subr.mxu0 0.0
      %4792 = vmatpush1.xpose.msra.mxu0 0.0
      %4793 = vmatprep.subr.mxu0 0.0
      %4794 = vmatpush1.xpose.msra.mxu0 0.0
      %4795 = vmatprep.subr.mxu0 0.0
      %4796 = vmatpush1.xpose.msra.mxu0 0.0
      %4797 = vmatprep.subr.mxu0 0.0
      %4798 = vmatpush1.xpose.msra.mxu0 0.0
      %4799 = vmatprep.subr.mxu0 0.0
      %4800 = vmatpush1.xpose.msra.mxu0 0.0
      %4801 = vmatprep.subr.mxu0 0.0
      %4802 = vmatpush1.xpose.msra.mxu0 0.0
      %4803 = vmatprep.subr.mxu0 0.0
      %4804 = vmatpush1.xpose.msra.mxu0 0.0
      %4805 = vmatprep.subr.mxu0 0.0
      %4806 = vmatpush1.xpose.msra.mxu0 0.0
      %4807 = vmatprep.subr.mxu0 0.0
      %4808 = vmatpush1.xpose.msra.mxu0 0.0
      %4809 = vmatprep.mubr.f32.mxu0 0.0
      %4810 = vmatmul.mubr.f32.gmra.mrb[0].mxu0 %v3763
      %v4811 = vpop.f32.mrb[0].mxu0
      %v4812 = vadd.f32 0.0, %v4811
      %v4813 = vpop.f32.mrb[0].mxu0
      %4814 = vdwg.mxu0
      %4815 = vmatprep.subr.mxu0 0.0
      %4816 = vmatpush1.xpose.msra.mxu0 %v3744
      %4817 = vmatprep.subr.mxu0 0.0
      %4818 = vmatpush1.xpose.msra.mxu0 0.0
      %4819 = vmatprep.subr.mxu0 0.0
      %4820 = vmatpush1.xpose.msra.mxu0 0.0
      %4821 = vmatprep.subr.mxu0 0.0
      %4822 = vmatpush1.xpose.msra.mxu0 0.0
      %4823 = vmatprep.subr.mxu0 0.0
      %4824 = vmatpush1.xpose.msra.mxu0 0.0
      %4825 = vmatprep.subr.mxu0 0.0
      %4826 = vmatpush1.xpose.msra.mxu0 0.0
      %4827 = vmatprep.subr.mxu0 0.0
      %4828 = vmatpush1.xpose.msra.mxu0 0.0
      %4829 = vmatprep.subr.mxu0 0.0
      %4830 = vmatpush1.xpose.msra.mxu0 0.0
      %4831 = vmatprep.subr.mxu0 0.0
      %4832 = vmatpush1.xpose.msra.mxu0 0.0
      %4833 = vmatprep.subr.mxu0 0.0
      %4834 = vmatpush1.xpose.msra.mxu0 0.0
      %4835 = vmatprep.subr.mxu0 0.0
      %4836 = vmatpush1.xpose.msra.mxu0 0.0
      %4837 = vmatprep.subr.mxu0 0.0
      %4838 = vmatpush1.xpose.msra.mxu0 0.0
      %4839 = vmatprep.subr.mxu0 0.0
      %4840 = vmatpush1.xpose.msra.mxu0 0.0
      %4841 = vmatprep.subr.mxu0 0.0
      %4842 = vmatpush1.xpose.msra.mxu0 0.0
      %4843 = vmatprep.subr.mxu0 0.0
      %4844 = vmatpush1.xpose.msra.mxu0 0.0
      %4845 = vmatprep.subr.mxu0 0.0
      %4846 = vmatpush1.xpose.msra.mxu0 0.0
      %4847 = vmatprep.subr.mxu0 0.0
      %4848 = vmatpush1.xpose.msra.mxu0 0.0
      %4849 = vmatprep.subr.mxu0 0.0
      %4850 = vmatpush1.xpose.msra.mxu0 0.0
      %4851 = vmatprep.subr.mxu0 0.0
      %4852 = vmatpush1.xpose.msra.mxu0 0.0
      %4853 = vmatprep.subr.mxu0 0.0
      %4854 = vmatpush1.xpose.msra.mxu0 0.0
      %4855 = vmatprep.subr.mxu0 0.0
      %4856 = vmatpush1.xpose.msra.mxu0 0.0
      %4857 = vmatprep.subr.mxu0 0.0
      %4858 = vmatpush1.xpose.msra.mxu0 0.0
      %4859 = vmatprep.subr.mxu0 0.0
      %4860 = vmatpush1.xpose.msra.mxu0 0.0
      %4861 = vmatprep.subr.mxu0 0.0
      %4862 = vmatpush1.xpose.msra.mxu0 0.0
      %4863 = vmatprep.subr.mxu0 0.0
      %4864 = vmatpush1.xpose.msra.mxu0 0.0
      %4865 = vmatprep.subr.mxu0 0.0
      %4866 = vmatpush1.xpose.msra.mxu0 0.0
      %4867 = vmatprep.subr.mxu0 0.0
      %4868 = vmatpush1.xpose.msra.mxu0 0.0
      %4869 = vmatprep.subr.mxu0 0.0
      %4870 = vmatpush1.xpose.msra.mxu0 0.0
      %4871 = vmatprep.subr.mxu0 0.0
      %4872 = vmatpush1.xpose.msra.mxu0 0.0
      %4873 = vmatprep.subr.mxu0 0.0
      %4874 = vmatpush1.xpose.msra.mxu0 0.0
      %4875 = vmatprep.subr.mxu0 0.0
      %4876 = vmatpush1.xpose.msra.mxu0 0.0
      %4877 = vmatprep.subr.mxu0 0.0
      %4878 = vmatpush1.xpose.msra.mxu0 0.0
      %4879 = vmatprep.mubr.f32.mxu0 0.0
      %4880 = vmatmul.mubr.f32.gmra.mrb[0].mxu0 %v3764
      %v4881 = vpop.f32.mrb[0].mxu0
      %v4882 = vadd.f32 0.0, %v4881
      %v4883 = vpop.f32.mrb[0].mxu0
      %4884 = vdwg.mxu0
      %v4885 = vld [vmem:[%s337] sm:$0xf]
      %v4886 = vld [vmem:[%s337 + $0x4] sm:$0xf]
      %v4887 = vld [vmem:[%s337 + $0x8] sm:$0xf]
      %v4888 = vld [vmem:[%s337 + $0xc] sm:$0xf]
      %v4889 = vld [vmem:[%s337 + $0x10] sm:$0xf]
      %v4890 = vld [vmem:[%s337 + $0x14] sm:$0xf]
      %v4891 = vld [vmem:[%s337 + $0x18] sm:$0xf]
      %v4892 = vld [vmem:[%s337 + $0x1c] sm:$0xf]
      %v4893 = vld [vmem:[%s337 + $0x20] sm:$0xf]
      %v4894 = vld [vmem:[%s337 + $0x24] sm:$0xf]
      %v4895 = vld [vmem:[%s337 + $0x28] sm:$0xf]
      %v4896 = vld [vmem:[%s337 + $0x2c] sm:$0xf]
      %v4897 = vld [vmem:[%s337 + $0x30] sm:$0xf]
      %v4898 = vld [vmem:[%s337 + $0x34] sm:$0xf]
      %v4899 = vld [vmem:[%s337 + $0x38] sm:$0xf]
      %v4900 = vld [vmem:[%s337 + $0x3c] sm:$0xf]
      %v4901 = vmul.f32 %v4885, %v3832
      %v4902 = vmul.f32 %v4886, %v3902
      %v4903 = vmul.f32 %v4887, %v3972
      %v4904 = vmul.f32 %v4888, %v4042
      %v4905 = vmul.f32 %v4889, %v4112
      %v4906 = vmul.f32 %v4890, %v4182
      %v4907 = vmul.f32 %v4891, %v4252
      %v4908 = vmul.f32 %v4892, %v4322
      %v4909 = vmul.f32 %v4893, %v4392
      %v4910 = vmul.f32 %v4894, %v4462
      %v4911 = vmul.f32 %v4895, %v4532
      %v4912 = vmul.f32 %v4896, %v4602
      %v4913 = vmul.f32 %v4897, %v4672
      %v4914 = vmul.f32 %v4898, %v4742
      %v4915 = vmul.f32 %v4899, %v4812
      %v4916 = vmul.f32 %v4900, %v4882
      %vm4917 = vcmask 19456
      %v4918 = vsel %vm4917, %v4901, 0.0
      %4919 = vadd.xlane.f32.xlu0 %v4918
      %v4920 = vpop.xlane.xlu0 %4919
      %v4921 = vsel %vm4917, %v4902, 0.0
      %4922 = vadd.xlane.f32.xlu0 %v4921
      %v4923 = vpop.xlane.xlu0 %4922
      %v4924 = vsel %vm4917, %v4903, 0.0
      %4925 = vadd.xlane.f32.xlu0 %v4924
      %v4926 = vpop.xlane.xlu0 %4925
      %v4927 = vsel %vm4917, %v4904, 0.0
      %4928 = vadd.xlane.f32.xlu0 %v4927
      %v4929 = vpop.xlane.xlu0 %4928
      %v4930 = vsel %vm4917, %v4905, 0.0
      %4931 = vadd.xlane.f32.xlu0 %v4930
      %v4932 = vpop.xlane.xlu0 %4931
      %v4933 = vsel %vm4917, %v4906, 0.0
      %4934 = vadd.xlane.f32.xlu0 %v4933
      %v4935 = vpop.xlane.xlu0 %4934
      %v4936 = vsel %vm4917, %v4907, 0.0
      %4937 = vadd.xlane.f32.xlu0 %v4936
      %v4938 = vpop.xlane.xlu0 %4937
      %v4939 = vsel %vm4917, %v4908, 0.0
      %4940 = vadd.xlane.f32.xlu0 %v4939
      %v4941 = vpop.xlane.xlu0 %4940
      %v4942 = vsel %vm4917, %v4909, 0.0
      %4943 = vadd.xlane.f32.xlu0 %v4942
      %v4944 = vpop.xlane.xlu0 %4943
      %v4945 = vsel %vm4917, %v4910, 0.0
      %4946 = vadd.xlane.f32.xlu0 %v4945
      %v4947 = vpop.xlane.xlu0 %4946
      %v4948 = vsel %vm4917, %v4911, 0.0
      %4949 = vadd.xlane.f32.xlu0 %v4948
      %v4950 = vpop.xlane.xlu0 %4949
      %v4951 = vsel %vm4917, %v4912, 0.0
      %4952 = vadd.xlane.f32.xlu0 %v4951
      %v4953 = vpop.xlane.xlu0 %4952
      %v4954 = vsel %vm4917, %v4913, 0.0
      %4955 = vadd.xlane.f32.xlu0 %v4954
      %v4956 = vpop.xlane.xlu0 %4955
      %v4957 = vsel %vm4917, %v4914, 0.0
      %4958 = vadd.xlane.f32.xlu0 %v4957
      %v4959 = vpop.xlane.xlu0 %4958
      %v4960 = vsel %vm4917, %v4915, 0.0
      %4961 = vadd.xlane.f32.xlu0 %v4960
      %v4962 = vpop.xlane.xlu0 %4961
      %v4963 = vsel %vm4917, %v4916, 0.0
      %4964 = vadd.xlane.f32.xlu0 %v4963
      %v4965 = vpop.xlane.xlu0 %4964
      %v4982 = vlaneseq
      %v4983 = vand.u32 %v4982, 127
      %v4984 = vlaneseq
      %v4985 = vshrl.u32 %v4984, 7
      %v4986 = vsub.s32 %v4983, %v4985
      %v4987 = vrot.slane %v4920, %v4986
      %v4988 = vlaneseq
      %v4989 = vshrl.u32 %v4988, 7
      %v4990 = vsub.s32 %v4983, %v4989
      %v4991 = vrot.slane %v4923, %v4990
      %v4992 = vlaneseq
      %v4993 = vshrl.u32 %v4992, 7
      %v4994 = vsub.s32 %v4983, %v4993
      %v4995 = vrot.slane %v4926, %v4994
      %v4996 = vlaneseq
      %v4997 = vshrl.u32 %v4996, 7
      %v4998 = vsub.s32 %v4983, %v4997
      %v4999 = vrot.slane %v4929, %v4998
      %v5000 = vlaneseq
      %v5001 = vshrl.u32 %v5000, 7
      %v5002 = vsub.s32 %v4983, %v5001
      %v5003 = vrot.slane %v4932, %v5002
      %v5004 = vlaneseq
      %v5005 = vshrl.u32 %v5004, 7
      %v5006 = vsub.s32 %v4983, %v5005
      %v5007 = vrot.slane %v4935, %v5006
      %v5008 = vlaneseq
      %v5009 = vshrl.u32 %v5008, 7
      %v5010 = vsub.s32 %v4983, %v5009
      %v5011 = vrot.slane %v4938, %v5010
      %v5012 = vlaneseq
      %v5013 = vshrl.u32 %v5012, 7
      %v5014 = vsub.s32 %v4983, %v5013
      %v5015 = vrot.slane %v4941, %v5014
      %v5016 = vlaneseq
      %v5017 = vshrl.u32 %v5016, 7
      %v5018 = vsub.s32 %v4983, %v5017
      %v5019 = vrot.slane %v4944, %v5018
      %v5020 = vlaneseq
      %v5021 = vshrl.u32 %v5020, 7
      %v5022 = vsub.s32 %v4983, %v5021
      %v5023 = vrot.slane %v4947, %v5022
      %v5024 = vlaneseq
      %v5025 = vshrl.u32 %v5024, 7
      %v5026 = vsub.s32 %v4983, %v5025
      %v5027 = vrot.slane %v4950, %v5026
      %v5028 = vlaneseq
      %v5029 = vshrl.u32 %v5028, 7
      %v5030 = vsub.s32 %v4983, %v5029
      %v5031 = vrot.slane %v4953, %v5030
      %v5032 = vlaneseq
      %v5033 = vshrl.u32 %v5032, 7
      %v5034 = vsub.s32 %v4983, %v5033
      %v5035 = vrot.slane %v4956, %v5034
      %v5036 = vlaneseq
      %v5037 = vshrl.u32 %v5036, 7
      %v5038 = vsub.s32 %v4983, %v5037
      %v5039 = vrot.slane %v4959, %v5038
      %v5040 = vlaneseq
      %v5041 = vshrl.u32 %v5040, 7
      %v5042 = vsub.s32 %v4983, %v5041
      %v5043 = vrot.slane %v4962, %v5042
      %v5044 = vlaneseq
      %v5045 = vshrl.u32 %v5044, 7
      %v5046 = vsub.s32 %v4983, %v5045
      %v5047 = vrot.slane %v4965, %v5046
      %vm5048 = vcmask 1041409
      %v5049 = vsel %vm5048, %v4991, %v4987
      %vm5050 = vcmask 1042434
      %v5051 = vsel %vm5050, %v4995, %v5049
      %vm5052 = vcmask 1043459
      %v5053 = vsel %vm5052, %v4999, %v5051
      %vm5054 = vcmask 1044484
      %v5055 = vsel %vm5054, %v5003, %v5053
      %vm5056 = vcmask 1045509
      %v5057 = vsel %vm5056, %v5007, %v5055
      %vm5058 = vcmask 1046534
      %v5059 = vsel %vm5058, %v5011, %v5057
      %vm5060 = vcmask 1047559
      %v5061 = vsel %vm5060, %v5015, %v5059
      %v5062 = vsel %vm5048, %v5023, %v5019
      %v5063 = vsel %vm5050, %v5027, %v5062
      %v5064 = vsel %vm5052, %v5031, %v5063
      %v5065 = vsel %vm5054, %v5035, %v5064
      %v5066 = vsel %vm5056, %v5039, %v5065
      %v5067 = vsel %vm5058, %v5043, %v5066
      %v5068 = vsel %vm5060, %v5047, %v5067
      %vm5071 = vcmask 31744
      %5072 = vst.msk [vmem:[%s343] sm:$0xff] %vm5071, %v5061
      %5073 = vst.msk [vmem:[%s343 + $0x8] sm:$0xff] %vm5071, %v5068
      %s5074 = smul.u32 2, %s18
      %p5075 = scmp.lt.s32.totalorder %s5074, 3
      %s5076 = scalar_select %p5075, %s5074, 3
      %s5077 = smul.addr %s5076, 8
      %s5078 = scalar_lea.vmem %s7, %s5077
      // Predicated region
      $region49: #{mvke_forward.1} parent=47 // pred_check
        %p5079 = pneg %p203
      $region50: #{mvke_forward.1} parent=47 // pred_check_branch
        %5081 = sbr.rel (%p5079) target = $region52
      $region51: #{mvke_forward.1} parent=47 // pred_region
        %s5082 = smul.u32 2, %s18
      $region52: #{mvke_forward.1} parent=47 // pred_fallthru
        _
    $region48: #{mvke_forward.1} parent=5 // pred_fallthru
      _
    %p5083 = scmp.le.s32.totalorder 2, %s13
    // Predicated region
    $region53: #{mvke_forward.1} parent=5 // pred_check
      %p5084 = pneg %p5083
    $region54: #{mvke_forward.1} parent=5 // pred_check_branch
      %5086 = sbr.rel (%p5084) target = $region56
    $region55: #{mvke_forward.1} parent=5 // pred_region
      %s5087 = ssub.s32 %s13, 2
      // Predicated region
      $region57: #{mvke_forward.1} parent=55 // pred_check
        %p5088 = pneg %p209
      $region58: #{mvke_forward.1} parent=55 // pred_check_branch
        %5090 = sbr.rel (%p5088) target = $region60
      $region59: #{mvke_forward.1} parent=55 // pred_region
        %s5091 = smul.u32 2, %s19
        %p5092 = scmp.lt.s32.totalorder %s5091, 3
        %s5093 = scalar_select %p5092, %s5091, 3
        %s5094 = smul.addr %s5093, 8
        %s5095 = scalar_lea.vmem %s7, %s5094
      $region60: #{mvke_forward.1} parent=55 // pred_fallthru
        _
    $region56: #{mvke_forward.1} parent=5 // pred_fallthru
      _
  $region6: #{mvke_forward.1} parent=0 // loop_footer
    %s17 = sadd.s32 1, %s13
  $region7: #{mvke_forward.1} parent=0 // loop_footer_branch
    %12 = sbr.rel target = $region3
  $region8: #{mvke_forward.1} parent=0 // loop_exit
    _

</llo_original>
